<compile_context>
chip_gen: v7x
topology: tpu7x:2x2x1
jax: 0.10.0
libtpu: 0.0.40
codegen_flags: <defaults>
</compile_context>

<pallas_src>
import jax
import jax.numpy as jnp
from jax import lax
from jax.experimental import pallas as pl
from jax.experimental.pallas import tpu as pltpu

LANE = 128
SUBLANE = 8


def _round_up(x, m):
    return ((x + m - 1) // m) * m


# ----------------------------------------------------------------------------
# Fused Pallas kernel (all LSTM layers + decoder)
# ----------------------------------------------------------------------------
def _make_fused_lstm_kernel(num_layers, T, Bp, Hp):
    """Builds the fused kernel for static (num_layers, T, Bp, Hp)."""

    def kernel(*refs):
        # refs: x, (wih, whh, b) * num_layers, wdec, bdec, out, scratches
        x_ref = refs[0]                                   # (T*Bp, Cp)
        layer_refs = refs[1:1 + 3 * num_layers]
        wdec_ref = refs[1 + 3 * num_layers]               # (1, Hp)
        bdec_ref = refs[2 + 3 * num_layers]               # (1, 1)
        out_ref = refs[3 + 3 * num_layers]                # (Bp, 1)
        h_scr, c_scr, seq_scr, gx_scr = refs[4 + 3 * num_layers:]
        # h_scr/c_scr: (Bp, Hp); seq_scr: (T*Bp, Hp); gx_scr: (T*Bp, 4*Hp)

        for layer in range(num_layers):
            wih_ref = layer_refs[3 * layer + 0]           # (Din_p, 4*Hp)
            whh_ref = layer_refs[3 * layer + 1]           # (Hp, 4*Hp)
            b_ref = layer_refs[3 * layer + 2]             # (1, 4*Hp)
            is_last = layer == num_layers - 1

            # Layer input: padded x for layer 0, previous layer's h sequence after.
            inp = x_ref[...] if layer == 0 else seq_scr[...]

            # Hoisted input projection: one big matmul + one bias broadcast.
            gx_scr[...] = (
                jnp.dot(inp, wih_ref[...], preferred_element_type=jnp.float32)
                + b_ref[...]
            )

            h_scr[...] = jnp.zeros_like(h_scr)
            c_scr[...] = jnp.zeros_like(c_scr)

            def step(t, whh_ref=whh_ref, is_last=is_last):
                if isinstance(t, int):
                    row = t * Bp
                else:
                    row = pl.multiple_of(t * Bp, Bp)
                h = h_scr[...]
                c = c_scr[...]
                gates = gx_scr[pl.ds(row, Bp), :] + jnp.dot(
                    h, whh_ref[...], preferred_element_type=jnp.float32
                )                                          # (Bp, 4*Hp)
                # 128-aligned lane slices -> free vreg views.
                i_g = jax.nn.sigmoid(gates[:, 0 * Hp:1 * Hp])
                f_g = jax.nn.sigmoid(gates[:, 1 * Hp:2 * Hp])
                g_g = jnp.tanh(gates[:, 2 * Hp:3 * Hp])
                o_g = jax.nn.sigmoid(gates[:, 3 * Hp:4 * Hp])
                c_n = f_g * c + i_g * g_g
                h_n = o_g * jnp.tanh(c_n)
                h_scr[...] = h_n
                c_scr[...] = c_n
                if not is_last:
                    seq_scr[pl.ds(row, Bp), :] = h_n

            if T <= 64:
                # Full unroll (recommended for short, fixed T).
                for t in range(T):
                    step(t)
            else:
                def body(t, carry):
                    step(t)
                    return carry
                lax.fori_loop(0, T, body, 0, unroll=8)

        # Decoder on h at t = T-1 of the last layer:
        # VPU multiply + lane reduction instead of an N=1 MXU dot.
        h_last = h_scr[...]                                # (Bp, Hp)
        out_ref[...] = (
            jnp.sum(h_last * wdec_ref[...], axis=-1, keepdims=True)
            + bdec_ref[...]
        )

    return kernel


def _fused_lstm_pallas(x_2d, layer_ws, wdec_p, bdec_p, *, num_layers, T, Bp, Cp, Hp):
    kernel = _make_fused_lstm_kernel(num_layers, T, Bp, Hp)

    inputs = [x_2d]
    in_specs = [pl.BlockSpec((T * Bp, Cp), lambda: (0, 0))]
    for wih_p, whh_p, b_p in layer_ws:
        inputs += [wih_p, whh_p, b_p]
        in_specs += [
            pl.BlockSpec(wih_p.shape, lambda: (0, 0)),
            pl.BlockSpec(whh_p.shape, lambda: (0, 0)),
            pl.BlockSpec(b_p.shape, lambda: (0, 0)),
        ]
    inputs += [wdec_p, bdec_p]
    in_specs += [
        pl.BlockSpec(wdec_p.shape, lambda: (0, 0)),
        pl.BlockSpec(bdec_p.shape, lambda: (0, 0)),
    ]

    return pl.pallas_call(
        kernel,
        out_shape=jax.ShapeDtypeStruct((Bp, 1), jnp.float32),
        in_specs=in_specs,
        out_specs=pl.BlockSpec((Bp, 1), lambda: (0, 0)),
        scratch_shapes=[
            pltpu.VMEM((Bp, Hp), jnp.float32),            # h state
            pltpu.VMEM((Bp, Hp), jnp.float32),            # c state
            pltpu.VMEM((T * Bp, Hp), jnp.float32),        # inter-layer h sequence
            pltpu.VMEM((T * Bp, 4 * Hp), jnp.float32),    # hoisted input-proj gates
        ],
    )(*inputs)


# ----------------------------------------------------------------------------
# Parameter handling (PyTorch layout) + padding to lane-dense shapes
# ----------------------------------------------------------------------------
def init_params(key, hidden_dim, num_layers, input_channels):
    k = 1.0 / jnp.sqrt(hidden_dim)
    params = {"lstm": []}
    for layer in range(num_layers):
        d_in = input_channels if layer == 0 else hidden_dim
        key, k1, k2, k3, k4 = jax.random.split(key, 5)
        params["lstm"].append({
            "w_ih": jax.random.uniform(k1, (4 * hidden_dim, d_in), jnp.float32, -k, k),
            "w_hh": jax.random.uniform(k2, (4 * hidden_dim, hidden_dim), jnp.float32, -k, k),
            "b_ih": jax.random.uniform(k3, (4 * hidden_dim,), jnp.float32, -k, k),
            "b_hh": jax.random.uniform(k4, (4 * hidden_dim,), jnp.float32, -k, k),
        })
    key, k5, k6 = jax.random.split(key, 3)
    kd = 1.0 / jnp.sqrt(hidden_dim)
    params["w_dec"] = jax.random.uniform(k5, (1, hidden_dim), jnp.float32, -kd, kd)
    params["b_dec"] = jax.random.uniform(k6, (1,), jnp.float32, -kd, kd)
    return params


def _pad_gate_matrix(w, H, Hp, d_in, d_in_p):
    """PyTorch-layout (4H, d_in) -> transposed, per-gate zero-padded (d_in_p, 4*Hp)."""
    w_t = w.T  # (d_in, 4H)
    blocks = [
        jnp.pad(w_t[:, k * H:(k + 1) * H], ((0, d_in_p - d_in), (0, Hp - H)))
        for k in range(4)
    ]
    return jnp.concatenate(blocks, axis=1)


def _pad_gate_bias(b, H, Hp):
    blocks = [jnp.pad(b[k * H:(k + 1) * H], (0, Hp - H)) for k in range(4)]
    return jnp.concatenate(blocks).reshape(1, 4 * Hp)


# ----------------------------------------------------------------------------
# Model forward (matches LSTMModel.forward) + pure-JAX reference
# ----------------------------------------------------------------------------
@jax.jit
def lstm_model_forward(x, params):
    """x: (B, C, T) float32 -> (B, 1)."""
    B, C, T = x.shape
    H = params["lstm"][0]["w_hh"].shape[1]
    num_layers = len(params["lstm"])

    Bp = _round_up(B, SUBLANE)
    Cp = _round_up(C, LANE)
    Hp = _round_up(H, LANE)

    # (B, C, T) -> time-major (T, B, C), zero-pad batch/channels, flatten to 2-D
    # so the kernel's hoisted input projection is a single lane-dense matmul.
    x_tm = jnp.transpose(x, (2, 0, 1))                       # (T, B, C)
    x_p = jnp.pad(x_tm, ((0, 0), (0, Bp - B), (0, Cp - C)))  # (T, Bp, Cp)
    x_2d = x_p.reshape(T * Bp, Cp)

    layer_ws = []
    for li, lp in enumerate(params["lstm"]):
        d_in = C if li == 0 else H
        d_in_p = Cp if li == 0 else Hp
        wih_p = _pad_gate_matrix(lp["w_ih"], H, Hp, d_in, d_in_p)
        whh_p = _pad_gate_matrix(lp["w_hh"], H, Hp, H, Hp)
        b_p = _pad_gate_bias(lp["b_ih"] + lp["b_hh"], H, Hp)
        layer_ws.append((wih_p, whh_p, b_p))

    wdec_p = jnp.pad(params["w_dec"], ((0, 0), (0, Hp - H)))  # (1, Hp)
    bdec_p = params["b_dec"].reshape(1, 1)

    out_p = _fused_lstm_pallas(
        x_2d, layer_ws, wdec_p, bdec_p,
        num_layers=num_layers, T=T, Bp=Bp, Cp=Cp, Hp=Hp,
    )
    return out_p[:B]


def lstm_model_reference(x, params):
    seq = jnp.transpose(x, (2, 0, 1))  # (T, B, C)
    for lp in params["lstm"]:
        H = lp["w_hh"].shape[1]
        B = seq.shape[1]
        h0 = jnp.zeros((B, H), jnp.float32)
        c0 = jnp.zeros((B, H), jnp.float32)
        bias = lp["b_ih"] + lp["b_hh"]

        def step(carry, x_t, lp=lp, bias=bias, H=H):
            h, c = carry
            gates = x_t @ lp["w_ih"].T + h @ lp["w_hh"].T + bias
            i = jax.nn.sigmoid(gates[:, 0 * H:1 * H])
            f = jax.nn.sigmoid(gates[:, 1 * H:2 * H])
            g = jnp.tanh(gates[:, 2 * H:3 * H])
            o = jax.nn.sigmoid(gates[:, 3 * H:4 * H])
            c = f * c + i * g
            h = o * jnp.tanh(c)
            return (h, c), h

        _, seq = lax.scan(step, (h0, c0), seq)
    h_last = seq[-1]
    return h_last @ params["w_dec"].T + params["b_dec"]


if __name__ == "__main__":
    B, C, T = 2, 4, 8          # batch, input_channels, sequence length
    hidden_dim, num_layers = 32, 2

    key = jax.random.PRNGKey(0)
    key, kx, kp = jax.random.split(key, 3)
    x = jax.random.normal(kx, (B, C, T), jnp.float32)
    params = init_params(kp, hidden_dim, num_layers, C)

    out = lstm_model_forward(x, params)
    out = jax.block_until_ready(out)
    assert out.shape == (B, 1), out.shape

    ref = lstm_model_reference(x, params)
    assert jnp.allclose(out, ref, atol=1e-4, rtol=1e-4), (out, ref)

    print("KERNEL_OK")
</pallas_src>

<mosaic_0001>
module attributes {stable_mosaic.version = 11 : i64} {
  func.func @kernel(%arg0: memref<64x128xf32, #tpu.memory_space<vmem>>, %arg1: memref<128x512xf32, #tpu.memory_space<vmem>>, %arg2: memref<128x512xf32, #tpu.memory_space<vmem>>, %arg3: memref<1x512xf32, #tpu.memory_space<vmem>>, %arg4: memref<128x512xf32, #tpu.memory_space<vmem>>, %arg5: memref<128x512xf32, #tpu.memory_space<vmem>>, %arg6: memref<1x512xf32, #tpu.memory_space<vmem>>, %arg7: memref<1x128xf32, #tpu.memory_space<vmem>>, %arg8: memref<1x1xf32, #tpu.memory_space<vmem>>, %arg9: memref<8x1xf32, #tpu.memory_space<vmem>>, %arg10: memref<8x128xf32, #tpu.memory_space<vmem>>, %arg11: memref<8x128xf32, #tpu.memory_space<vmem>>, %arg12: memref<64x128xf32, #tpu.memory_space<vmem>>, %arg13: memref<64x512xf32, #tpu.memory_space<vmem>>) attributes {dimension_semantics = [], scalar_prefetch = 0 : i64, scratch_operands = 4 : i64, tpu.core_type = #tpu.core_type<tc>} {
    %c0 = arith.constant 0 : index
    %c0_0 = arith.constant 0 : index
    %0 = vector.load %arg0[%c0, %c0_0] : memref<64x128xf32, #tpu.memory_space<vmem>>, vector<64x128xf32>
    %c0_1 = arith.constant 0 : index
    %c0_2 = arith.constant 0 : index
    %1 = vector.load %arg1[%c0_1, %c0_2] : memref<128x512xf32, #tpu.memory_space<vmem>>, vector<128x512xf32>
    %cst = arith.constant dense<0.000000e+00> : vector<64x512xf32>
    %2 = tpu.matmul %0, %1, %cst {dimension_numbers = #tpu.dot_dimension_numbers<[1], [0], [0], [1], [0, 0, 1, 1], [], []>} : vector<64x128xf32>, vector<128x512xf32>, vector<64x512xf32> -> vector<64x512xf32>
    %c0_3 = arith.constant 0 : index
    %c0_4 = arith.constant 0 : index
    %3 = vector.load %arg3[%c0_3, %c0_4] : memref<1x512xf32, #tpu.memory_space<vmem>>, vector<1x512xf32>
    %4 = vector.broadcast %3 : vector<1x512xf32> to vector<64x512xf32>
    %5 = arith.addf %2, %4 : vector<64x512xf32>
    %c0_5 = arith.constant 0 : index
    %c0_6 = arith.constant 0 : index
    %6 = vector.load %arg13[%c0_5, %c0_6] : memref<64x512xf32, #tpu.memory_space<vmem>>, vector<64x512xf32>
    tpu.vector_store %arg13[%c0_5, %c0_6], %5 {strides = array<i32>} : memref<64x512xf32, #tpu.memory_space<vmem>>, vector<64x512xf32>,
    %cst_7 = arith.constant 0.000000e+00 : f32
    %7 = vector.broadcast %cst_7 : f32 to vector<8x128xf32>
    %c0_8 = arith.constant 0 : index
    %c0_9 = arith.constant 0 : index
    %8 = vector.load %arg10[%c0_8, %c0_9] : memref<8x128xf32, #tpu.memory_space<vmem>>, vector<8x128xf32>
    tpu.vector_store %arg10[%c0_8, %c0_9], %7 {strides = array<i32>} : memref<8x128xf32, #tpu.memory_space<vmem>>, vector<8x128xf32>,
    %cst_10 = arith.constant 0.000000e+00 : f32
    %9 = vector.broadcast %cst_10 : f32 to vector<8x128xf32>
    %c0_11 = arith.constant 0 : index
    %c0_12 = arith.constant 0 : index
    %10 = vector.load %arg11[%c0_11, %c0_12] : memref<8x128xf32, #tpu.memory_space<vmem>>, vector<8x128xf32>
    tpu.vector_store %arg11[%c0_11, %c0_12], %9 {strides = array<i32>} : memref<8x128xf32, #tpu.memory_space<vmem>>, vector<8x128xf32>,
    %c0_13 = arith.constant 0 : index
    %c0_14 = arith.constant 0 : index
    %11 = vector.load %arg10[%c0_13, %c0_14] : memref<8x128xf32, #tpu.memory_space<vmem>>, vector<8x128xf32>
    %c0_15 = arith.constant 0 : index
    %c0_16 = arith.constant 0 : index
    %12 = vector.load %arg11[%c0_15, %c0_16] : memref<8x128xf32, #tpu.memory_space<vmem>>, vector<8x128xf32>
    %c0_17 = arith.constant 0 : index
    %c0_18 = arith.constant 0 : index
    %13 = vector.load %arg13[%c0_17, %c0_18] : memref<64x512xf32, #tpu.memory_space<vmem>>, vector<8x512xf32>
    %c0_19 = arith.constant 0 : index
    %c0_20 = arith.constant 0 : index
    %14 = vector.load %arg2[%c0_19, %c0_20] : memref<128x512xf32, #tpu.memory_space<vmem>>, vector<128x512xf32>
    %cst_21 = arith.constant dense<0.000000e+00> : vector<8x512xf32>
    %15 = tpu.matmul %11, %14, %cst_21 {dimension_numbers = #tpu.dot_dimension_numbers<[1], [0], [0], [1], [0, 0, 1, 1], [], []>} : vector<8x128xf32>, vector<128x512xf32>, vector<8x512xf32> -> vector<8x512xf32>
    %16 = arith.addf %13, %15 : vector<8x512xf32>
    %17 = vector.extract_strided_slice %16 {offsets = [0, 0], sizes = [8, 128], strides = [1, 1]} : vector<8x512xf32> to vector<8x128xf32>
    %18 = arith.negf %17 : vector<8x128xf32>
    %19 = math.exp %18 : vector<8x128xf32>
    %cst_22 = arith.constant 1.000000e+00 : f32
    %20 = vector.broadcast %cst_22 : f32 to vector<8x128xf32>
    %21 = arith.addf %20, %19 : vector<8x128xf32>
    %22 = arith.divf %20, %21 : vector<8x128xf32>
    %23 = vector.extract_strided_slice %16 {offsets = [0, 128], sizes = [8, 128], strides = [1, 1]} : vector<8x512xf32> to vector<8x128xf32>
    %24 = arith.negf %23 : vector<8x128xf32>
    %25 = math.exp %24 : vector<8x128xf32>
    %cst_23 = arith.constant 1.000000e+00 : f32
    %26 = vector.broadcast %cst_23 : f32 to vector<8x128xf32>
    %27 = arith.addf %26, %25 : vector<8x128xf32>
    %28 = arith.divf %26, %27 : vector<8x128xf32>
    %29 = vector.extract_strided_slice %16 {offsets = [0, 256], sizes = [8, 128], strides = [1, 1]} : vector<8x512xf32> to vector<8x128xf32>
    %30 = math.tanh %29 : vector<8x128xf32>
    %31 = vector.extract_strided_slice %16 {offsets = [0, 384], sizes = [8, 128], strides = [1, 1]} : vector<8x512xf32> to vector<8x128xf32>
    %32 = arith.negf %31 : vector<8x128xf32>
    %33 = math.exp %32 : vector<8x128xf32>
    %cst_24 = arith.constant 1.000000e+00 : f32
    %34 = vector.broadcast %cst_24 : f32 to vector<8x128xf32>
    %35 = arith.addf %34, %33 : vector<8x128xf32>
    %36 = arith.divf %34, %35 : vector<8x128xf32>
    %37 = arith.mulf %28, %12 : vector<8x128xf32>
    %38 = arith.mulf %22, %30 : vector<8x128xf32>
    %39 = arith.addf %37, %38 : vector<8x128xf32>
    %40 = math.tanh %39 : vector<8x128xf32>
    %41 = arith.mulf %36, %40 : vector<8x128xf32>
    %c0_25 = arith.constant 0 : index
    %c0_26 = arith.constant 0 : index
    %42 = vector.load %arg10[%c0_25, %c0_26] : memref<8x128xf32, #tpu.memory_space<vmem>>, vector<8x128xf32>
    tpu.vector_store %arg10[%c0_25, %c0_26], %41 {strides = array<i32>} : memref<8x128xf32, #tpu.memory_space<vmem>>, vector<8x128xf32>,
    %c0_27 = arith.constant 0 : index
    %c0_28 = arith.constant 0 : index
    %43 = vector.load %arg11[%c0_27, %c0_28] : memref<8x128xf32, #tpu.memory_space<vmem>>, vector<8x128xf32>
    tpu.vector_store %arg11[%c0_27, %c0_28], %39 {strides = array<i32>} : memref<8x128xf32, #tpu.memory_space<vmem>>, vector<8x128xf32>,
    %c0_29 = arith.constant 0 : index
    %c0_30 = arith.constant 0 : index
    %44 = vector.load %arg12[%c0_29, %c0_30] : memref<64x128xf32, #tpu.memory_space<vmem>>, vector<8x128xf32>
    tpu.vector_store %arg12[%c0_29, %c0_30], %41 {strides = array<i32>} : memref<64x128xf32, #tpu.memory_space<vmem>>, vector<8x128xf32>,
    %c0_31 = arith.constant 0 : index
    %c0_32 = arith.constant 0 : index
    %45 = vector.load %arg10[%c0_31, %c0_32] : memref<8x128xf32, #tpu.memory_space<vmem>>, vector<8x128xf32>
    %c0_33 = arith.constant 0 : index
    %c0_34 = arith.constant 0 : index
    %46 = vector.load %arg11[%c0_33, %c0_34] : memref<8x128xf32, #tpu.memory_space<vmem>>, vector<8x128xf32>
    %c8 = arith.constant 8 : index
    %c0_35 = arith.constant 0 : index
    %47 = vector.load %arg13[%c8, %c0_35] : memref<64x512xf32, #tpu.memory_space<vmem>>, vector<8x512xf32>
    %c0_36 = arith.constant 0 : index
    %c0_37 = arith.constant 0 : index
    %48 = vector.load %arg2[%c0_36, %c0_37] : memref<128x512xf32, #tpu.memory_space<vmem>>, vector<128x512xf32>
    %cst_38 = arith.constant dense<0.000000e+00> : vector<8x512xf32>
    %49 = tpu.matmul %45, %48, %cst_38 {dimension_numbers = #tpu.dot_dimension_numbers<[1], [0], [0], [1], [0, 0, 1, 1], [], []>} : vector<8x128xf32>, vector<128x512xf32>, vector<8x512xf32> -> vector<8x512xf32>
    %50 = arith.addf %47, %49 : vector<8x512xf32>
    %51 = vector.extract_strided_slice %50 {offsets = [0, 0], sizes = [8, 128], strides = [1, 1]} : vector<8x512xf32> to vector<8x128xf32>
    %52 = arith.negf %51 : vector<8x128xf32>
    %53 = math.exp %52 : vector<8x128xf32>
    %cst_39 = arith.constant 1.000000e+00 : f32
    %54 = vector.broadcast %cst_39 : f32 to vector<8x128xf32>
    %55 = arith.addf %54, %53 : vector<8x128xf32>
    %56 = arith.divf %54, %55 : vector<8x128xf32>
    %57 = vector.extract_strided_slice %50 {offsets = [0, 128], sizes = [8, 128], strides = [1, 1]} : vector<8x512xf32> to vector<8x128xf32>
    %58 = arith.negf %57 : vector<8x128xf32>
    %59 = math.exp %58 : vector<8x128xf32>
    %cst_40 = arith.constant 1.000000e+00 : f32
    %60 = vector.broadcast %cst_40 : f32 to vector<8x128xf32>
    %61 = arith.addf %60, %59 : vector<8x128xf32>
    %62 = arith.divf %60, %61 : vector<8x128xf32>
    %63 = vector.extract_strided_slice %50 {offsets = [0, 256], sizes = [8, 128], strides = [1, 1]} : vector<8x512xf32> to vector<8x128xf32>
    %64 = math.tanh %63 : vector<8x128xf32>
    %65 = vector.extract_strided_slice %50 {offsets = [0, 384], sizes = [8, 128], strides = [1, 1]} : vector<8x512xf32> to vector<8x128xf32>
    %66 = arith.negf %65 : vector<8x128xf32>
    %67 = math.exp %66 : vector<8x128xf32>
    %cst_41 = arith.constant 1.000000e+00 : f32
    %68 = vector.broadcast %cst_41 : f32 to vector<8x128xf32>
    %69 = arith.addf %68, %67 : vector<8x128xf32>
    %70 = arith.divf %68, %69 : vector<8x128xf32>
    %71 = arith.mulf %62, %46 : vector<8x128xf32>
    %72 = arith.mulf %56, %64 : vector<8x128xf32>
    %73 = arith.addf %71, %72 : vector<8x128xf32>
    %74 = math.tanh %73 : vector<8x128xf32>
    %75 = arith.mulf %70, %74 : vector<8x128xf32>
    %c0_42 = arith.constant 0 : index
    %c0_43 = arith.constant 0 : index
    %76 = vector.load %arg10[%c0_42, %c0_43] : memref<8x128xf32, #tpu.memory_space<vmem>>, vector<8x128xf32>
    tpu.vector_store %arg10[%c0_42, %c0_43], %75 {strides = array<i32>} : memref<8x128xf32, #tpu.memory_space<vmem>>, vector<8x128xf32>,
    %c0_44 = arith.constant 0 : index
    %c0_45 = arith.constant 0 : index
    %77 = vector.load %arg11[%c0_44, %c0_45] : memref<8x128xf32, #tpu.memory_space<vmem>>, vector<8x128xf32>
    tpu.vector_store %arg11[%c0_44, %c0_45], %73 {strides = array<i32>} : memref<8x128xf32, #tpu.memory_space<vmem>>, vector<8x128xf32>,
    %c8_46 = arith.constant 8 : index
    %c0_47 = arith.constant 0 : index
    %78 = vector.load %arg12[%c8_46, %c0_47] : memref<64x128xf32, #tpu.memory_space<vmem>>, vector<8x128xf32>
    tpu.vector_store %arg12[%c8_46, %c0_47], %75 {strides = array<i32>} : memref<64x128xf32, #tpu.memory_space<vmem>>, vector<8x128xf32>,
    %c0_48 = arith.constant 0 : index
    %c0_49 = arith.constant 0 : index
    %79 = vector.load %arg10[%c0_48, %c0_49] : memref<8x128xf32, #tpu.memory_space<vmem>>, vector<8x128xf32>
    %c0_50 = arith.constant 0 : index
    %c0_51 = arith.constant 0 : index
    %80 = vector.load %arg11[%c0_50, %c0_51] : memref<8x128xf32, #tpu.memory_space<vmem>>, vector<8x128xf32>
    %c16 = arith.constant 16 : index
    %c0_52 = arith.constant 0 : index
    %81 = vector.load %arg13[%c16, %c0_52] : memref<64x512xf32, #tpu.memory_space<vmem>>, vector<8x512xf32>
    %c0_53 = arith.constant 0 : index
    %c0_54 = arith.constant 0 : index
    %82 = vector.load %arg2[%c0_53, %c0_54] : memref<128x512xf32, #tpu.memory_space<vmem>>, vector<128x512xf32>
    %cst_55 = arith.constant dense<0.000000e+00> : vector<8x512xf32>
    %83 = tpu.matmul %79, %82, %cst_55 {dimension_numbers = #tpu.dot_dimension_numbers<[1], [0], [0], [1], [0, 0, 1, 1], [], []>} : vector<8x128xf32>, vector<128x512xf32>, vector<8x512xf32> -> vector<8x512xf32>
    %84 = arith.addf %81, %83 : vector<8x512xf32>
    %85 = vector.extract_strided_slice %84 {offsets = [0, 0], sizes = [8, 128], strides = [1, 1]} : vector<8x512xf32> to vector<8x128xf32>
    %86 = arith.negf %85 : vector<8x128xf32>
    %87 = math.exp %86 : vector<8x128xf32>
    %cst_56 = arith.constant 1.000000e+00 : f32
    %88 = vector.broadcast %cst_56 : f32 to vector<8x128xf32>
    %89 = arith.addf %88, %87 : vector<8x128xf32>
    %90 = arith.divf %88, %89 : vector<8x128xf32>
    %91 = vector.extract_strided_slice %84 {offsets = [0, 128], sizes = [8, 128], strides = [1, 1]} : vector<8x512xf32> to vector<8x128xf32>
    %92 = arith.negf %91 : vector<8x128xf32>
    %93 = math.exp %92 : vector<8x128xf32>
    %cst_57 = arith.constant 1.000000e+00 : f32
    %94 = vector.broadcast %cst_57 : f32 to vector<8x128xf32>
    %95 = arith.addf %94, %93 : vector<8x128xf32>
    %96 = arith.divf %94, %95 : vector<8x128xf32>
    %97 = vector.extract_strided_slice %84 {offsets = [0, 256], sizes = [8, 128], strides = [1, 1]} : vector<8x512xf32> to vector<8x128xf32>
    %98 = math.tanh %97 : vector<8x128xf32>
    %99 = vector.extract_strided_slice %84 {offsets = [0, 384], sizes = [8, 128], strides = [1, 1]} : vector<8x512xf32> to vector<8x128xf32>
    %100 = arith.negf %99 : vector<8x128xf32>
    %101 = math.exp %100 : vector<8x128xf32>
    %cst_58 = arith.constant 1.000000e+00 : f32
    %102 = vector.broadcast %cst_58 : f32 to vector<8x128xf32>
    %103 = arith.addf %102, %101 : vector<8x128xf32>
    %104 = arith.divf %102, %103 : vector<8x128xf32>
    %105 = arith.mulf %96, %80 : vector<8x128xf32>
    %106 = arith.mulf %90, %98 : vector<8x128xf32>
    %107 = arith.addf %105, %106 : vector<8x128xf32>
    %108 = math.tanh %107 : vector<8x128xf32>
    %109 = arith.mulf %104, %108 : vector<8x128xf32>
    %c0_59 = arith.constant 0 : index
    %c0_60 = arith.constant 0 : index
    %110 = vector.load %arg10[%c0_59, %c0_60] : memref<8x128xf32, #tpu.memory_space<vmem>>, vector<8x128xf32>
    tpu.vector_store %arg10[%c0_59, %c0_60], %109 {strides = array<i32>} : memref<8x128xf32, #tpu.memory_space<vmem>>, vector<8x128xf32>,
    %c0_61 = arith.constant 0 : index
    %c0_62 = arith.constant 0 : index
    %111 = vector.load %arg11[%c0_61, %c0_62] : memref<8x128xf32, #tpu.memory_space<vmem>>, vector<8x128xf32>
    tpu.vector_store %arg11[%c0_61, %c0_62], %107 {strides = array<i32>} : memref<8x128xf32, #tpu.memory_space<vmem>>, vector<8x128xf32>,
    %c16_63 = arith.constant 16 : index
    %c0_64 = arith.constant 0 : index
    %112 = vector.load %arg12[%c16_63, %c0_64] : memref<64x128xf32, #tpu.memory_space<vmem>>, vector<8x128xf32>
    tpu.vector_store %arg12[%c16_63, %c0_64], %109 {strides = array<i32>} : memref<64x128xf32, #tpu.memory_space<vmem>>, vector<8x128xf32>,
    %c0_65 = arith.constant 0 : index
    %c0_66 = arith.constant 0 : index
    %113 = vector.load %arg10[%c0_65, %c0_66] : memref<8x128xf32, #tpu.memory_space<vmem>>, vector<8x128xf32>
    %c0_67 = arith.constant 0 : index
    %c0_68 = arith.constant 0 : index
    %114 = vector.load %arg11[%c0_67, %c0_68] : memref<8x128xf32, #tpu.memory_space<vmem>>, vector<8x128xf32>
    %c24 = arith.constant 24 : index
    %c0_69 = arith.constant 0 : index
    %115 = vector.load %arg13[%c24, %c0_69] : memref<64x512xf32, #tpu.memory_space<vmem>>, vector<8x512xf32>
    %c0_70 = arith.constant 0 : index
    %c0_71 = arith.constant 0 : index
    %116 = vector.load %arg2[%c0_70, %c0_71] : memref<128x512xf32, #tpu.memory_space<vmem>>, vector<128x512xf32>
    %cst_72 = arith.constant dense<0.000000e+00> : vector<8x512xf32>
    %117 = tpu.matmul %113, %116, %cst_72 {dimension_numbers = #tpu.dot_dimension_numbers<[1], [0], [0], [1], [0, 0, 1, 1], [], []>} : vector<8x128xf32>, vector<128x512xf32>, vector<8x512xf32> -> vector<8x512xf32>
    %118 = arith.addf %115, %117 : vector<8x512xf32>
    %119 = vector.extract_strided_slice %118 {offsets = [0, 0], sizes = [8, 128], strides = [1, 1]} : vector<8x512xf32> to vector<8x128xf32>
    %120 = arith.negf %119 : vector<8x128xf32>
    %121 = math.exp %120 : vector<8x128xf32>
    %cst_73 = arith.constant 1.000000e+00 : f32
    %122 = vector.broadcast %cst_73 : f32 to vector<8x128xf32>
    %123 = arith.addf %122, %121 : vector<8x128xf32>
    %124 = arith.divf %122, %123 : vector<8x128xf32>
    %125 = vector.extract_strided_slice %118 {offsets = [0, 128], sizes = [8, 128], strides = [1, 1]} : vector<8x512xf32> to vector<8x128xf32>
    %126 = arith.negf %125 : vector<8x128xf32>
    %127 = math.exp %126 : vector<8x128xf32>
    %cst_74 = arith.constant 1.000000e+00 : f32
    %128 = vector.broadcast %cst_74 : f32 to vector<8x128xf32>
    %129 = arith.addf %128, %127 : vector<8x128xf32>
    %130 = arith.divf %128, %129 : vector<8x128xf32>
    %131 = vector.extract_strided_slice %118 {offsets = [0, 256], sizes = [8, 128], strides = [1, 1]} : vector<8x512xf32> to vector<8x128xf32>
    %132 = math.tanh %131 : vector<8x128xf32>
    %133 = vector.extract_strided_slice %118 {offsets = [0, 384], sizes = [8, 128], strides = [1, 1]} : vector<8x512xf32> to vector<8x128xf32>
    %134 = arith.negf %133 : vector<8x128xf32>
    %135 = math.exp %134 : vector<8x128xf32>
    %cst_75 = arith.constant 1.000000e+00 : f32
    %136 = vector.broadcast %cst_75 : f32 to vector<8x128xf32>
    %137 = arith.addf %136, %135 : vector<8x128xf32>
    %138 = arith.divf %136, %137 : vector<8x128xf32>
    %139 = arith.mulf %130, %114 : vector<8x128xf32>
    %140 = arith.mulf %124, %132 : vector<8x128xf32>
    %141 = arith.addf %139, %140 : vector<8x128xf32>
    %142 = math.tanh %141 : vector<8x128xf32>
    %143 = arith.mulf %138, %142 : vector<8x128xf32>
    %c0_76 = arith.constant 0 : index
    %c0_77 = arith.constant 0 : index
    %144 = vector.load %arg10[%c0_76, %c0_77] : memref<8x128xf32, #tpu.memory_space<vmem>>, vector<8x128xf32>
    tpu.vector_store %arg10[%c0_76, %c0_77], %143 {strides = array<i32>} : memref<8x128xf32, #tpu.memory_space<vmem>>, vector<8x128xf32>,
    %c0_78 = arith.constant 0 : index
    %c0_79 = arith.constant 0 : index
    %145 = vector.load %arg11[%c0_78, %c0_79] : memref<8x128xf32, #tpu.memory_space<vmem>>, vector<8x128xf32>
    tpu.vector_store %arg11[%c0_78, %c0_79], %141 {strides = array<i32>} : memref<8x128xf32, #tpu.memory_space<vmem>>, vector<8x128xf32>,
    %c24_80 = arith.constant 24 : index
    %c0_81 = arith.constant 0 : index
    %146 = vector.load %arg12[%c24_80, %c0_81] : memref<64x128xf32, #tpu.memory_space<vmem>>, vector<8x128xf32>
    tpu.vector_store %arg12[%c24_80, %c0_81], %143 {strides = array<i32>} : memref<64x128xf32, #tpu.memory_space<vmem>>, vector<8x128xf32>,
    %c0_82 = arith.constant 0 : index
    %c0_83 = arith.constant 0 : index
    %147 = vector.load %arg10[%c0_82, %c0_83] : memref<8x128xf32, #tpu.memory_space<vmem>>, vector<8x128xf32>
    %c0_84 = arith.constant 0 : index
    %c0_85 = arith.constant 0 : index
    %148 = vector.load %arg11[%c0_84, %c0_85] : memref<8x128xf32, #tpu.memory_space<vmem>>, vector<8x128xf32>
    %c32 = arith.constant 32 : index
    %c0_86 = arith.constant 0 : index
    %149 = vector.load %arg13[%c32, %c0_86] : memref<64x512xf32, #tpu.memory_space<vmem>>, vector<8x512xf32>
    %c0_87 = arith.constant 0 : index
    %c0_88 = arith.constant 0 : index
    %150 = vector.load %arg2[%c0_87, %c0_88] : memref<128x512xf32, #tpu.memory_space<vmem>>, vector<128x512xf32>
    %cst_89 = arith.constant dense<0.000000e+00> : vector<8x512xf32>
    %151 = tpu.matmul %147, %150, %cst_89 {dimension_numbers = #tpu.dot_dimension_numbers<[1], [0], [0], [1], [0, 0, 1, 1], [], []>} : vector<8x128xf32>, vector<128x512xf32>, vector<8x512xf32> -> vector<8x512xf32>
    %152 = arith.addf %149, %151 : vector<8x512xf32>
    %153 = vector.extract_strided_slice %152 {offsets = [0, 0], sizes = [8, 128], strides = [1, 1]} : vector<8x512xf32> to vector<8x128xf32>
    %154 = arith.negf %153 : vector<8x128xf32>
    %155 = math.exp %154 : vector<8x128xf32>
    %cst_90 = arith.constant 1.000000e+00 : f32
    %156 = vector.broadcast %cst_90 : f32 to vector<8x128xf32>
    %157 = arith.addf %156, %155 : vector<8x128xf32>
    %158 = arith.divf %156, %157 : vector<8x128xf32>
    %159 = vector.extract_strided_slice %152 {offsets = [0, 128], sizes = [8, 128], strides = [1, 1]} : vector<8x512xf32> to vector<8x128xf32>
    %160 = arith.negf %159 : vector<8x128xf32>
    %161 = math.exp %160 : vector<8x128xf32>
    %cst_91 = arith.constant 1.000000e+00 : f32
    %162 = vector.broadcast %cst_91 : f32 to vector<8x128xf32>
    %163 = arith.addf %162, %161 : vector<8x128xf32>
    %164 = arith.divf %162, %163 : vector<8x128xf32>
    %165 = vector.extract_strided_slice %152 {offsets = [0, 256], sizes = [8, 128], strides = [1, 1]} : vector<8x512xf32> to vector<8x128xf32>
    %166 = math.tanh %165 : vector<8x128xf32>
    %167 = vector.extract_strided_slice %152 {offsets = [0, 384], sizes = [8, 128], strides = [1, 1]} : vector<8x512xf32> to vector<8x128xf32>
    %168 = arith.negf %167 : vector<8x128xf32>
    %169 = math.exp %168 : vector<8x128xf32>
    %cst_92 = arith.constant 1.000000e+00 : f32
    %170 = vector.broadcast %cst_92 : f32 to vector<8x128xf32>
    %171 = arith.addf %170, %169 : vector<8x128xf32>
    %172 = arith.divf %170, %171 : vector<8x128xf32>
    %173 = arith.mulf %164, %148 : vector<8x128xf32>
    %174 = arith.mulf %158, %166 : vector<8x128xf32>
    %175 = arith.addf %173, %174 : vector<8x128xf32>
    %176 = math.tanh %175 : vector<8x128xf32>
    %177 = arith.mulf %172, %176 : vector<8x128xf32>
    %c0_93 = arith.constant 0 : index
    %c0_94 = arith.constant 0 : index
    %178 = vector.load %arg10[%c0_93, %c0_94] : memref<8x128xf32, #tpu.memory_space<vmem>>, vector<8x128xf32>
    tpu.vector_store %arg10[%c0_93, %c0_94], %177 {strides = array<i32>} : memref<8x128xf32, #tpu.memory_space<vmem>>, vector<8x128xf32>,
    %c0_95 = arith.constant 0 : index
    %c0_96 = arith.constant 0 : index
    %179 = vector.load %arg11[%c0_95, %c0_96] : memref<8x128xf32, #tpu.memory_space<vmem>>, vector<8x128xf32>
    tpu.vector_store %arg11[%c0_95, %c0_96], %175 {strides = array<i32>} : memref<8x128xf32, #tpu.memory_space<vmem>>, vector<8x128xf32>,
    %c32_97 = arith.constant 32 : index
    %c0_98 = arith.constant 0 : index
    %180 = vector.load %arg12[%c32_97, %c0_98] : memref<64x128xf32, #tpu.memory_space<vmem>>, vector<8x128xf32>
    tpu.vector_store %arg12[%c32_97, %c0_98], %177 {strides = array<i32>} : memref<64x128xf32, #tpu.memory_space<vmem>>, vector<8x128xf32>,
    %c0_99 = arith.constant 0 : index
    %c0_100 = arith.constant 0 : index
    %181 = vector.load %arg10[%c0_99, %c0_100] : memref<8x128xf32, #tpu.memory_space<vmem>>, vector<8x128xf32>
    %c0_101 = arith.constant 0 : index
    %c0_102 = arith.constant 0 : index
    %182 = vector.load %arg11[%c0_101, %c0_102] : memref<8x128xf32, #tpu.memory_space<vmem>>, vector<8x128xf32>
    %c40 = arith.constant 40 : index
    %c0_103 = arith.constant 0 : index
    %183 = vector.load %arg13[%c40, %c0_103] : memref<64x512xf32, #tpu.memory_space<vmem>>, vector<8x512xf32>
    %c0_104 = arith.constant 0 : index
    %c0_105 = arith.constant 0 : index
    %184 = vector.load %arg2[%c0_104, %c0_105] : memref<128x512xf32, #tpu.memory_space<vmem>>, vector<128x512xf32>
    %cst_106 = arith.constant dense<0.000000e+00> : vector<8x512xf32>
    %185 = tpu.matmul %181, %184, %cst_106 {dimension_numbers = #tpu.dot_dimension_numbers<[1], [0], [0], [1], [0, 0, 1, 1], [], []>} : vector<8x128xf32>, vector<128x512xf32>, vector<8x512xf32> -> vector<8x512xf32>
    %186 = arith.addf %183, %185 : vector<8x512xf32>
    %187 = vector.extract_strided_slice %186 {offsets = [0, 0], sizes = [8, 128], strides = [1, 1]} : vector<8x512xf32> to vector<8x128xf32>
    %188 = arith.negf %187 : vector<8x128xf32>
    %189 = math.exp %188 : vector<8x128xf32>
    %cst_107 = arith.constant 1.000000e+00 : f32
    %190 = vector.broadcast %cst_107 : f32 to vector<8x128xf32>
    %191 = arith.addf %190, %189 : vector<8x128xf32>
    %192 = arith.divf %190, %191 : vector<8x128xf32>
    %193 = vector.extract_strided_slice %186 {offsets = [0, 128], sizes = [8, 128], strides = [1, 1]} : vector<8x512xf32> to vector<8x128xf32>
    %194 = arith.negf %193 : vector<8x128xf32>
    %195 = math.exp %194 : vector<8x128xf32>
    %cst_108 = arith.constant 1.000000e+00 : f32
    %196 = vector.broadcast %cst_108 : f32 to vector<8x128xf32>
    %197 = arith.addf %196, %195 : vector<8x128xf32>
    %198 = arith.divf %196, %197 : vector<8x128xf32>
    %199 = vector.extract_strided_slice %186 {offsets = [0, 256], sizes = [8, 128], strides = [1, 1]} : vector<8x512xf32> to vector<8x128xf32>
    %200 = math.tanh %199 : vector<8x128xf32>
    %201 = vector.extract_strided_slice %186 {offsets = [0, 384], sizes = [8, 128], strides = [1, 1]} : vector<8x512xf32> to vector<8x128xf32>
    %202 = arith.negf %201 : vector<8x128xf32>
    %203 = math.exp %202 : vector<8x128xf32>
    %cst_109 = arith.constant 1.000000e+00 : f32
    %204 = vector.broadcast %cst_109 : f32 to vector<8x128xf32>
    %205 = arith.addf %204, %203 : vector<8x128xf32>
    %206 = arith.divf %204, %205 : vector<8x128xf32>
    %207 = arith.mulf %198, %182 : vector<8x128xf32>
    %208 = arith.mulf %192, %200 : vector<8x128xf32>
    %209 = arith.addf %207, %208 : vector<8x128xf32>
    %210 = math.tanh %209 : vector<8x128xf32>
    %211 = arith.mulf %206, %210 : vector<8x128xf32>
    %c0_110 = arith.constant 0 : index
    %c0_111 = arith.constant 0 : index
    %212 = vector.load %arg10[%c0_110, %c0_111] : memref<8x128xf32, #tpu.memory_space<vmem>>, vector<8x128xf32>
    tpu.vector_store %arg10[%c0_110, %c0_111], %211 {strides = array<i32>} : memref<8x128xf32, #tpu.memory_space<vmem>>, vector<8x128xf32>,
    %c0_112 = arith.constant 0 : index
    %c0_113 = arith.constant 0 : index
    %213 = vector.load %arg11[%c0_112, %c0_113] : memref<8x128xf32, #tpu.memory_space<vmem>>, vector<8x128xf32>
    tpu.vector_store %arg11[%c0_112, %c0_113], %209 {strides = array<i32>} : memref<8x128xf32, #tpu.memory_space<vmem>>, vector<8x128xf32>,
    %c40_114 = arith.constant 40 : index
    %c0_115 = arith.constant 0 : index
    %214 = vector.load %arg12[%c40_114, %c0_115] : memref<64x128xf32, #tpu.memory_space<vmem>>, vector<8x128xf32>
    tpu.vector_store %arg12[%c40_114, %c0_115], %211 {strides = array<i32>} : memref<64x128xf32, #tpu.memory_space<vmem>>, vector<8x128xf32>,
    %c0_116 = arith.constant 0 : index
    %c0_117 = arith.constant 0 : index
    %215 = vector.load %arg10[%c0_116, %c0_117] : memref<8x128xf32, #tpu.memory_space<vmem>>, vector<8x128xf32>
    %c0_118 = arith.constant 0 : index
    %c0_119 = arith.constant 0 : index
    %216 = vector.load %arg11[%c0_118, %c0_119] : memref<8x128xf32, #tpu.memory_space<vmem>>, vector<8x128xf32>
    %c48 = arith.constant 48 : index
    %c0_120 = arith.constant 0 : index
    %217 = vector.load %arg13[%c48, %c0_120] : memref<64x512xf32, #tpu.memory_space<vmem>>, vector<8x512xf32>
    %c0_121 = arith.constant 0 : index
    %c0_122 = arith.constant 0 : index
    %218 = vector.load %arg2[%c0_121, %c0_122] : memref<128x512xf32, #tpu.memory_space<vmem>>, vector<128x512xf32>
    %cst_123 = arith.constant dense<0.000000e+00> : vector<8x512xf32>
    %219 = tpu.matmul %215, %218, %cst_123 {dimension_numbers = #tpu.dot_dimension_numbers<[1], [0], [0], [1], [0, 0, 1, 1], [], []>} : vector<8x128xf32>, vector<128x512xf32>, vector<8x512xf32> -> vector<8x512xf32>
    %220 = arith.addf %217, %219 : vector<8x512xf32>
    %221 = vector.extract_strided_slice %220 {offsets = [0, 0], sizes = [8, 128], strides = [1, 1]} : vector<8x512xf32> to vector<8x128xf32>
    %222 = arith.negf %221 : vector<8x128xf32>
    %223 = math.exp %222 : vector<8x128xf32>
    %cst_124 = arith.constant 1.000000e+00 : f32
    %224 = vector.broadcast %cst_124 : f32 to vector<8x128xf32>
    %225 = arith.addf %224, %223 : vector<8x128xf32>
    %226 = arith.divf %224, %225 : vector<8x128xf32>
    %227 = vector.extract_strided_slice %220 {offsets = [0, 128], sizes = [8, 128], strides = [1, 1]} : vector<8x512xf32> to vector<8x128xf32>
    %228 = arith.negf %227 : vector<8x128xf32>
    %229 = math.exp %228 : vector<8x128xf32>
    %cst_125 = arith.constant 1.000000e+00 : f32
    %230 = vector.broadcast %cst_125 : f32 to vector<8x128xf32>
    %231 = arith.addf %230, %229 : vector<8x128xf32>
    %232 = arith.divf %230, %231 : vector<8x128xf32>
    %233 = vector.extract_strided_slice %220 {offsets = [0, 256], sizes = [8, 128], strides = [1, 1]} : vector<8x512xf32> to vector<8x128xf32>
    %234 = math.tanh %233 : vector<8x128xf32>
    %235 = vector.extract_strided_slice %220 {offsets = [0, 384], sizes = [8, 128], strides = [1, 1]} : vector<8x512xf32> to vector<8x128xf32>
    %236 = arith.negf %235 : vector<8x128xf32>
    %237 = math.exp %236 : vector<8x128xf32>
    %cst_126 = arith.constant 1.000000e+00 : f32
    %238 = vector.broadcast %cst_126 : f32 to vector<8x128xf32>
    %239 = arith.addf %238, %237 : vector<8x128xf32>
    %240 = arith.divf %238, %239 : vector<8x128xf32>
    %241 = arith.mulf %232, %216 : vector<8x128xf32>
    %242 = arith.mulf %226, %234 : vector<8x128xf32>
    %243 = arith.addf %241, %242 : vector<8x128xf32>
    %244 = math.tanh %243 : vector<8x128xf32>
    %245 = arith.mulf %240, %244 : vector<8x128xf32>
    %c0_127 = arith.constant 0 : index
    %c0_128 = arith.constant 0 : index
    %246 = vector.load %arg10[%c0_127, %c0_128] : memref<8x128xf32, #tpu.memory_space<vmem>>, vector<8x128xf32>
    tpu.vector_store %arg10[%c0_127, %c0_128], %245 {strides = array<i32>} : memref<8x128xf32, #tpu.memory_space<vmem>>, vector<8x128xf32>,
    %c0_129 = arith.constant 0 : index
    %c0_130 = arith.constant 0 : index
    %247 = vector.load %arg11[%c0_129, %c0_130] : memref<8x128xf32, #tpu.memory_space<vmem>>, vector<8x128xf32>
    tpu.vector_store %arg11[%c0_129, %c0_130], %243 {strides = array<i32>} : memref<8x128xf32, #tpu.memory_space<vmem>>, vector<8x128xf32>,
    %c48_131 = arith.constant 48 : index
    %c0_132 = arith.constant 0 : index
    %248 = vector.load %arg12[%c48_131, %c0_132] : memref<64x128xf32, #tpu.memory_space<vmem>>, vector<8x128xf32>
    tpu.vector_store %arg12[%c48_131, %c0_132], %245 {strides = array<i32>} : memref<64x128xf32, #tpu.memory_space<vmem>>, vector<8x128xf32>,
    %c0_133 = arith.constant 0 : index
    %c0_134 = arith.constant 0 : index
    %249 = vector.load %arg10[%c0_133, %c0_134] : memref<8x128xf32, #tpu.memory_space<vmem>>, vector<8x128xf32>
    %c0_135 = arith.constant 0 : index
    %c0_136 = arith.constant 0 : index
    %250 = vector.load %arg11[%c0_135, %c0_136] : memref<8x128xf32, #tpu.memory_space<vmem>>, vector<8x128xf32>
    %c56 = arith.constant 56 : index
    %c0_137 = arith.constant 0 : index
    %251 = vector.load %arg13[%c56, %c0_137] : memref<64x512xf32, #tpu.memory_space<vmem>>, vector<8x512xf32>
    %c0_138 = arith.constant 0 : index
    %c0_139 = arith.constant 0 : index
    %252 = vector.load %arg2[%c0_138, %c0_139] : memref<128x512xf32, #tpu.memory_space<vmem>>, vector<128x512xf32>
    %cst_140 = arith.constant dense<0.000000e+00> : vector<8x512xf32>
    %253 = tpu.matmul %249, %252, %cst_140 {dimension_numbers = #tpu.dot_dimension_numbers<[1], [0], [0], [1], [0, 0, 1, 1], [], []>} : vector<8x128xf32>, vector<128x512xf32>, vector<8x512xf32> -> vector<8x512xf32>
    %254 = arith.addf %251, %253 : vector<8x512xf32>
    %255 = vector.extract_strided_slice %254 {offsets = [0, 0], sizes = [8, 128], strides = [1, 1]} : vector<8x512xf32> to vector<8x128xf32>
    %256 = arith.negf %255 : vector<8x128xf32>
    %257 = math.exp %256 : vector<8x128xf32>
    %cst_141 = arith.constant 1.000000e+00 : f32
    %258 = vector.broadcast %cst_141 : f32 to vector<8x128xf32>
    %259 = arith.addf %258, %257 : vector<8x128xf32>
    %260 = arith.divf %258, %259 : vector<8x128xf32>
    %261 = vector.extract_strided_slice %254 {offsets = [0, 128], sizes = [8, 128], strides = [1, 1]} : vector<8x512xf32> to vector<8x128xf32>
    %262 = arith.negf %261 : vector<8x128xf32>
    %263 = math.exp %262 : vector<8x128xf32>
    %cst_142 = arith.constant 1.000000e+00 : f32
    %264 = vector.broadcast %cst_142 : f32 to vector<8x128xf32>
    %265 = arith.addf %264, %263 : vector<8x128xf32>
    %266 = arith.divf %264, %265 : vector<8x128xf32>
    %267 = vector.extract_strided_slice %254 {offsets = [0, 256], sizes = [8, 128], strides = [1, 1]} : vector<8x512xf32> to vector<8x128xf32>
    %268 = math.tanh %267 : vector<8x128xf32>
    %269 = vector.extract_strided_slice %254 {offsets = [0, 384], sizes = [8, 128], strides = [1, 1]} : vector<8x512xf32> to vector<8x128xf32>
    %270 = arith.negf %269 : vector<8x128xf32>
    %271 = math.exp %270 : vector<8x128xf32>
    %cst_143 = arith.constant 1.000000e+00 : f32
    %272 = vector.broadcast %cst_143 : f32 to vector<8x128xf32>
    %273 = arith.addf %272, %271 : vector<8x128xf32>
    %274 = arith.divf %272, %273 : vector<8x128xf32>
    %275 = arith.mulf %266, %250 : vector<8x128xf32>
    %276 = arith.mulf %260, %268 : vector<8x128xf32>
    %277 = arith.addf %275, %276 : vector<8x128xf32>
    %278 = math.tanh %277 : vector<8x128xf32>
    %279 = arith.mulf %274, %278 : vector<8x128xf32>
    %c0_144 = arith.constant 0 : index
    %c0_145 = arith.constant 0 : index
    %280 = vector.load %arg10[%c0_144, %c0_145] : memref<8x128xf32, #tpu.memory_space<vmem>>, vector<8x128xf32>
    tpu.vector_store %arg10[%c0_144, %c0_145], %279 {strides = array<i32>} : memref<8x128xf32, #tpu.memory_space<vmem>>, vector<8x128xf32>,
    %c0_146 = arith.constant 0 : index
    %c0_147 = arith.constant 0 : index
    %281 = vector.load %arg11[%c0_146, %c0_147] : memref<8x128xf32, #tpu.memory_space<vmem>>, vector<8x128xf32>
    tpu.vector_store %arg11[%c0_146, %c0_147], %277 {strides = array<i32>} : memref<8x128xf32, #tpu.memory_space<vmem>>, vector<8x128xf32>,
    %c56_148 = arith.constant 56 : index
    %c0_149 = arith.constant 0 : index
    %282 = vector.load %arg12[%c56_148, %c0_149] : memref<64x128xf32, #tpu.memory_space<vmem>>, vector<8x128xf32>
    tpu.vector_store %arg12[%c56_148, %c0_149], %279 {strides = array<i32>} : memref<64x128xf32, #tpu.memory_space<vmem>>, vector<8x128xf32>,
    %c0_150 = arith.constant 0 : index
    %c0_151 = arith.constant 0 : index
    %283 = vector.load %arg12[%c0_150, %c0_151] : memref<64x128xf32, #tpu.memory_space<vmem>>, vector<64x128xf32>
    %c0_152 = arith.constant 0 : index
    %c0_153 = arith.constant 0 : index
    %284 = vector.load %arg4[%c0_152, %c0_153] : memref<128x512xf32, #tpu.memory_space<vmem>>, vector<128x512xf32>
    %cst_154 = arith.constant dense<0.000000e+00> : vector<64x512xf32>
    %285 = tpu.matmul %283, %284, %cst_154 {dimension_numbers = #tpu.dot_dimension_numbers<[1], [0], [0], [1], [0, 0, 1, 1], [], []>} : vector<64x128xf32>, vector<128x512xf32>, vector<64x512xf32> -> vector<64x512xf32>
    %c0_155 = arith.constant 0 : index
    %c0_156 = arith.constant 0 : index
    %286 = vector.load %arg6[%c0_155, %c0_156] : memref<1x512xf32, #tpu.memory_space<vmem>>, vector<1x512xf32>
    %287 = vector.broadcast %286 : vector<1x512xf32> to vector<64x512xf32>
    %288 = arith.addf %285, %287 : vector<64x512xf32>
    %c0_157 = arith.constant 0 : index
    %c0_158 = arith.constant 0 : index
    %289 = vector.load %arg13[%c0_157, %c0_158] : memref<64x512xf32, #tpu.memory_space<vmem>>, vector<64x512xf32>
    tpu.vector_store %arg13[%c0_157, %c0_158], %288 {strides = array<i32>} : memref<64x512xf32, #tpu.memory_space<vmem>>, vector<64x512xf32>,
    %cst_159 = arith.constant 0.000000e+00 : f32
    %290 = vector.broadcast %cst_159 : f32 to vector<8x128xf32>
    %c0_160 = arith.constant 0 : index
    %c0_161 = arith.constant 0 : index
    %291 = vector.load %arg10[%c0_160, %c0_161] : memref<8x128xf32, #tpu.memory_space<vmem>>, vector<8x128xf32>
    tpu.vector_store %arg10[%c0_160, %c0_161], %290 {strides = array<i32>} : memref<8x128xf32, #tpu.memory_space<vmem>>, vector<8x128xf32>,
    %cst_162 = arith.constant 0.000000e+00 : f32
    %292 = vector.broadcast %cst_162 : f32 to vector<8x128xf32>
    %c0_163 = arith.constant 0 : index
    %c0_164 = arith.constant 0 : index
    %293 = vector.load %arg11[%c0_163, %c0_164] : memref<8x128xf32, #tpu.memory_space<vmem>>, vector<8x128xf32>
    tpu.vector_store %arg11[%c0_163, %c0_164], %292 {strides = array<i32>} : memref<8x128xf32, #tpu.memory_space<vmem>>, vector<8x128xf32>,
    %c0_165 = arith.constant 0 : index
    %c0_166 = arith.constant 0 : index
    %294 = vector.load %arg10[%c0_165, %c0_166] : memref<8x128xf32, #tpu.memory_space<vmem>>, vector<8x128xf32>
    %c0_167 = arith.constant 0 : index
    %c0_168 = arith.constant 0 : index
    %295 = vector.load %arg11[%c0_167, %c0_168] : memref<8x128xf32, #tpu.memory_space<vmem>>, vector<8x128xf32>
    %c0_169 = arith.constant 0 : index
    %c0_170 = arith.constant 0 : index
    %296 = vector.load %arg13[%c0_169, %c0_170] : memref<64x512xf32, #tpu.memory_space<vmem>>, vector<8x512xf32>
    %c0_171 = arith.constant 0 : index
    %c0_172 = arith.constant 0 : index
    %297 = vector.load %arg5[%c0_171, %c0_172] : memref<128x512xf32, #tpu.memory_space<vmem>>, vector<128x512xf32>
    %cst_173 = arith.constant dense<0.000000e+00> : vector<8x512xf32>
    %298 = tpu.matmul %294, %297, %cst_173 {dimension_numbers = #tpu.dot_dimension_numbers<[1], [0], [0], [1], [0, 0, 1, 1], [], []>} : vector<8x128xf32>, vector<128x512xf32>, vector<8x512xf32> -> vector<8x512xf32>
    %299 = arith.addf %296, %298 : vector<8x512xf32>
    %300 = vector.extract_strided_slice %299 {offsets = [0, 0], sizes = [8, 128], strides = [1, 1]} : vector<8x512xf32> to vector<8x128xf32>
    %301 = arith.negf %300 : vector<8x128xf32>
    %302 = math.exp %301 : vector<8x128xf32>
    %cst_174 = arith.constant 1.000000e+00 : f32
    %303 = vector.broadcast %cst_174 : f32 to vector<8x128xf32>
    %304 = arith.addf %303, %302 : vector<8x128xf32>
    %305 = arith.divf %303, %304 : vector<8x128xf32>
    %306 = vector.extract_strided_slice %299 {offsets = [0, 128], sizes = [8, 128], strides = [1, 1]} : vector<8x512xf32> to vector<8x128xf32>
    %307 = arith.negf %306 : vector<8x128xf32>
    %308 = math.exp %307 : vector<8x128xf32>
    %cst_175 = arith.constant 1.000000e+00 : f32
    %309 = vector.broadcast %cst_175 : f32 to vector<8x128xf32>
    %310 = arith.addf %309, %308 : vector<8x128xf32>
    %311 = arith.divf %309, %310 : vector<8x128xf32>
    %312 = vector.extract_strided_slice %299 {offsets = [0, 256], sizes = [8, 128], strides = [1, 1]} : vector<8x512xf32> to vector<8x128xf32>
    %313 = math.tanh %312 : vector<8x128xf32>
    %314 = vector.extract_strided_slice %299 {offsets = [0, 384], sizes = [8, 128], strides = [1, 1]} : vector<8x512xf32> to vector<8x128xf32>
    %315 = arith.negf %314 : vector<8x128xf32>
    %316 = math.exp %315 : vector<8x128xf32>
    %cst_176 = arith.constant 1.000000e+00 : f32
    %317 = vector.broadcast %cst_176 : f32 to vector<8x128xf32>
    %318 = arith.addf %317, %316 : vector<8x128xf32>
    %319 = arith.divf %317, %318 : vector<8x128xf32>
    %320 = arith.mulf %311, %295 : vector<8x128xf32>
    %321 = arith.mulf %305, %313 : vector<8x128xf32>
    %322 = arith.addf %320, %321 : vector<8x128xf32>
    %323 = math.tanh %322 : vector<8x128xf32>
    %324 = arith.mulf %319, %323 : vector<8x128xf32>
    %c0_177 = arith.constant 0 : index
    %c0_178 = arith.constant 0 : index
    %325 = vector.load %arg10[%c0_177, %c0_178] : memref<8x128xf32, #tpu.memory_space<vmem>>, vector<8x128xf32>
    tpu.vector_store %arg10[%c0_177, %c0_178], %324 {strides = array<i32>} : memref<8x128xf32, #tpu.memory_space<vmem>>, vector<8x128xf32>,
    %c0_179 = arith.constant 0 : index
    %c0_180 = arith.constant 0 : index
    %326 = vector.load %arg11[%c0_179, %c0_180] : memref<8x128xf32, #tpu.memory_space<vmem>>, vector<8x128xf32>
    tpu.vector_store %arg11[%c0_179, %c0_180], %322 {strides = array<i32>} : memref<8x128xf32, #tpu.memory_space<vmem>>, vector<8x128xf32>,
    %c0_181 = arith.constant 0 : index
    %c0_182 = arith.constant 0 : index
    %327 = vector.load %arg10[%c0_181, %c0_182] : memref<8x128xf32, #tpu.memory_space<vmem>>, vector<8x128xf32>
    %c0_183 = arith.constant 0 : index
    %c0_184 = arith.constant 0 : index
    %328 = vector.load %arg11[%c0_183, %c0_184] : memref<8x128xf32, #tpu.memory_space<vmem>>, vector<8x128xf32>
    %c8_185 = arith.constant 8 : index
    %c0_186 = arith.constant 0 : index
    %329 = vector.load %arg13[%c8_185, %c0_186] : memref<64x512xf32, #tpu.memory_space<vmem>>, vector<8x512xf32>
    %c0_187 = arith.constant 0 : index
    %c0_188 = arith.constant 0 : index
    %330 = vector.load %arg5[%c0_187, %c0_188] : memref<128x512xf32, #tpu.memory_space<vmem>>, vector<128x512xf32>
    %cst_189 = arith.constant dense<0.000000e+00> : vector<8x512xf32>
    %331 = tpu.matmul %327, %330, %cst_189 {dimension_numbers = #tpu.dot_dimension_numbers<[1], [0], [0], [1], [0, 0, 1, 1], [], []>} : vector<8x128xf32>, vector<128x512xf32>, vector<8x512xf32> -> vector<8x512xf32>
    %332 = arith.addf %329, %331 : vector<8x512xf32>
    %333 = vector.extract_strided_slice %332 {offsets = [0, 0], sizes = [8, 128], strides = [1, 1]} : vector<8x512xf32> to vector<8x128xf32>
    %334 = arith.negf %333 : vector<8x128xf32>
    %335 = math.exp %334 : vector<8x128xf32>
    %cst_190 = arith.constant 1.000000e+00 : f32
    %336 = vector.broadcast %cst_190 : f32 to vector<8x128xf32>
    %337 = arith.addf %336, %335 : vector<8x128xf32>
    %338 = arith.divf %336, %337 : vector<8x128xf32>
    %339 = vector.extract_strided_slice %332 {offsets = [0, 128], sizes = [8, 128], strides = [1, 1]} : vector<8x512xf32> to vector<8x128xf32>
    %340 = arith.negf %339 : vector<8x128xf32>
    %341 = math.exp %340 : vector<8x128xf32>
    %cst_191 = arith.constant 1.000000e+00 : f32
    %342 = vector.broadcast %cst_191 : f32 to vector<8x128xf32>
    %343 = arith.addf %342, %341 : vector<8x128xf32>
    %344 = arith.divf %342, %343 : vector<8x128xf32>
    %345 = vector.extract_strided_slice %332 {offsets = [0, 256], sizes = [8, 128], strides = [1, 1]} : vector<8x512xf32> to vector<8x128xf32>
    %346 = math.tanh %345 : vector<8x128xf32>
    %347 = vector.extract_strided_slice %332 {offsets = [0, 384], sizes = [8, 128], strides = [1, 1]} : vector<8x512xf32> to vector<8x128xf32>
    %348 = arith.negf %347 : vector<8x128xf32>
    %349 = math.exp %348 : vector<8x128xf32>
    %cst_192 = arith.constant 1.000000e+00 : f32
    %350 = vector.broadcast %cst_192 : f32 to vector<8x128xf32>
    %351 = arith.addf %350, %349 : vector<8x128xf32>
    %352 = arith.divf %350, %351 : vector<8x128xf32>
    %353 = arith.mulf %344, %328 : vector<8x128xf32>
    %354 = arith.mulf %338, %346 : vector<8x128xf32>
    %355 = arith.addf %353, %354 : vector<8x128xf32>
    %356 = math.tanh %355 : vector<8x128xf32>
    %357 = arith.mulf %352, %356 : vector<8x128xf32>
    %c0_193 = arith.constant 0 : index
    %c0_194 = arith.constant 0 : index
    %358 = vector.load %arg10[%c0_193, %c0_194] : memref<8x128xf32, #tpu.memory_space<vmem>>, vector<8x128xf32>
    tpu.vector_store %arg10[%c0_193, %c0_194], %357 {strides = array<i32>} : memref<8x128xf32, #tpu.memory_space<vmem>>, vector<8x128xf32>,
    %c0_195 = arith.constant 0 : index
    %c0_196 = arith.constant 0 : index
    %359 = vector.load %arg11[%c0_195, %c0_196] : memref<8x128xf32, #tpu.memory_space<vmem>>, vector<8x128xf32>
    tpu.vector_store %arg11[%c0_195, %c0_196], %355 {strides = array<i32>} : memref<8x128xf32, #tpu.memory_space<vmem>>, vector<8x128xf32>,
    %c0_197 = arith.constant 0 : index
    %c0_198 = arith.constant 0 : index
    %360 = vector.load %arg10[%c0_197, %c0_198] : memref<8x128xf32, #tpu.memory_space<vmem>>, vector<8x128xf32>
    %c0_199 = arith.constant 0 : index
    %c0_200 = arith.constant 0 : index
    %361 = vector.load %arg11[%c0_199, %c0_200] : memref<8x128xf32, #tpu.memory_space<vmem>>, vector<8x128xf32>
    %c16_201 = arith.constant 16 : index
    %c0_202 = arith.constant 0 : index
    %362 = vector.load %arg13[%c16_201, %c0_202] : memref<64x512xf32, #tpu.memory_space<vmem>>, vector<8x512xf32>
    %c0_203 = arith.constant 0 : index
    %c0_204 = arith.constant 0 : index
    %363 = vector.load %arg5[%c0_203, %c0_204] : memref<128x512xf32, #tpu.memory_space<vmem>>, vector<128x512xf32>
    %cst_205 = arith.constant dense<0.000000e+00> : vector<8x512xf32>
    %364 = tpu.matmul %360, %363, %cst_205 {dimension_numbers = #tpu.dot_dimension_numbers<[1], [0], [0], [1], [0, 0, 1, 1], [], []>} : vector<8x128xf32>, vector<128x512xf32>, vector<8x512xf32> -> vector<8x512xf32>
    %365 = arith.addf %362, %364 : vector<8x512xf32>
    %366 = vector.extract_strided_slice %365 {offsets = [0, 0], sizes = [8, 128], strides = [1, 1]} : vector<8x512xf32> to vector<8x128xf32>
    %367 = arith.negf %366 : vector<8x128xf32>
    %368 = math.exp %367 : vector<8x128xf32>
    %cst_206 = arith.constant 1.000000e+00 : f32
    %369 = vector.broadcast %cst_206 : f32 to vector<8x128xf32>
    %370 = arith.addf %369, %368 : vector<8x128xf32>
    %371 = arith.divf %369, %370 : vector<8x128xf32>
    %372 = vector.extract_strided_slice %365 {offsets = [0, 128], sizes = [8, 128], strides = [1, 1]} : vector<8x512xf32> to vector<8x128xf32>
    %373 = arith.negf %372 : vector<8x128xf32>
    %374 = math.exp %373 : vector<8x128xf32>
    %cst_207 = arith.constant 1.000000e+00 : f32
    %375 = vector.broadcast %cst_207 : f32 to vector<8x128xf32>
    %376 = arith.addf %375, %374 : vector<8x128xf32>
    %377 = arith.divf %375, %376 : vector<8x128xf32>
    %378 = vector.extract_strided_slice %365 {offsets = [0, 256], sizes = [8, 128], strides = [1, 1]} : vector<8x512xf32> to vector<8x128xf32>
    %379 = math.tanh %378 : vector<8x128xf32>
    %380 = vector.extract_strided_slice %365 {offsets = [0, 384], sizes = [8, 128], strides = [1, 1]} : vector<8x512xf32> to vector<8x128xf32>
    %381 = arith.negf %380 : vector<8x128xf32>
    %382 = math.exp %381 : vector<8x128xf32>
    %cst_208 = arith.constant 1.000000e+00 : f32
    %383 = vector.broadcast %cst_208 : f32 to vector<8x128xf32>
    %384 = arith.addf %383, %382 : vector<8x128xf32>
    %385 = arith.divf %383, %384 : vector<8x128xf32>
    %386 = arith.mulf %377, %361 : vector<8x128xf32>
    %387 = arith.mulf %371, %379 : vector<8x128xf32>
    %388 = arith.addf %386, %387 : vector<8x128xf32>
    %389 = math.tanh %388 : vector<8x128xf32>
    %390 = arith.mulf %385, %389 : vector<8x128xf32>
    %c0_209 = arith.constant 0 : index
    %c0_210 = arith.constant 0 : index
    %391 = vector.load %arg10[%c0_209, %c0_210] : memref<8x128xf32, #tpu.memory_space<vmem>>, vector<8x128xf32>
    tpu.vector_store %arg10[%c0_209, %c0_210], %390 {strides = array<i32>} : memref<8x128xf32, #tpu.memory_space<vmem>>, vector<8x128xf32>,
    %c0_211 = arith.constant 0 : index
    %c0_212 = arith.constant 0 : index
    %392 = vector.load %arg11[%c0_211, %c0_212] : memref<8x128xf32, #tpu.memory_space<vmem>>, vector<8x128xf32>
    tpu.vector_store %arg11[%c0_211, %c0_212], %388 {strides = array<i32>} : memref<8x128xf32, #tpu.memory_space<vmem>>, vector<8x128xf32>,
    %c0_213 = arith.constant 0 : index
    %c0_214 = arith.constant 0 : index
    %393 = vector.load %arg10[%c0_213, %c0_214] : memref<8x128xf32, #tpu.memory_space<vmem>>, vector<8x128xf32>
    %c0_215 = arith.constant 0 : index
    %c0_216 = arith.constant 0 : index
    %394 = vector.load %arg11[%c0_215, %c0_216] : memref<8x128xf32, #tpu.memory_space<vmem>>, vector<8x128xf32>
    %c24_217 = arith.constant 24 : index
    %c0_218 = arith.constant 0 : index
    %395 = vector.load %arg13[%c24_217, %c0_218] : memref<64x512xf32, #tpu.memory_space<vmem>>, vector<8x512xf32>
    %c0_219 = arith.constant 0 : index
    %c0_220 = arith.constant 0 : index
    %396 = vector.load %arg5[%c0_219, %c0_220] : memref<128x512xf32, #tpu.memory_space<vmem>>, vector<128x512xf32>
    %cst_221 = arith.constant dense<0.000000e+00> : vector<8x512xf32>
    %397 = tpu.matmul %393, %396, %cst_221 {dimension_numbers = #tpu.dot_dimension_numbers<[1], [0], [0], [1], [0, 0, 1, 1], [], []>} : vector<8x128xf32>, vector<128x512xf32>, vector<8x512xf32> -> vector<8x512xf32>
    %398 = arith.addf %395, %397 : vector<8x512xf32>
    %399 = vector.extract_strided_slice %398 {offsets = [0, 0], sizes = [8, 128], strides = [1, 1]} : vector<8x512xf32> to vector<8x128xf32>
    %400 = arith.negf %399 : vector<8x128xf32>
    %401 = math.exp %400 : vector<8x128xf32>
    %cst_222 = arith.constant 1.000000e+00 : f32
    %402 = vector.broadcast %cst_222 : f32 to vector<8x128xf32>
    %403 = arith.addf %402, %401 : vector<8x128xf32>
    %404 = arith.divf %402, %403 : vector<8x128xf32>
    %405 = vector.extract_strided_slice %398 {offsets = [0, 128], sizes = [8, 128], strides = [1, 1]} : vector<8x512xf32> to vector<8x128xf32>
    %406 = arith.negf %405 : vector<8x128xf32>
    %407 = math.exp %406 : vector<8x128xf32>
    %cst_223 = arith.constant 1.000000e+00 : f32
    %408 = vector.broadcast %cst_223 : f32 to vector<8x128xf32>
    %409 = arith.addf %408, %407 : vector<8x128xf32>
    %410 = arith.divf %408, %409 : vector<8x128xf32>
    %411 = vector.extract_strided_slice %398 {offsets = [0, 256], sizes = [8, 128], strides = [1, 1]} : vector<8x512xf32> to vector<8x128xf32>
    %412 = math.tanh %411 : vector<8x128xf32>
    %413 = vector.extract_strided_slice %398 {offsets = [0, 384], sizes = [8, 128], strides = [1, 1]} : vector<8x512xf32> to vector<8x128xf32>
    %414 = arith.negf %413 : vector<8x128xf32>
    %415 = math.exp %414 : vector<8x128xf32>
    %cst_224 = arith.constant 1.000000e+00 : f32
    %416 = vector.broadcast %cst_224 : f32 to vector<8x128xf32>
    %417 = arith.addf %416, %415 : vector<8x128xf32>
    %418 = arith.divf %416, %417 : vector<8x128xf32>
    %419 = arith.mulf %410, %394 : vector<8x128xf32>
    %420 = arith.mulf %404, %412 : vector<8x128xf32>
    %421 = arith.addf %419, %420 : vector<8x128xf32>
    %422 = math.tanh %421 : vector<8x128xf32>
    %423 = arith.mulf %418, %422 : vector<8x128xf32>
    %c0_225 = arith.constant 0 : index
    %c0_226 = arith.constant 0 : index
    %424 = vector.load %arg10[%c0_225, %c0_226] : memref<8x128xf32, #tpu.memory_space<vmem>>, vector<8x128xf32>
    tpu.vector_store %arg10[%c0_225, %c0_226], %423 {strides = array<i32>} : memref<8x128xf32, #tpu.memory_space<vmem>>, vector<8x128xf32>,
    %c0_227 = arith.constant 0 : index
    %c0_228 = arith.constant 0 : index
    %425 = vector.load %arg11[%c0_227, %c0_228] : memref<8x128xf32, #tpu.memory_space<vmem>>, vector<8x128xf32>
    tpu.vector_store %arg11[%c0_227, %c0_228], %421 {strides = array<i32>} : memref<8x128xf32, #tpu.memory_space<vmem>>, vector<8x128xf32>,
    %c0_229 = arith.constant 0 : index
    %c0_230 = arith.constant 0 : index
    %426 = vector.load %arg10[%c0_229, %c0_230] : memref<8x128xf32, #tpu.memory_space<vmem>>, vector<8x128xf32>
    %c0_231 = arith.constant 0 : index
    %c0_232 = arith.constant 0 : index
    %427 = vector.load %arg11[%c0_231, %c0_232] : memref<8x128xf32, #tpu.memory_space<vmem>>, vector<8x128xf32>
    %c32_233 = arith.constant 32 : index
    %c0_234 = arith.constant 0 : index
    %428 = vector.load %arg13[%c32_233, %c0_234] : memref<64x512xf32, #tpu.memory_space<vmem>>, vector<8x512xf32>
    %c0_235 = arith.constant 0 : index
    %c0_236 = arith.constant 0 : index
    %429 = vector.load %arg5[%c0_235, %c0_236] : memref<128x512xf32, #tpu.memory_space<vmem>>, vector<128x512xf32>
    %cst_237 = arith.constant dense<0.000000e+00> : vector<8x512xf32>
    %430 = tpu.matmul %426, %429, %cst_237 {dimension_numbers = #tpu.dot_dimension_numbers<[1], [0], [0], [1], [0, 0, 1, 1], [], []>} : vector<8x128xf32>, vector<128x512xf32>, vector<8x512xf32> -> vector<8x512xf32>
    %431 = arith.addf %428, %430 : vector<8x512xf32>
    %432 = vector.extract_strided_slice %431 {offsets = [0, 0], sizes = [8, 128], strides = [1, 1]} : vector<8x512xf32> to vector<8x128xf32>
    %433 = arith.negf %432 : vector<8x128xf32>
    %434 = math.exp %433 : vector<8x128xf32>
    %cst_238 = arith.constant 1.000000e+00 : f32
    %435 = vector.broadcast %cst_238 : f32 to vector<8x128xf32>
    %436 = arith.addf %435, %434 : vector<8x128xf32>
    %437 = arith.divf %435, %436 : vector<8x128xf32>
    %438 = vector.extract_strided_slice %431 {offsets = [0, 128], sizes = [8, 128], strides = [1, 1]} : vector<8x512xf32> to vector<8x128xf32>
    %439 = arith.negf %438 : vector<8x128xf32>
    %440 = math.exp %439 : vector<8x128xf32>
    %cst_239 = arith.constant 1.000000e+00 : f32
    %441 = vector.broadcast %cst_239 : f32 to vector<8x128xf32>
    %442 = arith.addf %441, %440 : vector<8x128xf32>
    %443 = arith.divf %441, %442 : vector<8x128xf32>
    %444 = vector.extract_strided_slice %431 {offsets = [0, 256], sizes = [8, 128], strides = [1, 1]} : vector<8x512xf32> to vector<8x128xf32>
    %445 = math.tanh %444 : vector<8x128xf32>
    %446 = vector.extract_strided_slice %431 {offsets = [0, 384], sizes = [8, 128], strides = [1, 1]} : vector<8x512xf32> to vector<8x128xf32>
    %447 = arith.negf %446 : vector<8x128xf32>
    %448 = math.exp %447 : vector<8x128xf32>
    %cst_240 = arith.constant 1.000000e+00 : f32
    %449 = vector.broadcast %cst_240 : f32 to vector<8x128xf32>
    %450 = arith.addf %449, %448 : vector<8x128xf32>
    %451 = arith.divf %449, %450 : vector<8x128xf32>
    %452 = arith.mulf %443, %427 : vector<8x128xf32>
    %453 = arith.mulf %437, %445 : vector<8x128xf32>
    %454 = arith.addf %452, %453 : vector<8x128xf32>
    %455 = math.tanh %454 : vector<8x128xf32>
    %456 = arith.mulf %451, %455 : vector<8x128xf32>
    %c0_241 = arith.constant 0 : index
    %c0_242 = arith.constant 0 : index
    %457 = vector.load %arg10[%c0_241, %c0_242] : memref<8x128xf32, #tpu.memory_space<vmem>>, vector<8x128xf32>
    tpu.vector_store %arg10[%c0_241, %c0_242], %456 {strides = array<i32>} : memref<8x128xf32, #tpu.memory_space<vmem>>, vector<8x128xf32>,
    %c0_243 = arith.constant 0 : index
    %c0_244 = arith.constant 0 : index
    %458 = vector.load %arg11[%c0_243, %c0_244] : memref<8x128xf32, #tpu.memory_space<vmem>>, vector<8x128xf32>
    tpu.vector_store %arg11[%c0_243, %c0_244], %454 {strides = array<i32>} : memref<8x128xf32, #tpu.memory_space<vmem>>, vector<8x128xf32>,
    %c0_245 = arith.constant 0 : index
    %c0_246 = arith.constant 0 : index
    %459 = vector.load %arg10[%c0_245, %c0_246] : memref<8x128xf32, #tpu.memory_space<vmem>>, vector<8x128xf32>
    %c0_247 = arith.constant 0 : index
    %c0_248 = arith.constant 0 : index
    %460 = vector.load %arg11[%c0_247, %c0_248] : memref<8x128xf32, #tpu.memory_space<vmem>>, vector<8x128xf32>
    %c40_249 = arith.constant 40 : index
    %c0_250 = arith.constant 0 : index
    %461 = vector.load %arg13[%c40_249, %c0_250] : memref<64x512xf32, #tpu.memory_space<vmem>>, vector<8x512xf32>
    %c0_251 = arith.constant 0 : index
    %c0_252 = arith.constant 0 : index
    %462 = vector.load %arg5[%c0_251, %c0_252] : memref<128x512xf32, #tpu.memory_space<vmem>>, vector<128x512xf32>
    %cst_253 = arith.constant dense<0.000000e+00> : vector<8x512xf32>
    %463 = tpu.matmul %459, %462, %cst_253 {dimension_numbers = #tpu.dot_dimension_numbers<[1], [0], [0], [1], [0, 0, 1, 1], [], []>} : vector<8x128xf32>, vector<128x512xf32>, vector<8x512xf32> -> vector<8x512xf32>
    %464 = arith.addf %461, %463 : vector<8x512xf32>
    %465 = vector.extract_strided_slice %464 {offsets = [0, 0], sizes = [8, 128], strides = [1, 1]} : vector<8x512xf32> to vector<8x128xf32>
    %466 = arith.negf %465 : vector<8x128xf32>
    %467 = math.exp %466 : vector<8x128xf32>
    %cst_254 = arith.constant 1.000000e+00 : f32
    %468 = vector.broadcast %cst_254 : f32 to vector<8x128xf32>
    %469 = arith.addf %468, %467 : vector<8x128xf32>
    %470 = arith.divf %468, %469 : vector<8x128xf32>
    %471 = vector.extract_strided_slice %464 {offsets = [0, 128], sizes = [8, 128], strides = [1, 1]} : vector<8x512xf32> to vector<8x128xf32>
    %472 = arith.negf %471 : vector<8x128xf32>
    %473 = math.exp %472 : vector<8x128xf32>
    %cst_255 = arith.constant 1.000000e+00 : f32
    %474 = vector.broadcast %cst_255 : f32 to vector<8x128xf32>
    %475 = arith.addf %474, %473 : vector<8x128xf32>
    %476 = arith.divf %474, %475 : vector<8x128xf32>
    %477 = vector.extract_strided_slice %464 {offsets = [0, 256], sizes = [8, 128], strides = [1, 1]} : vector<8x512xf32> to vector<8x128xf32>
    %478 = math.tanh %477 : vector<8x128xf32>
    %479 = vector.extract_strided_slice %464 {offsets = [0, 384], sizes = [8, 128], strides = [1, 1]} : vector<8x512xf32> to vector<8x128xf32>
    %480 = arith.negf %479 : vector<8x128xf32>
    %481 = math.exp %480 : vector<8x128xf32>
    %cst_256 = arith.constant 1.000000e+00 : f32
    %482 = vector.broadcast %cst_256 : f32 to vector<8x128xf32>
    %483 = arith.addf %482, %481 : vector<8x128xf32>
    %484 = arith.divf %482, %483 : vector<8x128xf32>
    %485 = arith.mulf %476, %460 : vector<8x128xf32>
    %486 = arith.mulf %470, %478 : vector<8x128xf32>
    %487 = arith.addf %485, %486 : vector<8x128xf32>
    %488 = math.tanh %487 : vector<8x128xf32>
    %489 = arith.mulf %484, %488 : vector<8x128xf32>
    %c0_257 = arith.constant 0 : index
    %c0_258 = arith.constant 0 : index
    %490 = vector.load %arg10[%c0_257, %c0_258] : memref<8x128xf32, #tpu.memory_space<vmem>>, vector<8x128xf32>
    tpu.vector_store %arg10[%c0_257, %c0_258], %489 {strides = array<i32>} : memref<8x128xf32, #tpu.memory_space<vmem>>, vector<8x128xf32>,
    %c0_259 = arith.constant 0 : index
    %c0_260 = arith.constant 0 : index
    %491 = vector.load %arg11[%c0_259, %c0_260] : memref<8x128xf32, #tpu.memory_space<vmem>>, vector<8x128xf32>
    tpu.vector_store %arg11[%c0_259, %c0_260], %487 {strides = array<i32>} : memref<8x128xf32, #tpu.memory_space<vmem>>, vector<8x128xf32>,
    %c0_261 = arith.constant 0 : index
    %c0_262 = arith.constant 0 : index
    %492 = vector.load %arg10[%c0_261, %c0_262] : memref<8x128xf32, #tpu.memory_space<vmem>>, vector<8x128xf32>
    %c0_263 = arith.constant 0 : index
    %c0_264 = arith.constant 0 : index
    %493 = vector.load %arg11[%c0_263, %c0_264] : memref<8x128xf32, #tpu.memory_space<vmem>>, vector<8x128xf32>
    %c48_265 = arith.constant 48 : index
    %c0_266 = arith.constant 0 : index
    %494 = vector.load %arg13[%c48_265, %c0_266] : memref<64x512xf32, #tpu.memory_space<vmem>>, vector<8x512xf32>
    %c0_267 = arith.constant 0 : index
    %c0_268 = arith.constant 0 : index
    %495 = vector.load %arg5[%c0_267, %c0_268] : memref<128x512xf32, #tpu.memory_space<vmem>>, vector<128x512xf32>
    %cst_269 = arith.constant dense<0.000000e+00> : vector<8x512xf32>
    %496 = tpu.matmul %492, %495, %cst_269 {dimension_numbers = #tpu.dot_dimension_numbers<[1], [0], [0], [1], [0, 0, 1, 1], [], []>} : vector<8x128xf32>, vector<128x512xf32>, vector<8x512xf32> -> vector<8x512xf32>
    %497 = arith.addf %494, %496 : vector<8x512xf32>
    %498 = vector.extract_strided_slice %497 {offsets = [0, 0], sizes = [8, 128], strides = [1, 1]} : vector<8x512xf32> to vector<8x128xf32>
    %499 = arith.negf %498 : vector<8x128xf32>
    %500 = math.exp %499 : vector<8x128xf32>
    %cst_270 = arith.constant 1.000000e+00 : f32
    %501 = vector.broadcast %cst_270 : f32 to vector<8x128xf32>
    %502 = arith.addf %501, %500 : vector<8x128xf32>
    %503 = arith.divf %501, %502 : vector<8x128xf32>
    %504 = vector.extract_strided_slice %497 {offsets = [0, 128], sizes = [8, 128], strides = [1, 1]} : vector<8x512xf32> to vector<8x128xf32>
    %505 = arith.negf %504 : vector<8x128xf32>
    %506 = math.exp %505 : vector<8x128xf32>
    %cst_271 = arith.constant 1.000000e+00 : f32
    %507 = vector.broadcast %cst_271 : f32 to vector<8x128xf32>
    %508 = arith.addf %507, %506 : vector<8x128xf32>
    %509 = arith.divf %507, %508 : vector<8x128xf32>
    %510 = vector.extract_strided_slice %497 {offsets = [0, 256], sizes = [8, 128], strides = [1, 1]} : vector<8x512xf32> to vector<8x128xf32>
    %511 = math.tanh %510 : vector<8x128xf32>
    %512 = vector.extract_strided_slice %497 {offsets = [0, 384], sizes = [8, 128], strides = [1, 1]} : vector<8x512xf32> to vector<8x128xf32>
    %513 = arith.negf %512 : vector<8x128xf32>
    %514 = math.exp %513 : vector<8x128xf32>
    %cst_272 = arith.constant 1.000000e+00 : f32
    %515 = vector.broadcast %cst_272 : f32 to vector<8x128xf32>
    %516 = arith.addf %515, %514 : vector<8x128xf32>
    %517 = arith.divf %515, %516 : vector<8x128xf32>
    %518 = arith.mulf %509, %493 : vector<8x128xf32>
    %519 = arith.mulf %503, %511 : vector<8x128xf32>
    %520 = arith.addf %518, %519 : vector<8x128xf32>
    %521 = math.tanh %520 : vector<8x128xf32>
    %522 = arith.mulf %517, %521 : vector<8x128xf32>
    %c0_273 = arith.constant 0 : index
    %c0_274 = arith.constant 0 : index
    %523 = vector.load %arg10[%c0_273, %c0_274] : memref<8x128xf32, #tpu.memory_space<vmem>>, vector<8x128xf32>
    tpu.vector_store %arg10[%c0_273, %c0_274], %522 {strides = array<i32>} : memref<8x128xf32, #tpu.memory_space<vmem>>, vector<8x128xf32>,
    %c0_275 = arith.constant 0 : index
    %c0_276 = arith.constant 0 : index
    %524 = vector.load %arg11[%c0_275, %c0_276] : memref<8x128xf32, #tpu.memory_space<vmem>>, vector<8x128xf32>
    tpu.vector_store %arg11[%c0_275, %c0_276], %520 {strides = array<i32>} : memref<8x128xf32, #tpu.memory_space<vmem>>, vector<8x128xf32>,
    %c0_277 = arith.constant 0 : index
    %c0_278 = arith.constant 0 : index
    %525 = vector.load %arg10[%c0_277, %c0_278] : memref<8x128xf32, #tpu.memory_space<vmem>>, vector<8x128xf32>
    %c0_279 = arith.constant 0 : index
    %c0_280 = arith.constant 0 : index
    %526 = vector.load %arg11[%c0_279, %c0_280] : memref<8x128xf32, #tpu.memory_space<vmem>>, vector<8x128xf32>
    %c56_281 = arith.constant 56 : index
    %c0_282 = arith.constant 0 : index
    %527 = vector.load %arg13[%c56_281, %c0_282] : memref<64x512xf32, #tpu.memory_space<vmem>>, vector<8x512xf32>
    %c0_283 = arith.constant 0 : index
    %c0_284 = arith.constant 0 : index
    %528 = vector.load %arg5[%c0_283, %c0_284] : memref<128x512xf32, #tpu.memory_space<vmem>>, vector<128x512xf32>
    %cst_285 = arith.constant dense<0.000000e+00> : vector<8x512xf32>
    %529 = tpu.matmul %525, %528, %cst_285 {dimension_numbers = #tpu.dot_dimension_numbers<[1], [0], [0], [1], [0, 0, 1, 1], [], []>} : vector<8x128xf32>, vector<128x512xf32>, vector<8x512xf32> -> vector<8x512xf32>
    %530 = arith.addf %527, %529 : vector<8x512xf32>
    %531 = vector.extract_strided_slice %530 {offsets = [0, 0], sizes = [8, 128], strides = [1, 1]} : vector<8x512xf32> to vector<8x128xf32>
    %532 = arith.negf %531 : vector<8x128xf32>
    %533 = math.exp %532 : vector<8x128xf32>
    %cst_286 = arith.constant 1.000000e+00 : f32
    %534 = vector.broadcast %cst_286 : f32 to vector<8x128xf32>
    %535 = arith.addf %534, %533 : vector<8x128xf32>
    %536 = arith.divf %534, %535 : vector<8x128xf32>
    %537 = vector.extract_strided_slice %530 {offsets = [0, 128], sizes = [8, 128], strides = [1, 1]} : vector<8x512xf32> to vector<8x128xf32>
    %538 = arith.negf %537 : vector<8x128xf32>
    %539 = math.exp %538 : vector<8x128xf32>
    %cst_287 = arith.constant 1.000000e+00 : f32
    %540 = vector.broadcast %cst_287 : f32 to vector<8x128xf32>
    %541 = arith.addf %540, %539 : vector<8x128xf32>
    %542 = arith.divf %540, %541 : vector<8x128xf32>
    %543 = vector.extract_strided_slice %530 {offsets = [0, 256], sizes = [8, 128], strides = [1, 1]} : vector<8x512xf32> to vector<8x128xf32>
    %544 = math.tanh %543 : vector<8x128xf32>
    %545 = vector.extract_strided_slice %530 {offsets = [0, 384], sizes = [8, 128], strides = [1, 1]} : vector<8x512xf32> to vector<8x128xf32>
    %546 = arith.negf %545 : vector<8x128xf32>
    %547 = math.exp %546 : vector<8x128xf32>
    %cst_288 = arith.constant 1.000000e+00 : f32
    %548 = vector.broadcast %cst_288 : f32 to vector<8x128xf32>
    %549 = arith.addf %548, %547 : vector<8x128xf32>
    %550 = arith.divf %548, %549 : vector<8x128xf32>
    %551 = arith.mulf %542, %526 : vector<8x128xf32>
    %552 = arith.mulf %536, %544 : vector<8x128xf32>
    %553 = arith.addf %551, %552 : vector<8x128xf32>
    %554 = math.tanh %553 : vector<8x128xf32>
    %555 = arith.mulf %550, %554 : vector<8x128xf32>
    %c0_289 = arith.constant 0 : index
    %c0_290 = arith.constant 0 : index
    %556 = vector.load %arg10[%c0_289, %c0_290] : memref<8x128xf32, #tpu.memory_space<vmem>>, vector<8x128xf32>
    tpu.vector_store %arg10[%c0_289, %c0_290], %555 {strides = array<i32>} : memref<8x128xf32, #tpu.memory_space<vmem>>, vector<8x128xf32>,
    %c0_291 = arith.constant 0 : index
    %c0_292 = arith.constant 0 : index
    %557 = vector.load %arg11[%c0_291, %c0_292] : memref<8x128xf32, #tpu.memory_space<vmem>>, vector<8x128xf32>
    tpu.vector_store %arg11[%c0_291, %c0_292], %553 {strides = array<i32>} : memref<8x128xf32, #tpu.memory_space<vmem>>, vector<8x128xf32>,
    %c0_293 = arith.constant 0 : index
    %c0_294 = arith.constant 0 : index
    %558 = vector.load %arg10[%c0_293, %c0_294] : memref<8x128xf32, #tpu.memory_space<vmem>>, vector<8x128xf32>
    %c0_295 = arith.constant 0 : index
    %c0_296 = arith.constant 0 : index
    %559 = vector.load %arg7[%c0_295, %c0_296] : memref<1x128xf32, #tpu.memory_space<vmem>>, vector<1x128xf32>
    %560 = vector.broadcast %559 : vector<1x128xf32> to vector<8x128xf32>
    %561 = arith.mulf %558, %560 : vector<8x128xf32>
    %cst_297 = arith.constant dense<0.000000e+00> : vector<8xf32>
    %562 = vector.multi_reduction <add>, %561, %cst_297 [1] : vector<8x128xf32> to vector<8xf32>
    %563 = vector.shape_cast %562 : vector<8xf32> to vector<8x1xf32>
    %c0_298 = arith.constant 0 : index
    %c0_299 = arith.constant 0 : index
    %564 = vector.load %arg8[%c0_298, %c0_299] : memref<1x1xf32, #tpu.memory_space<vmem>>, vector<1x1xf32>
    %565 = vector.broadcast %564 : vector<1x1xf32> to vector<8x1xf32>
    %566 = arith.addf %563, %565 : vector<8x1xf32>
    %c0_300 = arith.constant 0 : index
    %c0_301 = arith.constant 0 : index
    %567 = vector.load %arg9[%c0_300, %c0_301] : memref<8x1xf32, #tpu.memory_space<vmem>>, vector<8x1xf32>
    tpu.vector_store %arg9[%c0_300, %c0_301], %566 {strides = array<i32>} : memref<8x1xf32, #tpu.memory_space<vmem>>, vector<8x1xf32>,
    return
  }
}

</mosaic_0001>

<llo_original>
// kernel: lstm_model_forward.1
$region0: #{lstm_model_forward.1}
  #allocation0 [shape = 'u32[]', space=smem, size = 0x4, offset = 0x4, fixed_abs, tag = 'smem constant byte address 0x4 - core index']
  #allocation1 [shape = 'u32[144,128]{1,0:T(1,128)}', space=vmem, size = 0x12000, scoped, tag = 'internal scratch']
  #allocation2 [shape = 'f32[8,128]{1,0:T(8,128)}', space=vmem, size = 0x1000, scoped, tag = 'scratch operand']
  #allocation3 [shape = 'f32[8,128]{1,0:T(8,128)}', space=vmem, size = 0x1000, scoped, tag = 'scratch operand']
  #allocation4 [shape = 'f32[64,128]{1,0:T(8,128)}', space=vmem, size = 0x8000, scoped, tag = 'scratch operand']
  #allocation5 [shape = 'f32[64,512]{1,0:T(8,128)}', space=vmem, size = 0x20000, scoped, tag = 'scratch operand']
  #allocation6 [shape = 'f32[1,1]{1,0:T(1,128)S(1)}', space=vmem, size = 0x200, scoped, tag = 'scoped memory for lstm_model_forward.1']
  %s0 = inlined_call_operand.vmem [shape: f32[64,128], index: 0, kind: input, shape index: {}]
  %s1 = inlined_call_operand.vmem [shape: f32[128,512], index: 1, kind: input, shape index: {}]
  %s2 = inlined_call_operand.vmem [shape: f32[128,512], index: 2, kind: input, shape index: {}]
  %s3 = inlined_call_operand.vmem [shape: f32[1,512], index: 3, kind: input, shape index: {}]
  %s4 = inlined_call_operand.vmem [shape: f32[128,512], index: 4, kind: input, shape index: {}]
  %s5 = inlined_call_operand.vmem [shape: f32[128,512], index: 5, kind: input, shape index: {}]
  %s6 = inlined_call_operand.vmem [shape: f32[1,512], index: 6, kind: input, shape index: {}]
  %s7 = inlined_call_operand.vmem [shape: f32[1,128], index: 7, kind: input, shape index: {}]
  %s8 = inlined_call_operand.<no memory space> [shape: f32[1,1], index: 8, kind: input, shape index: {}]
  %s9 = inlined_call_operand.vmem [shape: f32[8,1], index: 9, kind: output, shape index: {}]
  %s10 = sld [smem:[#allocation0]]
  $region46: #{lstm_model_forward.1} parent=0
    _
  %s12 = ssub.s32 1, %s10
  %s13 = scalar_select 0, %s12, %s10
  %v14 = vstv %s8
  %15 = vst [vmem:[#allocation6] sm:$0x1] %v14
  // Predicated region
  $region2: #{lstm_model_forward.1} parent=0 // pred_check
    _
  $region3: #{lstm_model_forward.1} parent=0 // pred_check_branch
    %17 = sbr.rel (0) target = $region5
  $region4: #{lstm_model_forward.1} parent=0 // pred_region
    _
  $region5: #{lstm_model_forward.1} parent=0 // pred_fallthru
    _
  // Predicated region
  $region6: #{lstm_model_forward.1} parent=0 // pred_check
    _
  $region7: #{lstm_model_forward.1} parent=0 // pred_check_branch
    %19 = sbr.rel (0) target = $region9
  $region8: #{lstm_model_forward.1} parent=0 // pred_region
    _
  $region9: #{lstm_model_forward.1} parent=0 // pred_fallthru
    _
  // Predicated region
  $region10: #{lstm_model_forward.1} parent=0 // pred_check
    _
  $region11: #{lstm_model_forward.1} parent=0 // pred_check_branch
    %21 = sbr.rel (0) target = $region13
  $region12: #{lstm_model_forward.1} parent=0 // pred_region
    _
  $region13: #{lstm_model_forward.1} parent=0 // pred_fallthru
    _
  // Predicated region
  $region14: #{lstm_model_forward.1} parent=0 // pred_check
    _
  $region15: #{lstm_model_forward.1} parent=0 // pred_check_branch
    %23 = sbr.rel (0) target = $region17
  $region16: #{lstm_model_forward.1} parent=0 // pred_region
    _
  $region17: #{lstm_model_forward.1} parent=0 // pred_fallthru
    _
  // Predicated region
  $region18: #{lstm_model_forward.1} parent=0 // pred_check
    _
  $region19: #{lstm_model_forward.1} parent=0 // pred_check_branch
    %25 = sbr.rel (0) target = $region21
  $region20: #{lstm_model_forward.1} parent=0 // pred_region
    _
  $region21: #{lstm_model_forward.1} parent=0 // pred_fallthru
    _
  // Predicated region
  $region22: #{lstm_model_forward.1} parent=0 // pred_check
    _
  $region23: #{lstm_model_forward.1} parent=0 // pred_check_branch
    %27 = sbr.rel (0) target = $region25
  $region24: #{lstm_model_forward.1} parent=0 // pred_region
    _
  $region25: #{lstm_model_forward.1} parent=0 // pred_fallthru
    _
  // Predicated region
  $region26: #{lstm_model_forward.1} parent=0 // pred_check
    _
  $region27: #{lstm_model_forward.1} parent=0 // pred_check_branch
    %29 = sbr.rel (0) target = $region29
  $region28: #{lstm_model_forward.1} parent=0 // pred_region
    _
  $region29: #{lstm_model_forward.1} parent=0 // pred_fallthru
    _
  // Predicated region
  $region30: #{lstm_model_forward.1} parent=0 // pred_check
    _
  $region31: #{lstm_model_forward.1} parent=0 // pred_check_branch
    %31 = sbr.rel (0) target = $region33
  $region32: #{lstm_model_forward.1} parent=0 // pred_region
    _
  $region33: #{lstm_model_forward.1} parent=0 // pred_fallthru
    _
  // Predicated region
  $region34: #{lstm_model_forward.1} parent=0 // pred_check
    _
  $region35: #{lstm_model_forward.1} parent=0 // pred_check_branch
    %33 = sbr.rel (0) target = $region37
  $region36: #{lstm_model_forward.1} parent=0 // pred_region
    _
  $region37: #{lstm_model_forward.1} parent=0 // pred_fallthru
    _
  %v34 = vld [vmem:[%s0] sm:$0xff]
  %v35 = vld [vmem:[%s0 + $0x8] sm:$0xff]
  %v36 = vld [vmem:[%s0 + $0x10] sm:$0xff]
  %v37 = vld [vmem:[%s0 + $0x18] sm:$0xff]
  %v38 = vld [vmem:[%s0 + $0x20] sm:$0xff]
  %v39 = vld [vmem:[%s0 + $0x28] sm:$0xff]
  %v40 = vld [vmem:[%s0 + $0x30] sm:$0xff]
  %v41 = vld [vmem:[%s0 + $0x38] sm:$0xff]
  %v42 = vld [vmem:[%s1] sm:$0xff]
  %v43 = vld [vmem:[%s1 + $0x8] sm:$0xff]
  %v44 = vld [vmem:[%s1 + $0x10] sm:$0xff]
  %v45 = vld [vmem:[%s1 + $0x18] sm:$0xff]
  %v46 = vld [vmem:[%s1 + $0x20] sm:$0xff]
  %v47 = vld [vmem:[%s1 + $0x28] sm:$0xff]
  %v48 = vld [vmem:[%s1 + $0x30] sm:$0xff]
  %v49 = vld [vmem:[%s1 + $0x38] sm:$0xff]
  %v50 = vld [vmem:[%s1 + $0x40] sm:$0xff]
  %v51 = vld [vmem:[%s1 + $0x48] sm:$0xff]
  %v52 = vld [vmem:[%s1 + $0x50] sm:$0xff]
  %v53 = vld [vmem:[%s1 + $0x58] sm:$0xff]
  %v54 = vld [vmem:[%s1 + $0x60] sm:$0xff]
  %v55 = vld [vmem:[%s1 + $0x68] sm:$0xff]
  %v56 = vld [vmem:[%s1 + $0x70] sm:$0xff]
  %v57 = vld [vmem:[%s1 + $0x78] sm:$0xff]
  %v58 = vld [vmem:[%s1 + $0x80] sm:$0xff]
  %v59 = vld [vmem:[%s1 + $0x88] sm:$0xff]
  %v60 = vld [vmem:[%s1 + $0x90] sm:$0xff]
  %v61 = vld [vmem:[%s1 + $0x98] sm:$0xff]
  %v62 = vld [vmem:[%s1 + $0xa0] sm:$0xff]
  %v63 = vld [vmem:[%s1 + $0xa8] sm:$0xff]
  %v64 = vld [vmem:[%s1 + $0xb0] sm:$0xff]
  %v65 = vld [vmem:[%s1 + $0xb8] sm:$0xff]
  %v66 = vld [vmem:[%s1 + $0xc0] sm:$0xff]
  %v67 = vld [vmem:[%s1 + $0xc8] sm:$0xff]
  %v68 = vld [vmem:[%s1 + $0xd0] sm:$0xff]
  %v69 = vld [vmem:[%s1 + $0xd8] sm:$0xff]
  %v70 = vld [vmem:[%s1 + $0xe0] sm:$0xff]
  %v71 = vld [vmem:[%s1 + $0xe8] sm:$0xff]
  %v72 = vld [vmem:[%s1 + $0xf0] sm:$0xff]
  %v73 = vld [vmem:[%s1 + $0xf8] sm:$0xff]
  %v74 = vld [vmem:[%s1 + $0x100] sm:$0xff]
  %v75 = vld [vmem:[%s1 + $0x108] sm:$0xff]
  %v76 = vld [vmem:[%s1 + $0x110] sm:$0xff]
  %v77 = vld [vmem:[%s1 + $0x118] sm:$0xff]
  %v78 = vld [vmem:[%s1 + $0x120] sm:$0xff]
  %v79 = vld [vmem:[%s1 + $0x128] sm:$0xff]
  %v80 = vld [vmem:[%s1 + $0x130] sm:$0xff]
  %v81 = vld [vmem:[%s1 + $0x138] sm:$0xff]
  %v82 = vld [vmem:[%s1 + $0x140] sm:$0xff]
  %v83 = vld [vmem:[%s1 + $0x148] sm:$0xff]
  %v84 = vld [vmem:[%s1 + $0x150] sm:$0xff]
  %v85 = vld [vmem:[%s1 + $0x158] sm:$0xff]
  %v86 = vld [vmem:[%s1 + $0x160] sm:$0xff]
  %v87 = vld [vmem:[%s1 + $0x168] sm:$0xff]
  %v88 = vld [vmem:[%s1 + $0x170] sm:$0xff]
  %v89 = vld [vmem:[%s1 + $0x178] sm:$0xff]
  %v90 = vld [vmem:[%s1 + $0x180] sm:$0xff]
  %v91 = vld [vmem:[%s1 + $0x188] sm:$0xff]
  %v92 = vld [vmem:[%s1 + $0x190] sm:$0xff]
  %v93 = vld [vmem:[%s1 + $0x198] sm:$0xff]
  %v94 = vld [vmem:[%s1 + $0x1a0] sm:$0xff]
  %v95 = vld [vmem:[%s1 + $0x1a8] sm:$0xff]
  %v96 = vld [vmem:[%s1 + $0x1b0] sm:$0xff]
  %v97 = vld [vmem:[%s1 + $0x1b8] sm:$0xff]
  %v98 = vld [vmem:[%s1 + $0x1c0] sm:$0xff]
  %v99 = vld [vmem:[%s1 + $0x1c8] sm:$0xff]
  %v100 = vld [vmem:[%s1 + $0x1d0] sm:$0xff]
  %v101 = vld [vmem:[%s1 + $0x1d8] sm:$0xff]
  %v102 = vld [vmem:[%s1 + $0x1e0] sm:$0xff]
  %v103 = vld [vmem:[%s1 + $0x1e8] sm:$0xff]
  %v104 = vld [vmem:[%s1 + $0x1f0] sm:$0xff]
  %v105 = vld [vmem:[%s1 + $0x1f8] sm:$0xff]
  %v106 = vld [vmem:[%s3] sm:$0xf]
  %v108 = vlaneseq
  %v109 = vshrl.u32 %v108, 7
  %v110 = vsub.s32 0, %v109
  %v111 = vrot.slane %v106, %v110
  %v112 = vlaneseq
  %v113 = vshrl.u32 %v112, 7
  %v114 = vsub.s32 1, %v113
  %v115 = vrot.slane %v106, %v114
  %v116 = vlaneseq
  %v117 = vshrl.u32 %v116, 7
  %v118 = vsub.s32 2, %v117
  %v119 = vrot.slane %v106, %v118
  %v120 = vlaneseq
  %v121 = vshrl.u32 %v120, 7
  %v122 = vsub.s32 3, %v121
  %v123 = vrot.slane %v106, %v122
  %128 = vmatprep.subr.mxu0 %v43
  %129 = vmatpush1.msra.mxu0 %v42
  %130 = vmatprep.subr.mxu0 %v47
  %131 = vmatpush1.msra.mxu0 %v46
  %132 = vmatprep.subr.mxu0 %v51
  %133 = vmatpush1.msra.mxu0 %v50
  %134 = vmatprep.subr.mxu0 %v55
  %135 = vmatpush1.msra.mxu0 %v54
  %136 = vmatprep.subr.mxu0 %v59
  %137 = vmatpush1.msra.mxu0 %v58
  %138 = vmatprep.subr.mxu0 %v63
  %139 = vmatpush1.msra.mxu0 %v62
  %140 = vmatprep.subr.mxu0 %v67
  %141 = vmatpush1.msra.mxu0 %v66
  %142 = vmatprep.subr.mxu0 %v71
  %143 = vmatpush1.msra.mxu0 %v70
  %144 = vmatprep.subr.mxu0 %v75
  %145 = vmatpush1.msra.mxu0 %v74
  %146 = vmatprep.subr.mxu0 %v79
  %147 = vmatpush1.msra.mxu0 %v78
  %148 = vmatprep.subr.mxu0 %v83
  %149 = vmatpush1.msra.mxu0 %v82
  %150 = vmatprep.subr.mxu0 %v87
  %151 = vmatpush1.msra.mxu0 %v86
  %152 = vmatprep.subr.mxu0 %v91
  %153 = vmatpush1.msra.mxu0 %v90
  %154 = vmatprep.subr.mxu0 %v95
  %155 = vmatpush1.msra.mxu0 %v94
  %156 = vmatprep.subr.mxu0 %v99
  %157 = vmatpush1.msra.mxu0 %v98
  %158 = vmatprep.subr.mxu0 %v103
  %159 = vmatpush1.msra.mxu0 %v102
  %160 = vmatprep.subr.mxu0 0.0
  %161 = vmatpush1.msra.mxu0 0.0
  %162 = vmatprep.subr.mxu0 0.0
  %163 = vmatpush1.msra.mxu0 0.0
  %164 = vmatprep.subr.mxu0 0.0
  %165 = vmatpush1.msra.mxu0 0.0
  %166 = vmatprep.subr.mxu0 0.0
  %167 = vmatpush1.msra.mxu0 0.0
  %168 = vmatprep.subr.mxu0 0.0
  %169 = vmatpush1.msra.mxu0 0.0
  %170 = vmatprep.subr.mxu0 0.0
  %171 = vmatpush1.msra.mxu0 0.0
  %172 = vmatprep.subr.mxu0 0.0
  %173 = vmatpush1.msra.mxu0 0.0
  %174 = vmatprep.subr.mxu0 0.0
  %175 = vmatpush1.msra.mxu0 0.0
  %176 = vmatprep.subr.mxu0 0.0
  %177 = vmatpush1.msra.mxu0 0.0
  %178 = vmatprep.subr.mxu0 0.0
  %179 = vmatpush1.msra.mxu0 0.0
  %180 = vmatprep.subr.mxu0 0.0
  %181 = vmatpush1.msra.mxu0 0.0
  %182 = vmatprep.subr.mxu0 0.0
  %183 = vmatpush1.msra.mxu0 0.0
  %184 = vmatprep.subr.mxu0 0.0
  %185 = vmatpush1.msra.mxu0 0.0
  %186 = vmatprep.subr.mxu0 0.0
  %187 = vmatpush1.msra.mxu0 0.0
  %188 = vmatprep.subr.mxu0 0.0
  %189 = vmatpush1.msra.mxu0 0.0
  %190 = vmatprep.subr.mxu0 0.0
  %191 = vmatpush1.msra.mxu0 0.0
  %192 = vmatprep.mubr.f32.mxu0 0.0
  %193 = vmatmul.mubr.f32.gmra.mrb[0].mxu0 %v34
  %v194 = vpop.f32.mrb[0].mxu0
  %v195 = vadd.f32 %v111, %v194
  %v196 = vpop.f32.mrb[0].mxu0
  %v197 = vadd.f32 %v115, %v196
  %198 = vmatprep.mubr.f32.mxu0 0.0
  %199 = vmatmul.mubr.f32.gmra.mrb[0].mxu0 %v35
  %v200 = vpop.f32.mrb[0].mxu0
  %v201 = vadd.f32 %v111, %v200
  %v202 = vpop.f32.mrb[0].mxu0
  %v203 = vadd.f32 %v115, %v202
  %204 = vmatprep.mubr.f32.mxu0 0.0
  %205 = vmatmul.mubr.f32.gmra.mrb[0].mxu0 %v36
  %v206 = vpop.f32.mrb[0].mxu0
  %v207 = vadd.f32 %v111, %v206
  %v208 = vpop.f32.mrb[0].mxu0
  %v209 = vadd.f32 %v115, %v208
  %210 = vmatprep.mubr.f32.mxu0 0.0
  %211 = vmatmul.mubr.f32.gmra.mrb[0].mxu0 %v37
  %v212 = vpop.f32.mrb[0].mxu0
  %v213 = vadd.f32 %v111, %v212
  %v214 = vpop.f32.mrb[0].mxu0
  %v215 = vadd.f32 %v115, %v214
  %216 = vmatprep.mubr.f32.mxu0 0.0
  %217 = vmatmul.mubr.f32.gmra.mrb[0].mxu0 %v38
  %v218 = vpop.f32.mrb[0].mxu0
  %v219 = vadd.f32 %v111, %v218
  %v220 = vpop.f32.mrb[0].mxu0
  %v221 = vadd.f32 %v115, %v220
  %222 = vmatprep.mubr.f32.mxu0 0.0
  %223 = vmatmul.mubr.f32.gmra.mrb[0].mxu0 %v39
  %v224 = vpop.f32.mrb[0].mxu0
  %v225 = vadd.f32 %v111, %v224
  %v226 = vpop.f32.mrb[0].mxu0
  %v227 = vadd.f32 %v115, %v226
  %228 = vmatprep.mubr.f32.mxu0 0.0
  %229 = vmatmul.mubr.f32.gmra.mrb[0].mxu0 %v40
  %v230 = vpop.f32.mrb[0].mxu0
  %v231 = vadd.f32 %v111, %v230
  %v232 = vpop.f32.mrb[0].mxu0
  %v233 = vadd.f32 %v115, %v232
  %234 = vmatprep.mubr.f32.mxu0 0.0
  %235 = vmatmul.mubr.f32.gmra.mrb[0].mxu0 %v41
  %v236 = vpop.f32.mrb[0].mxu0
  %v237 = vadd.f32 %v111, %v236
  %v238 = vpop.f32.mrb[0].mxu0
  %v239 = vadd.f32 %v115, %v238
  %240 = vdwg.mxu0
  %241 = vmatprep.subr.mxu0 %v45
  %242 = vmatpush1.msra.mxu0 %v44
  %243 = vmatprep.subr.mxu0 %v49
  %244 = vmatpush1.msra.mxu0 %v48
  %245 = vmatprep.subr.mxu0 %v53
  %246 = vmatpush1.msra.mxu0 %v52
  %247 = vmatprep.subr.mxu0 %v57
  %248 = vmatpush1.msra.mxu0 %v56
  %249 = vmatprep.subr.mxu0 %v61
  %250 = vmatpush1.msra.mxu0 %v60
  %251 = vmatprep.subr.mxu0 %v65
  %252 = vmatpush1.msra.mxu0 %v64
  %253 = vmatprep.subr.mxu0 %v69
  %254 = vmatpush1.msra.mxu0 %v68
  %255 = vmatprep.subr.mxu0 %v73
  %256 = vmatpush1.msra.mxu0 %v72
  %257 = vmatprep.subr.mxu0 %v77
  %258 = vmatpush1.msra.mxu0 %v76
  %259 = vmatprep.subr.mxu0 %v81
  %260 = vmatpush1.msra.mxu0 %v80
  %261 = vmatprep.subr.mxu0 %v85
  %262 = vmatpush1.msra.mxu0 %v84
  %263 = vmatprep.subr.mxu0 %v89
  %264 = vmatpush1.msra.mxu0 %v88
  %265 = vmatprep.subr.mxu0 %v93
  %266 = vmatpush1.msra.mxu0 %v92
  %267 = vmatprep.subr.mxu0 %v97
  %268 = vmatpush1.msra.mxu0 %v96
  %269 = vmatprep.subr.mxu0 %v101
  %270 = vmatpush1.msra.mxu0 %v100
  %271 = vmatprep.subr.mxu0 %v105
  %272 = vmatpush1.msra.mxu0 %v104
  %273 = vmatprep.subr.mxu0 0.0
  %274 = vmatpush1.msra.mxu0 0.0
  %275 = vmatprep.subr.mxu0 0.0
  %276 = vmatpush1.msra.mxu0 0.0
  %277 = vmatprep.subr.mxu0 0.0
  %278 = vmatpush1.msra.mxu0 0.0
  %279 = vmatprep.subr.mxu0 0.0
  %280 = vmatpush1.msra.mxu0 0.0
  %281 = vmatprep.subr.mxu0 0.0
  %282 = vmatpush1.msra.mxu0 0.0
  %283 = vmatprep.subr.mxu0 0.0
  %284 = vmatpush1.msra.mxu0 0.0
  %285 = vmatprep.subr.mxu0 0.0
  %286 = vmatpush1.msra.mxu0 0.0
  %287 = vmatprep.subr.mxu0 0.0
  %288 = vmatpush1.msra.mxu0 0.0
  %289 = vmatprep.subr.mxu0 0.0
  %290 = vmatpush1.msra.mxu0 0.0
  %291 = vmatprep.subr.mxu0 0.0
  %292 = vmatpush1.msra.mxu0 0.0
  %293 = vmatprep.subr.mxu0 0.0
  %294 = vmatpush1.msra.mxu0 0.0
  %295 = vmatprep.subr.mxu0 0.0
  %296 = vmatpush1.msra.mxu0 0.0
  %297 = vmatprep.subr.mxu0 0.0
  %298 = vmatpush1.msra.mxu0 0.0
  %299 = vmatprep.subr.mxu0 0.0
  %300 = vmatpush1.msra.mxu0 0.0
  %301 = vmatprep.subr.mxu0 0.0
  %302 = vmatpush1.msra.mxu0 0.0
  %303 = vmatprep.subr.mxu0 0.0
  %304 = vmatpush1.msra.mxu0 0.0
  %305 = vmatprep.mubr.f32.mxu0 0.0
  %306 = vmatmul.mubr.f32.gmra.mrb[0].mxu0 %v34
  %v307 = vpop.f32.mrb[0].mxu0
  %v308 = vadd.f32 %v119, %v307
  %v309 = vpop.f32.mrb[0].mxu0
  %v310 = vadd.f32 %v123, %v309
  %311 = vmatprep.mubr.f32.mxu0 0.0
  %312 = vmatmul.mubr.f32.gmra.mrb[0].mxu0 %v35
  %v313 = vpop.f32.mrb[0].mxu0
  %v314 = vadd.f32 %v119, %v313
  %v315 = vpop.f32.mrb[0].mxu0
  %v316 = vadd.f32 %v123, %v315
  %317 = vmatprep.mubr.f32.mxu0 0.0
  %318 = vmatmul.mubr.f32.gmra.mrb[0].mxu0 %v36
  %v319 = vpop.f32.mrb[0].mxu0
  %v320 = vadd.f32 %v119, %v319
  %v321 = vpop.f32.mrb[0].mxu0
  %v322 = vadd.f32 %v123, %v321
  %323 = vmatprep.mubr.f32.mxu0 0.0
  %324 = vmatmul.mubr.f32.gmra.mrb[0].mxu0 %v37
  %v325 = vpop.f32.mrb[0].mxu0
  %v326 = vadd.f32 %v119, %v325
  %v327 = vpop.f32.mrb[0].mxu0
  %v328 = vadd.f32 %v123, %v327
  %329 = vmatprep.mubr.f32.mxu0 0.0
  %330 = vmatmul.mubr.f32.gmra.mrb[0].mxu0 %v38
  %v331 = vpop.f32.mrb[0].mxu0
  %v332 = vadd.f32 %v119, %v331
  %v333 = vpop.f32.mrb[0].mxu0
  %v334 = vadd.f32 %v123, %v333
  %335 = vmatprep.mubr.f32.mxu0 0.0
  %336 = vmatmul.mubr.f32.gmra.mrb[0].mxu0 %v39
  %v337 = vpop.f32.mrb[0].mxu0
  %v338 = vadd.f32 %v119, %v337
  %v339 = vpop.f32.mrb[0].mxu0
  %v340 = vadd.f32 %v123, %v339
  %341 = vmatprep.mubr.f32.mxu0 0.0
  %342 = vmatmul.mubr.f32.gmra.mrb[0].mxu0 %v40
  %v343 = vpop.f32.mrb[0].mxu0
  %v344 = vadd.f32 %v119, %v343
  %v345 = vpop.f32.mrb[0].mxu0
  %v346 = vadd.f32 %v123, %v345
  %347 = vmatprep.mubr.f32.mxu0 0.0
  %348 = vmatmul.mubr.f32.gmra.mrb[0].mxu0 %v41
  %v349 = vpop.f32.mrb[0].mxu0
  %v350 = vadd.f32 %v119, %v349
  %v351 = vpop.f32.mrb[0].mxu0
  %v352 = vadd.f32 %v123, %v351
  %353 = vdwg.mxu0
  %354 = vst [vmem:[#allocation5] sm:$0xff] %v195
  %355 = vst [vmem:[#allocation5 + $0x8] sm:$0xff] %v197
  %356 = vst [vmem:[#allocation5 + $0x10] sm:$0xff] %v308
  %357 = vst [vmem:[#allocation5 + $0x18] sm:$0xff] %v310
  %358 = vst [vmem:[#allocation5 + $0x20] sm:$0xff] %v201
  %359 = vst [vmem:[#allocation5 + $0x28] sm:$0xff] %v203
  %360 = vst [vmem:[#allocation5 + $0x30] sm:$0xff] %v314
  %361 = vst [vmem:[#allocation5 + $0x38] sm:$0xff] %v316
  %362 = vst [vmem:[#allocation5 + $0x40] sm:$0xff] %v207
  %363 = vst [vmem:[#allocation5 + $0x48] sm:$0xff] %v209
  %364 = vst [vmem:[#allocation5 + $0x50] sm:$0xff] %v320
  %365 = vst [vmem:[#allocation5 + $0x58] sm:$0xff] %v322
  %366 = vst [vmem:[#allocation5 + $0x60] sm:$0xff] %v213
  %367 = vst [vmem:[#allocation5 + $0x68] sm:$0xff] %v215
  %368 = vst [vmem:[#allocation5 + $0x70] sm:$0xff] %v326
  %369 = vst [vmem:[#allocation5 + $0x78] sm:$0xff] %v328
  %370 = vst [vmem:[#allocation5 + $0x80] sm:$0xff] %v219
  %371 = vst [vmem:[#allocation5 + $0x88] sm:$0xff] %v221
  %372 = vst [vmem:[#allocation5 + $0x90] sm:$0xff] %v332
  %373 = vst [vmem:[#allocation5 + $0x98] sm:$0xff] %v334
  %374 = vst [vmem:[#allocation5 + $0xa0] sm:$0xff] %v225
  %375 = vst [vmem:[#allocation5 + $0xa8] sm:$0xff] %v227
  %376 = vst [vmem:[#allocation5 + $0xb0] sm:$0xff] %v338
  %377 = vst [vmem:[#allocation5 + $0xb8] sm:$0xff] %v340
  %378 = vst [vmem:[#allocation5 + $0xc0] sm:$0xff] %v231
  %379 = vst [vmem:[#allocation5 + $0xc8] sm:$0xff] %v233
  %380 = vst [vmem:[#allocation5 + $0xd0] sm:$0xff] %v344
  %381 = vst [vmem:[#allocation5 + $0xd8] sm:$0xff] %v346
  %382 = vst [vmem:[#allocation5 + $0xe0] sm:$0xff] %v237
  %383 = vst [vmem:[#allocation5 + $0xe8] sm:$0xff] %v239
  %384 = vst [vmem:[#allocation5 + $0xf0] sm:$0xff] %v350
  %385 = vst [vmem:[#allocation5 + $0xf8] sm:$0xff] %v352
  %386 = vst [vmem:[#allocation2] sm:$0xff] 0.0
  %387 = vst [vmem:[#allocation3] sm:$0xff] 0.0
  %v388 = vld [vmem:[#allocation2] sm:$0xff]
  %v389 = vld [vmem:[#allocation3] sm:$0xff]
  %v390 = vld [vmem:[#allocation5] sm:$0xff]
  %v391 = vld [vmem:[#allocation5 + $0x8] sm:$0xff]
  %v392 = vld [vmem:[#allocation5 + $0x10] sm:$0xff]
  %v393 = vld [vmem:[#allocation5 + $0x18] sm:$0xff]
  %v394 = vld [vmem:[%s2] sm:$0xff]
  %v395 = vld [vmem:[%s2 + $0x8] sm:$0xff]
  %v396 = vld [vmem:[%s2 + $0x10] sm:$0xff]
  %v397 = vld [vmem:[%s2 + $0x18] sm:$0xff]
  %v398 = vld [vmem:[%s2 + $0x20] sm:$0xff]
  %v399 = vld [vmem:[%s2 + $0x28] sm:$0xff]
  %v400 = vld [vmem:[%s2 + $0x30] sm:$0xff]
  %v401 = vld [vmem:[%s2 + $0x38] sm:$0xff]
  %v402 = vld [vmem:[%s2 + $0x40] sm:$0xff]
  %v403 = vld [vmem:[%s2 + $0x48] sm:$0xff]
  %v404 = vld [vmem:[%s2 + $0x50] sm:$0xff]
  %v405 = vld [vmem:[%s2 + $0x58] sm:$0xff]
  %v406 = vld [vmem:[%s2 + $0x60] sm:$0xff]
  %v407 = vld [vmem:[%s2 + $0x68] sm:$0xff]
  %v408 = vld [vmem:[%s2 + $0x70] sm:$0xff]
  %v409 = vld [vmem:[%s2 + $0x78] sm:$0xff]
  %v410 = vld [vmem:[%s2 + $0x80] sm:$0xff]
  %v411 = vld [vmem:[%s2 + $0x88] sm:$0xff]
  %v412 = vld [vmem:[%s2 + $0x90] sm:$0xff]
  %v413 = vld [vmem:[%s2 + $0x98] sm:$0xff]
  %v414 = vld [vmem:[%s2 + $0xa0] sm:$0xff]
  %v415 = vld [vmem:[%s2 + $0xa8] sm:$0xff]
  %v416 = vld [vmem:[%s2 + $0xb0] sm:$0xff]
  %v417 = vld [vmem:[%s2 + $0xb8] sm:$0xff]
  %v418 = vld [vmem:[%s2 + $0xc0] sm:$0xff]
  %v419 = vld [vmem:[%s2 + $0xc8] sm:$0xff]
  %v420 = vld [vmem:[%s2 + $0xd0] sm:$0xff]
  %v421 = vld [vmem:[%s2 + $0xd8] sm:$0xff]
  %v422 = vld [vmem:[%s2 + $0xe0] sm:$0xff]
  %v423 = vld [vmem:[%s2 + $0xe8] sm:$0xff]
  %v424 = vld [vmem:[%s2 + $0xf0] sm:$0xff]
  %v425 = vld [vmem:[%s2 + $0xf8] sm:$0xff]
  %v426 = vld [vmem:[%s2 + $0x100] sm:$0xff]
  %v427 = vld [vmem:[%s2 + $0x108] sm:$0xff]
  %v428 = vld [vmem:[%s2 + $0x110] sm:$0xff]
  %v429 = vld [vmem:[%s2 + $0x118] sm:$0xff]
  %v430 = vld [vmem:[%s2 + $0x120] sm:$0xff]
  %v431 = vld [vmem:[%s2 + $0x128] sm:$0xff]
  %v432 = vld [vmem:[%s2 + $0x130] sm:$0xff]
  %v433 = vld [vmem:[%s2 + $0x138] sm:$0xff]
  %v434 = vld [vmem:[%s2 + $0x140] sm:$0xff]
  %v435 = vld [vmem:[%s2 + $0x148] sm:$0xff]
  %v436 = vld [vmem:[%s2 + $0x150] sm:$0xff]
  %v437 = vld [vmem:[%s2 + $0x158] sm:$0xff]
  %v438 = vld [vmem:[%s2 + $0x160] sm:$0xff]
  %v439 = vld [vmem:[%s2 + $0x168] sm:$0xff]
  %v440 = vld [vmem:[%s2 + $0x170] sm:$0xff]
  %v441 = vld [vmem:[%s2 + $0x178] sm:$0xff]
  %v442 = vld [vmem:[%s2 + $0x180] sm:$0xff]
  %v443 = vld [vmem:[%s2 + $0x188] sm:$0xff]
  %v444 = vld [vmem:[%s2 + $0x190] sm:$0xff]
  %v445 = vld [vmem:[%s2 + $0x198] sm:$0xff]
  %v446 = vld [vmem:[%s2 + $0x1a0] sm:$0xff]
  %v447 = vld [vmem:[%s2 + $0x1a8] sm:$0xff]
  %v448 = vld [vmem:[%s2 + $0x1b0] sm:$0xff]
  %v449 = vld [vmem:[%s2 + $0x1b8] sm:$0xff]
  %v450 = vld [vmem:[%s2 + $0x1c0] sm:$0xff]
  %v451 = vld [vmem:[%s2 + $0x1c8] sm:$0xff]
  %v452 = vld [vmem:[%s2 + $0x1d0] sm:$0xff]
  %v453 = vld [vmem:[%s2 + $0x1d8] sm:$0xff]
  %v454 = vld [vmem:[%s2 + $0x1e0] sm:$0xff]
  %v455 = vld [vmem:[%s2 + $0x1e8] sm:$0xff]
  %v456 = vld [vmem:[%s2 + $0x1f0] sm:$0xff]
  %v457 = vld [vmem:[%s2 + $0x1f8] sm:$0xff]
  %458 = vmatprep.subr.mxu0 %v395
  %459 = vmatpush1.msra.mxu0 %v394
  %460 = vmatprep.subr.mxu0 %v399
  %461 = vmatpush1.msra.mxu0 %v398
  %462 = vmatprep.subr.mxu0 %v403
  %463 = vmatpush1.msra.mxu0 %v402
  %464 = vmatprep.subr.mxu0 %v407
  %465 = vmatpush1.msra.mxu0 %v406
  %466 = vmatprep.subr.mxu0 %v411
  %467 = vmatpush1.msra.mxu0 %v410
  %468 = vmatprep.subr.mxu0 %v415
  %469 = vmatpush1.msra.mxu0 %v414
  %470 = vmatprep.subr.mxu0 %v419
  %471 = vmatpush1.msra.mxu0 %v418
  %472 = vmatprep.subr.mxu0 %v423
  %473 = vmatpush1.msra.mxu0 %v422
  %474 = vmatprep.subr.mxu0 %v427
  %475 = vmatpush1.msra.mxu0 %v426
  %476 = vmatprep.subr.mxu0 %v431
  %477 = vmatpush1.msra.mxu0 %v430
  %478 = vmatprep.subr.mxu0 %v435
  %479 = vmatpush1.msra.mxu0 %v434
  %480 = vmatprep.subr.mxu0 %v439
  %481 = vmatpush1.msra.mxu0 %v438
  %482 = vmatprep.subr.mxu0 %v443
  %483 = vmatpush1.msra.mxu0 %v442
  %484 = vmatprep.subr.mxu0 %v447
  %485 = vmatpush1.msra.mxu0 %v446
  %486 = vmatprep.subr.mxu0 %v451
  %487 = vmatpush1.msra.mxu0 %v450
  %488 = vmatprep.subr.mxu0 %v455
  %489 = vmatpush1.msra.mxu0 %v454
  %490 = vmatprep.subr.mxu0 0.0
  %491 = vmatpush1.msra.mxu0 0.0
  %492 = vmatprep.subr.mxu0 0.0
  %493 = vmatpush1.msra.mxu0 0.0
  %494 = vmatprep.subr.mxu0 0.0
  %495 = vmatpush1.msra.mxu0 0.0
  %496 = vmatprep.subr.mxu0 0.0
  %497 = vmatpush1.msra.mxu0 0.0
  %498 = vmatprep.subr.mxu0 0.0
  %499 = vmatpush1.msra.mxu0 0.0
  %500 = vmatprep.subr.mxu0 0.0
  %501 = vmatpush1.msra.mxu0 0.0
  %502 = vmatprep.subr.mxu0 0.0
  %503 = vmatpush1.msra.mxu0 0.0
  %504 = vmatprep.subr.mxu0 0.0
  %505 = vmatpush1.msra.mxu0 0.0
  %506 = vmatprep.subr.mxu0 0.0
  %507 = vmatpush1.msra.mxu0 0.0
  %508 = vmatprep.subr.mxu0 0.0
  %509 = vmatpush1.msra.mxu0 0.0
  %510 = vmatprep.subr.mxu0 0.0
  %511 = vmatpush1.msra.mxu0 0.0
  %512 = vmatprep.subr.mxu0 0.0
  %513 = vmatpush1.msra.mxu0 0.0
  %514 = vmatprep.subr.mxu0 0.0
  %515 = vmatpush1.msra.mxu0 0.0
  %516 = vmatprep.subr.mxu0 0.0
  %517 = vmatpush1.msra.mxu0 0.0
  %518 = vmatprep.subr.mxu0 0.0
  %519 = vmatpush1.msra.mxu0 0.0
  %520 = vmatprep.subr.mxu0 0.0
  %521 = vmatpush1.msra.mxu0 0.0
  %522 = vmatprep.mubr.f32.mxu0 0.0
  %523 = vmatmul.mubr.f32.gmra.mrb[0].mxu0 %v388
  %v524 = vpop.f32.mrb[0].mxu0
  %v525 = vadd.f32 0.0, %v524
  %v526 = vpop.f32.mrb[0].mxu0
  %v527 = vadd.f32 0.0, %v526
  %528 = vdwg.mxu0
  %529 = vmatprep.subr.mxu0 %v397
  %530 = vmatpush1.msra.mxu0 %v396
  %531 = vmatprep.subr.mxu0 %v401
  %532 = vmatpush1.msra.mxu0 %v400
  %533 = vmatprep.subr.mxu0 %v405
  %534 = vmatpush1.msra.mxu0 %v404
  %535 = vmatprep.subr.mxu0 %v409
  %536 = vmatpush1.msra.mxu0 %v408
  %537 = vmatprep.subr.mxu0 %v413
  %538 = vmatpush1.msra.mxu0 %v412
  %539 = vmatprep.subr.mxu0 %v417
  %540 = vmatpush1.msra.mxu0 %v416
  %541 = vmatprep.subr.mxu0 %v421
  %542 = vmatpush1.msra.mxu0 %v420
  %543 = vmatprep.subr.mxu0 %v425
  %544 = vmatpush1.msra.mxu0 %v424
  %545 = vmatprep.subr.mxu0 %v429
  %546 = vmatpush1.msra.mxu0 %v428
  %547 = vmatprep.subr.mxu0 %v433
  %548 = vmatpush1.msra.mxu0 %v432
  %549 = vmatprep.subr.mxu0 %v437
  %550 = vmatpush1.msra.mxu0 %v436
  %551 = vmatprep.subr.mxu0 %v441
  %552 = vmatpush1.msra.mxu0 %v440
  %553 = vmatprep.subr.mxu0 %v445
  %554 = vmatpush1.msra.mxu0 %v444
  %555 = vmatprep.subr.mxu0 %v449
  %556 = vmatpush1.msra.mxu0 %v448
  %557 = vmatprep.subr.mxu0 %v453
  %558 = vmatpush1.msra.mxu0 %v452
  %559 = vmatprep.subr.mxu0 %v457
  %560 = vmatpush1.msra.mxu0 %v456
  %561 = vmatprep.subr.mxu0 0.0
  %562 = vmatpush1.msra.mxu0 0.0
  %563 = vmatprep.subr.mxu0 0.0
  %564 = vmatpush1.msra.mxu0 0.0
  %565 = vmatprep.subr.mxu0 0.0
  %566 = vmatpush1.msra.mxu0 0.0
  %567 = vmatprep.subr.mxu0 0.0
  %568 = vmatpush1.msra.mxu0 0.0
  %569 = vmatprep.subr.mxu0 0.0
  %570 = vmatpush1.msra.mxu0 0.0
  %571 = vmatprep.subr.mxu0 0.0
  %572 = vmatpush1.msra.mxu0 0.0
  %573 = vmatprep.subr.mxu0 0.0
  %574 = vmatpush1.msra.mxu0 0.0
  %575 = vmatprep.subr.mxu0 0.0
  %576 = vmatpush1.msra.mxu0 0.0
  %577 = vmatprep.subr.mxu0 0.0
  %578 = vmatpush1.msra.mxu0 0.0
  %579 = vmatprep.subr.mxu0 0.0
  %580 = vmatpush1.msra.mxu0 0.0
  %581 = vmatprep.subr.mxu0 0.0
  %582 = vmatpush1.msra.mxu0 0.0
  %583 = vmatprep.subr.mxu0 0.0
  %584 = vmatpush1.msra.mxu0 0.0
  %585 = vmatprep.subr.mxu0 0.0
  %586 = vmatpush1.msra.mxu0 0.0
  %587 = vmatprep.subr.mxu0 0.0
  %588 = vmatpush1.msra.mxu0 0.0
  %589 = vmatprep.subr.mxu0 0.0
  %590 = vmatpush1.msra.mxu0 0.0
  %591 = vmatprep.subr.mxu0 0.0
  %592 = vmatpush1.msra.mxu0 0.0
  %593 = vmatprep.mubr.f32.mxu0 0.0
  %594 = vmatmul.mubr.f32.gmra.mrb[0].mxu0 %v388
  %v595 = vpop.f32.mrb[0].mxu0
  %v596 = vadd.f32 0.0, %v595
  %v597 = vpop.f32.mrb[0].mxu0
  %v598 = vadd.f32 0.0, %v597
  %599 = vdwg.mxu0
  %v600 = vadd.f32 %v390, %v525
  %v601 = vadd.f32 %v391, %v527
  %v602 = vadd.f32 %v392, %v596
  %v603 = vadd.f32 %v393, %v598
  %v604 = vxor.u32 %v600, 2147483648
  %v605 = vmul.f32 %v604, 1.442695
  %v606 = vpow.pop %v605
  %v607 = vadd.f32 %v606, 1.0
  %v608 = vrcp.pop %v607
  %v609 = vmul.f32 1.0, %v608
  %v610 = vxor.u32 %v601, 2147483648
  %v611 = vmul.f32 %v610, 1.442695
  %v612 = vpow.pop %v611
  %v613 = vadd.f32 %v612, 1.0
  %v614 = vrcp.pop %v613
  %v615 = vmul.f32 1.0, %v614
  %v616 = vtanh.pop %v602
  %v617 = vxor.u32 %v603, 2147483648
  %v618 = vmul.f32 %v617, 1.442695
  %v619 = vpow.pop %v618
  %v620 = vadd.f32 %v619, 1.0
  %v621 = vrcp.pop %v620
  %v622 = vmul.f32 1.0, %v621
  %v623 = vmul.f32 %v615, %v389
  %v624 = vmul.f32 %v609, %v616
  %v625 = vadd.f32 %v623, %v624
  %v626 = vtanh.pop %v625
  %v627 = vmul.f32 %v622, %v626
  %628 = vst [vmem:[#allocation2] sm:$0xff] %v627
  %629 = vst [vmem:[#allocation3] sm:$0xff] %v625
  %630 = vst [vmem:[#allocation4] sm:$0xff] %v627
  %v631 = vld [vmem:[#allocation2] sm:$0xff]
  %v632 = vld [vmem:[#allocation3] sm:$0xff]
  %v633 = vld [vmem:[#allocation5 + $0x20] sm:$0xff]
  %v634 = vld [vmem:[#allocation5 + $0x28] sm:$0xff]
  %v635 = vld [vmem:[#allocation5 + $0x30] sm:$0xff]
  %v636 = vld [vmem:[#allocation5 + $0x38] sm:$0xff]
  %v637 = vld [vmem:[%s2] sm:$0xff]
  %v638 = vld [vmem:[%s2 + $0x8] sm:$0xff]
  %v639 = vld [vmem:[%s2 + $0x10] sm:$0xff]
  %v640 = vld [vmem:[%s2 + $0x18] sm:$0xff]
  %v641 = vld [vmem:[%s2 + $0x20] sm:$0xff]
  %v642 = vld [vmem:[%s2 + $0x28] sm:$0xff]
  %v643 = vld [vmem:[%s2 + $0x30] sm:$0xff]
  %v644 = vld [vmem:[%s2 + $0x38] sm:$0xff]
  %v645 = vld [vmem:[%s2 + $0x40] sm:$0xff]
  %v646 = vld [vmem:[%s2 + $0x48] sm:$0xff]
  %v647 = vld [vmem:[%s2 + $0x50] sm:$0xff]
  %v648 = vld [vmem:[%s2 + $0x58] sm:$0xff]
  %v649 = vld [vmem:[%s2 + $0x60] sm:$0xff]
  %v650 = vld [vmem:[%s2 + $0x68] sm:$0xff]
  %v651 = vld [vmem:[%s2 + $0x70] sm:$0xff]
  %v652 = vld [vmem:[%s2 + $0x78] sm:$0xff]
  %v653 = vld [vmem:[%s2 + $0x80] sm:$0xff]
  %v654 = vld [vmem:[%s2 + $0x88] sm:$0xff]
  %v655 = vld [vmem:[%s2 + $0x90] sm:$0xff]
  %v656 = vld [vmem:[%s2 + $0x98] sm:$0xff]
  %v657 = vld [vmem:[%s2 + $0xa0] sm:$0xff]
  %v658 = vld [vmem:[%s2 + $0xa8] sm:$0xff]
  %v659 = vld [vmem:[%s2 + $0xb0] sm:$0xff]
  %v660 = vld [vmem:[%s2 + $0xb8] sm:$0xff]
  %v661 = vld [vmem:[%s2 + $0xc0] sm:$0xff]
  %v662 = vld [vmem:[%s2 + $0xc8] sm:$0xff]
  %v663 = vld [vmem:[%s2 + $0xd0] sm:$0xff]
  %v664 = vld [vmem:[%s2 + $0xd8] sm:$0xff]
  %v665 = vld [vmem:[%s2 + $0xe0] sm:$0xff]
  %v666 = vld [vmem:[%s2 + $0xe8] sm:$0xff]
  %v667 = vld [vmem:[%s2 + $0xf0] sm:$0xff]
  %v668 = vld [vmem:[%s2 + $0xf8] sm:$0xff]
  %v669 = vld [vmem:[%s2 + $0x100] sm:$0xff]
  %v670 = vld [vmem:[%s2 + $0x108] sm:$0xff]
  %v671 = vld [vmem:[%s2 + $0x110] sm:$0xff]
  %v672 = vld [vmem:[%s2 + $0x118] sm:$0xff]
  %v673 = vld [vmem:[%s2 + $0x120] sm:$0xff]
  %v674 = vld [vmem:[%s2 + $0x128] sm:$0xff]
  %v675 = vld [vmem:[%s2 + $0x130] sm:$0xff]
  %v676 = vld [vmem:[%s2 + $0x138] sm:$0xff]
  %v677 = vld [vmem:[%s2 + $0x140] sm:$0xff]
  %v678 = vld [vmem:[%s2 + $0x148] sm:$0xff]
  %v679 = vld [vmem:[%s2 + $0x150] sm:$0xff]
  %v680 = vld [vmem:[%s2 + $0x158] sm:$0xff]
  %v681 = vld [vmem:[%s2 + $0x160] sm:$0xff]
  %v682 = vld [vmem:[%s2 + $0x168] sm:$0xff]
  %v683 = vld [vmem:[%s2 + $0x170] sm:$0xff]
  %v684 = vld [vmem:[%s2 + $0x178] sm:$0xff]
  %v685 = vld [vmem:[%s2 + $0x180] sm:$0xff]
  %v686 = vld [vmem:[%s2 + $0x188] sm:$0xff]
  %v687 = vld [vmem:[%s2 + $0x190] sm:$0xff]
  %v688 = vld [vmem:[%s2 + $0x198] sm:$0xff]
  %v689 = vld [vmem:[%s2 + $0x1a0] sm:$0xff]
  %v690 = vld [vmem:[%s2 + $0x1a8] sm:$0xff]
  %v691 = vld [vmem:[%s2 + $0x1b0] sm:$0xff]
  %v692 = vld [vmem:[%s2 + $0x1b8] sm:$0xff]
  %v693 = vld [vmem:[%s2 + $0x1c0] sm:$0xff]
  %v694 = vld [vmem:[%s2 + $0x1c8] sm:$0xff]
  %v695 = vld [vmem:[%s2 + $0x1d0] sm:$0xff]
  %v696 = vld [vmem:[%s2 + $0x1d8] sm:$0xff]
  %v697 = vld [vmem:[%s2 + $0x1e0] sm:$0xff]
  %v698 = vld [vmem:[%s2 + $0x1e8] sm:$0xff]
  %v699 = vld [vmem:[%s2 + $0x1f0] sm:$0xff]
  %v700 = vld [vmem:[%s2 + $0x1f8] sm:$0xff]
  %701 = vmatprep.subr.mxu0 %v638
  %702 = vmatpush1.msra.mxu0 %v637
  %703 = vmatprep.subr.mxu0 %v642
  %704 = vmatpush1.msra.mxu0 %v641
  %705 = vmatprep.subr.mxu0 %v646
  %706 = vmatpush1.msra.mxu0 %v645
  %707 = vmatprep.subr.mxu0 %v650
  %708 = vmatpush1.msra.mxu0 %v649
  %709 = vmatprep.subr.mxu0 %v654
  %710 = vmatpush1.msra.mxu0 %v653
  %711 = vmatprep.subr.mxu0 %v658
  %712 = vmatpush1.msra.mxu0 %v657
  %713 = vmatprep.subr.mxu0 %v662
  %714 = vmatpush1.msra.mxu0 %v661
  %715 = vmatprep.subr.mxu0 %v666
  %716 = vmatpush1.msra.mxu0 %v665
  %717 = vmatprep.subr.mxu0 %v670
  %718 = vmatpush1.msra.mxu0 %v669
  %719 = vmatprep.subr.mxu0 %v674
  %720 = vmatpush1.msra.mxu0 %v673
  %721 = vmatprep.subr.mxu0 %v678
  %722 = vmatpush1.msra.mxu0 %v677
  %723 = vmatprep.subr.mxu0 %v682
  %724 = vmatpush1.msra.mxu0 %v681
  %725 = vmatprep.subr.mxu0 %v686
  %726 = vmatpush1.msra.mxu0 %v685
  %727 = vmatprep.subr.mxu0 %v690
  %728 = vmatpush1.msra.mxu0 %v689
  %729 = vmatprep.subr.mxu0 %v694
  %730 = vmatpush1.msra.mxu0 %v693
  %731 = vmatprep.subr.mxu0 %v698
  %732 = vmatpush1.msra.mxu0 %v697
  %733 = vmatprep.subr.mxu0 0.0
  %734 = vmatpush1.msra.mxu0 0.0
  %735 = vmatprep.subr.mxu0 0.0
  %736 = vmatpush1.msra.mxu0 0.0
  %737 = vmatprep.subr.mxu0 0.0
  %738 = vmatpush1.msra.mxu0 0.0
  %739 = vmatprep.subr.mxu0 0.0
  %740 = vmatpush1.msra.mxu0 0.0
  %741 = vmatprep.subr.mxu0 0.0
  %742 = vmatpush1.msra.mxu0 0.0
  %743 = vmatprep.subr.mxu0 0.0
  %744 = vmatpush1.msra.mxu0 0.0
  %745 = vmatprep.subr.mxu0 0.0
  %746 = vmatpush1.msra.mxu0 0.0
  %747 = vmatprep.subr.mxu0 0.0
  %748 = vmatpush1.msra.mxu0 0.0
  %749 = vmatprep.subr.mxu0 0.0
  %750 = vmatpush1.msra.mxu0 0.0
  %751 = vmatprep.subr.mxu0 0.0
  %752 = vmatpush1.msra.mxu0 0.0
  %753 = vmatprep.subr.mxu0 0.0
  %754 = vmatpush1.msra.mxu0 0.0
  %755 = vmatprep.subr.mxu0 0.0
  %756 = vmatpush1.msra.mxu0 0.0
  %757 = vmatprep.subr.mxu0 0.0
  %758 = vmatpush1.msra.mxu0 0.0
  %759 = vmatprep.subr.mxu0 0.0
  %760 = vmatpush1.msra.mxu0 0.0
  %761 = vmatprep.subr.mxu0 0.0
  %762 = vmatpush1.msra.mxu0 0.0
  %763 = vmatprep.subr.mxu0 0.0
  %764 = vmatpush1.msra.mxu0 0.0
  %765 = vmatprep.mubr.f32.mxu0 0.0
  %766 = vmatmul.mubr.f32.gmra.mrb[0].mxu0 %v631
  %v767 = vpop.f32.mrb[0].mxu0
  %v768 = vadd.f32 0.0, %v767
  %v769 = vpop.f32.mrb[0].mxu0
  %v770 = vadd.f32 0.0, %v769
  %771 = vdwg.mxu0
  %772 = vmatprep.subr.mxu0 %v640
  %773 = vmatpush1.msra.mxu0 %v639
  %774 = vmatprep.subr.mxu0 %v644
  %775 = vmatpush1.msra.mxu0 %v643
  %776 = vmatprep.subr.mxu0 %v648
  %777 = vmatpush1.msra.mxu0 %v647
  %778 = vmatprep.subr.mxu0 %v652
  %779 = vmatpush1.msra.mxu0 %v651
  %780 = vmatprep.subr.mxu0 %v656
  %781 = vmatpush1.msra.mxu0 %v655
  %782 = vmatprep.subr.mxu0 %v660
  %783 = vmatpush1.msra.mxu0 %v659
  %784 = vmatprep.subr.mxu0 %v664
  %785 = vmatpush1.msra.mxu0 %v663
  %786 = vmatprep.subr.mxu0 %v668
  %787 = vmatpush1.msra.mxu0 %v667
  %788 = vmatprep.subr.mxu0 %v672
  %789 = vmatpush1.msra.mxu0 %v671
  %790 = vmatprep.subr.mxu0 %v676
  %791 = vmatpush1.msra.mxu0 %v675
  %792 = vmatprep.subr.mxu0 %v680
  %793 = vmatpush1.msra.mxu0 %v679
  %794 = vmatprep.subr.mxu0 %v684
  %795 = vmatpush1.msra.mxu0 %v683
  %796 = vmatprep.subr.mxu0 %v688
  %797 = vmatpush1.msra.mxu0 %v687
  %798 = vmatprep.subr.mxu0 %v692
  %799 = vmatpush1.msra.mxu0 %v691
  %800 = vmatprep.subr.mxu0 %v696
  %801 = vmatpush1.msra.mxu0 %v695
  %802 = vmatprep.subr.mxu0 %v700
  %803 = vmatpush1.msra.mxu0 %v699
  %804 = vmatprep.subr.mxu0 0.0
  %805 = vmatpush1.msra.mxu0 0.0
  %806 = vmatprep.subr.mxu0 0.0
  %807 = vmatpush1.msra.mxu0 0.0
  %808 = vmatprep.subr.mxu0 0.0
  %809 = vmatpush1.msra.mxu0 0.0
  %810 = vmatprep.subr.mxu0 0.0
  %811 = vmatpush1.msra.mxu0 0.0
  %812 = vmatprep.subr.mxu0 0.0
  %813 = vmatpush1.msra.mxu0 0.0
  %814 = vmatprep.subr.mxu0 0.0
  %815 = vmatpush1.msra.mxu0 0.0
  %816 = vmatprep.subr.mxu0 0.0
  %817 = vmatpush1.msra.mxu0 0.0
  %818 = vmatprep.subr.mxu0 0.0
  %819 = vmatpush1.msra.mxu0 0.0
  %820 = vmatprep.subr.mxu0 0.0
  %821 = vmatpush1.msra.mxu0 0.0
  %822 = vmatprep.subr.mxu0 0.0
  %823 = vmatpush1.msra.mxu0 0.0
  %824 = vmatprep.subr.mxu0 0.0
  %825 = vmatpush1.msra.mxu0 0.0
  %826 = vmatprep.subr.mxu0 0.0
  %827 = vmatpush1.msra.mxu0 0.0
  %828 = vmatprep.subr.mxu0 0.0
  %829 = vmatpush1.msra.mxu0 0.0
  %830 = vmatprep.subr.mxu0 0.0
  %831 = vmatpush1.msra.mxu0 0.0
  %832 = vmatprep.subr.mxu0 0.0
  %833 = vmatpush1.msra.mxu0 0.0
  %834 = vmatprep.subr.mxu0 0.0
  %835 = vmatpush1.msra.mxu0 0.0
  %836 = vmatprep.mubr.f32.mxu0 0.0
  %837 = vmatmul.mubr.f32.gmra.mrb[0].mxu0 %v631
  %v838 = vpop.f32.mrb[0].mxu0
  %v839 = vadd.f32 0.0, %v838
  %v840 = vpop.f32.mrb[0].mxu0
  %v841 = vadd.f32 0.0, %v840
  %842 = vdwg.mxu0
  %v843 = vadd.f32 %v633, %v768
  %v844 = vadd.f32 %v634, %v770
  %v845 = vadd.f32 %v635, %v839
  %v846 = vadd.f32 %v636, %v841
  %v847 = vxor.u32 %v843, 2147483648
  %v848 = vmul.f32 %v847, 1.442695
  %v849 = vpow.pop %v848
  %v850 = vadd.f32 %v849, 1.0
  %v851 = vrcp.pop %v850
  %v852 = vmul.f32 1.0, %v851
  %v853 = vxor.u32 %v844, 2147483648
  %v854 = vmul.f32 %v853, 1.442695
  %v855 = vpow.pop %v854
  %v856 = vadd.f32 %v855, 1.0
  %v857 = vrcp.pop %v856
  %v858 = vmul.f32 1.0, %v857
  %v859 = vtanh.pop %v845
  %v860 = vxor.u32 %v846, 2147483648
  %v861 = vmul.f32 %v860, 1.442695
  %v862 = vpow.pop %v861
  %v863 = vadd.f32 %v862, 1.0
  %v864 = vrcp.pop %v863
  %v865 = vmul.f32 1.0, %v864
  %v866 = vmul.f32 %v858, %v632
  %v867 = vmul.f32 %v852, %v859
  %v868 = vadd.f32 %v866, %v867
  %v869 = vtanh.pop %v868
  %v870 = vmul.f32 %v865, %v869
  %871 = vst [vmem:[#allocation2] sm:$0xff] %v870
  %872 = vst [vmem:[#allocation3] sm:$0xff] %v868
  %873 = vst [vmem:[#allocation4 + $0x8] sm:$0xff] %v870
  %v874 = vld [vmem:[#allocation2] sm:$0xff]
  %v875 = vld [vmem:[#allocation3] sm:$0xff]
  %v876 = vld [vmem:[#allocation5 + $0x40] sm:$0xff]
  %v877 = vld [vmem:[#allocation5 + $0x48] sm:$0xff]
  %v878 = vld [vmem:[#allocation5 + $0x50] sm:$0xff]
  %v879 = vld [vmem:[#allocation5 + $0x58] sm:$0xff]
  %v880 = vld [vmem:[%s2] sm:$0xff]
  %v881 = vld [vmem:[%s2 + $0x8] sm:$0xff]
  %v882 = vld [vmem:[%s2 + $0x10] sm:$0xff]
  %v883 = vld [vmem:[%s2 + $0x18] sm:$0xff]
  %v884 = vld [vmem:[%s2 + $0x20] sm:$0xff]
  %v885 = vld [vmem:[%s2 + $0x28] sm:$0xff]
  %v886 = vld [vmem:[%s2 + $0x30] sm:$0xff]
  %v887 = vld [vmem:[%s2 + $0x38] sm:$0xff]
  %v888 = vld [vmem:[%s2 + $0x40] sm:$0xff]
  %v889 = vld [vmem:[%s2 + $0x48] sm:$0xff]
  %v890 = vld [vmem:[%s2 + $0x50] sm:$0xff]
  %v891 = vld [vmem:[%s2 + $0x58] sm:$0xff]
  %v892 = vld [vmem:[%s2 + $0x60] sm:$0xff]
  %v893 = vld [vmem:[%s2 + $0x68] sm:$0xff]
  %v894 = vld [vmem:[%s2 + $0x70] sm:$0xff]
  %v895 = vld [vmem:[%s2 + $0x78] sm:$0xff]
  %v896 = vld [vmem:[%s2 + $0x80] sm:$0xff]
  %v897 = vld [vmem:[%s2 + $0x88] sm:$0xff]
  %v898 = vld [vmem:[%s2 + $0x90] sm:$0xff]
  %v899 = vld [vmem:[%s2 + $0x98] sm:$0xff]
  %v900 = vld [vmem:[%s2 + $0xa0] sm:$0xff]
  %v901 = vld [vmem:[%s2 + $0xa8] sm:$0xff]
  %v902 = vld [vmem:[%s2 + $0xb0] sm:$0xff]
  %v903 = vld [vmem:[%s2 + $0xb8] sm:$0xff]
  %v904 = vld [vmem:[%s2 + $0xc0] sm:$0xff]
  %v905 = vld [vmem:[%s2 + $0xc8] sm:$0xff]
  %v906 = vld [vmem:[%s2 + $0xd0] sm:$0xff]
  %v907 = vld [vmem:[%s2 + $0xd8] sm:$0xff]
  %v908 = vld [vmem:[%s2 + $0xe0] sm:$0xff]
  %v909 = vld [vmem:[%s2 + $0xe8] sm:$0xff]
  %v910 = vld [vmem:[%s2 + $0xf0] sm:$0xff]
  %v911 = vld [vmem:[%s2 + $0xf8] sm:$0xff]
  %v912 = vld [vmem:[%s2 + $0x100] sm:$0xff]
  %v913 = vld [vmem:[%s2 + $0x108] sm:$0xff]
  %v914 = vld [vmem:[%s2 + $0x110] sm:$0xff]
  %v915 = vld [vmem:[%s2 + $0x118] sm:$0xff]
  %v916 = vld [vmem:[%s2 + $0x120] sm:$0xff]
  %v917 = vld [vmem:[%s2 + $0x128] sm:$0xff]
  %v918 = vld [vmem:[%s2 + $0x130] sm:$0xff]
  %v919 = vld [vmem:[%s2 + $0x138] sm:$0xff]
  %v920 = vld [vmem:[%s2 + $0x140] sm:$0xff]
  %v921 = vld [vmem:[%s2 + $0x148] sm:$0xff]
  %v922 = vld [vmem:[%s2 + $0x150] sm:$0xff]
  %v923 = vld [vmem:[%s2 + $0x158] sm:$0xff]
  %v924 = vld [vmem:[%s2 + $0x160] sm:$0xff]
  %v925 = vld [vmem:[%s2 + $0x168] sm:$0xff]
  %v926 = vld [vmem:[%s2 + $0x170] sm:$0xff]
  %v927 = vld [vmem:[%s2 + $0x178] sm:$0xff]
  %v928 = vld [vmem:[%s2 + $0x180] sm:$0xff]
  %v929 = vld [vmem:[%s2 + $0x188] sm:$0xff]
  %v930 = vld [vmem:[%s2 + $0x190] sm:$0xff]
  %v931 = vld [vmem:[%s2 + $0x198] sm:$0xff]
  %v932 = vld [vmem:[%s2 + $0x1a0] sm:$0xff]
  %v933 = vld [vmem:[%s2 + $0x1a8] sm:$0xff]
  %v934 = vld [vmem:[%s2 + $0x1b0] sm:$0xff]
  %v935 = vld [vmem:[%s2 + $0x1b8] sm:$0xff]
  %v936 = vld [vmem:[%s2 + $0x1c0] sm:$0xff]
  %v937 = vld [vmem:[%s2 + $0x1c8] sm:$0xff]
  %v938 = vld [vmem:[%s2 + $0x1d0] sm:$0xff]
  %v939 = vld [vmem:[%s2 + $0x1d8] sm:$0xff]
  %v940 = vld [vmem:[%s2 + $0x1e0] sm:$0xff]
  %v941 = vld [vmem:[%s2 + $0x1e8] sm:$0xff]
  %v942 = vld [vmem:[%s2 + $0x1f0] sm:$0xff]
  %v943 = vld [vmem:[%s2 + $0x1f8] sm:$0xff]
  %944 = vmatprep.subr.mxu0 %v881
  %945 = vmatpush1.msra.mxu0 %v880
  %946 = vmatprep.subr.mxu0 %v885
  %947 = vmatpush1.msra.mxu0 %v884
  %948 = vmatprep.subr.mxu0 %v889
  %949 = vmatpush1.msra.mxu0 %v888
  %950 = vmatprep.subr.mxu0 %v893
  %951 = vmatpush1.msra.mxu0 %v892
  %952 = vmatprep.subr.mxu0 %v897
  %953 = vmatpush1.msra.mxu0 %v896
  %954 = vmatprep.subr.mxu0 %v901
  %955 = vmatpush1.msra.mxu0 %v900
  %956 = vmatprep.subr.mxu0 %v905
  %957 = vmatpush1.msra.mxu0 %v904
  %958 = vmatprep.subr.mxu0 %v909
  %959 = vmatpush1.msra.mxu0 %v908
  %960 = vmatprep.subr.mxu0 %v913
  %961 = vmatpush1.msra.mxu0 %v912
  %962 = vmatprep.subr.mxu0 %v917
  %963 = vmatpush1.msra.mxu0 %v916
  %964 = vmatprep.subr.mxu0 %v921
  %965 = vmatpush1.msra.mxu0 %v920
  %966 = vmatprep.subr.mxu0 %v925
  %967 = vmatpush1.msra.mxu0 %v924
  %968 = vmatprep.subr.mxu0 %v929
  %969 = vmatpush1.msra.mxu0 %v928
  %970 = vmatprep.subr.mxu0 %v933
  %971 = vmatpush1.msra.mxu0 %v932
  %972 = vmatprep.subr.mxu0 %v937
  %973 = vmatpush1.msra.mxu0 %v936
  %974 = vmatprep.subr.mxu0 %v941
  %975 = vmatpush1.msra.mxu0 %v940
  %976 = vmatprep.subr.mxu0 0.0
  %977 = vmatpush1.msra.mxu0 0.0
  %978 = vmatprep.subr.mxu0 0.0
  %979 = vmatpush1.msra.mxu0 0.0
  %980 = vmatprep.subr.mxu0 0.0
  %981 = vmatpush1.msra.mxu0 0.0
  %982 = vmatprep.subr.mxu0 0.0
  %983 = vmatpush1.msra.mxu0 0.0
  %984 = vmatprep.subr.mxu0 0.0
  %985 = vmatpush1.msra.mxu0 0.0
  %986 = vmatprep.subr.mxu0 0.0
  %987 = vmatpush1.msra.mxu0 0.0
  %988 = vmatprep.subr.mxu0 0.0
  %989 = vmatpush1.msra.mxu0 0.0
  %990 = vmatprep.subr.mxu0 0.0
  %991 = vmatpush1.msra.mxu0 0.0
  %992 = vmatprep.subr.mxu0 0.0
  %993 = vmatpush1.msra.mxu0 0.0
  %994 = vmatprep.subr.mxu0 0.0
  %995 = vmatpush1.msra.mxu0 0.0
  %996 = vmatprep.subr.mxu0 0.0
  %997 = vmatpush1.msra.mxu0 0.0
  %998 = vmatprep.subr.mxu0 0.0
  %999 = vmatpush1.msra.mxu0 0.0
  %1000 = vmatprep.subr.mxu0 0.0
  %1001 = vmatpush1.msra.mxu0 0.0
  %1002 = vmatprep.subr.mxu0 0.0
  %1003 = vmatpush1.msra.mxu0 0.0
  %1004 = vmatprep.subr.mxu0 0.0
  %1005 = vmatpush1.msra.mxu0 0.0
  %1006 = vmatprep.subr.mxu0 0.0
  %1007 = vmatpush1.msra.mxu0 0.0
  %1008 = vmatprep.mubr.f32.mxu0 0.0
  %1009 = vmatmul.mubr.f32.gmra.mrb[0].mxu0 %v874
  %v1010 = vpop.f32.mrb[0].mxu0
  %v1011 = vadd.f32 0.0, %v1010
  %v1012 = vpop.f32.mrb[0].mxu0
  %v1013 = vadd.f32 0.0, %v1012
  %1014 = vdwg.mxu0
  %1015 = vmatprep.subr.mxu0 %v883
  %1016 = vmatpush1.msra.mxu0 %v882
  %1017 = vmatprep.subr.mxu0 %v887
  %1018 = vmatpush1.msra.mxu0 %v886
  %1019 = vmatprep.subr.mxu0 %v891
  %1020 = vmatpush1.msra.mxu0 %v890
  %1021 = vmatprep.subr.mxu0 %v895
  %1022 = vmatpush1.msra.mxu0 %v894
  %1023 = vmatprep.subr.mxu0 %v899
  %1024 = vmatpush1.msra.mxu0 %v898
  %1025 = vmatprep.subr.mxu0 %v903
  %1026 = vmatpush1.msra.mxu0 %v902
  %1027 = vmatprep.subr.mxu0 %v907
  %1028 = vmatpush1.msra.mxu0 %v906
  %1029 = vmatprep.subr.mxu0 %v911
  %1030 = vmatpush1.msra.mxu0 %v910
  %1031 = vmatprep.subr.mxu0 %v915
  %1032 = vmatpush1.msra.mxu0 %v914
  %1033 = vmatprep.subr.mxu0 %v919
  %1034 = vmatpush1.msra.mxu0 %v918
  %1035 = vmatprep.subr.mxu0 %v923
  %1036 = vmatpush1.msra.mxu0 %v922
  %1037 = vmatprep.subr.mxu0 %v927
  %1038 = vmatpush1.msra.mxu0 %v926
  %1039 = vmatprep.subr.mxu0 %v931
  %1040 = vmatpush1.msra.mxu0 %v930
  %1041 = vmatprep.subr.mxu0 %v935
  %1042 = vmatpush1.msra.mxu0 %v934
  %1043 = vmatprep.subr.mxu0 %v939
  %1044 = vmatpush1.msra.mxu0 %v938
  %1045 = vmatprep.subr.mxu0 %v943
  %1046 = vmatpush1.msra.mxu0 %v942
  %1047 = vmatprep.subr.mxu0 0.0
  %1048 = vmatpush1.msra.mxu0 0.0
  %1049 = vmatprep.subr.mxu0 0.0
  %1050 = vmatpush1.msra.mxu0 0.0
  %1051 = vmatprep.subr.mxu0 0.0
  %1052 = vmatpush1.msra.mxu0 0.0
  %1053 = vmatprep.subr.mxu0 0.0
  %1054 = vmatpush1.msra.mxu0 0.0
  %1055 = vmatprep.subr.mxu0 0.0
  %1056 = vmatpush1.msra.mxu0 0.0
  %1057 = vmatprep.subr.mxu0 0.0
  %1058 = vmatpush1.msra.mxu0 0.0
  %1059 = vmatprep.subr.mxu0 0.0
  %1060 = vmatpush1.msra.mxu0 0.0
  %1061 = vmatprep.subr.mxu0 0.0
  %1062 = vmatpush1.msra.mxu0 0.0
  %1063 = vmatprep.subr.mxu0 0.0
  %1064 = vmatpush1.msra.mxu0 0.0
  %1065 = vmatprep.subr.mxu0 0.0
  %1066 = vmatpush1.msra.mxu0 0.0
  %1067 = vmatprep.subr.mxu0 0.0
  %1068 = vmatpush1.msra.mxu0 0.0
  %1069 = vmatprep.subr.mxu0 0.0
  %1070 = vmatpush1.msra.mxu0 0.0
  %1071 = vmatprep.subr.mxu0 0.0
  %1072 = vmatpush1.msra.mxu0 0.0
  %1073 = vmatprep.subr.mxu0 0.0
  %1074 = vmatpush1.msra.mxu0 0.0
  %1075 = vmatprep.subr.mxu0 0.0
  %1076 = vmatpush1.msra.mxu0 0.0
  %1077 = vmatprep.subr.mxu0 0.0
  %1078 = vmatpush1.msra.mxu0 0.0
  %1079 = vmatprep.mubr.f32.mxu0 0.0
  %1080 = vmatmul.mubr.f32.gmra.mrb[0].mxu0 %v874
  %v1081 = vpop.f32.mrb[0].mxu0
  %v1082 = vadd.f32 0.0, %v1081
  %v1083 = vpop.f32.mrb[0].mxu0
  %v1084 = vadd.f32 0.0, %v1083
  %1085 = vdwg.mxu0
  %v1086 = vadd.f32 %v876, %v1011
  %v1087 = vadd.f32 %v877, %v1013
  %v1088 = vadd.f32 %v878, %v1082
  %v1089 = vadd.f32 %v879, %v1084
  %v1090 = vxor.u32 %v1086, 2147483648
  %v1091 = vmul.f32 %v1090, 1.442695
  %v1092 = vpow.pop %v1091
  %v1093 = vadd.f32 %v1092, 1.0
  %v1094 = vrcp.pop %v1093
  %v1095 = vmul.f32 1.0, %v1094
  %v1096 = vxor.u32 %v1087, 2147483648
  %v1097 = vmul.f32 %v1096, 1.442695
  %v1098 = vpow.pop %v1097
  %v1099 = vadd.f32 %v1098, 1.0
  %v1100 = vrcp.pop %v1099
  %v1101 = vmul.f32 1.0, %v1100
  %v1102 = vtanh.pop %v1088
  %v1103 = vxor.u32 %v1089, 2147483648
  %v1104 = vmul.f32 %v1103, 1.442695
  %v1105 = vpow.pop %v1104
  %v1106 = vadd.f32 %v1105, 1.0
  %v1107 = vrcp.pop %v1106
  %v1108 = vmul.f32 1.0, %v1107
  %v1109 = vmul.f32 %v1101, %v875
  %v1110 = vmul.f32 %v1095, %v1102
  %v1111 = vadd.f32 %v1109, %v1110
  %v1112 = vtanh.pop %v1111
  %v1113 = vmul.f32 %v1108, %v1112
  %1114 = vst [vmem:[#allocation2] sm:$0xff] %v1113
  %1115 = vst [vmem:[#allocation3] sm:$0xff] %v1111
  %1116 = vst [vmem:[#allocation4 + $0x10] sm:$0xff] %v1113
  %v1117 = vld [vmem:[#allocation2] sm:$0xff]
  %v1118 = vld [vmem:[#allocation3] sm:$0xff]
  %v1119 = vld [vmem:[#allocation5 + $0x60] sm:$0xff]
  %v1120 = vld [vmem:[#allocation5 + $0x68] sm:$0xff]
  %v1121 = vld [vmem:[#allocation5 + $0x70] sm:$0xff]
  %v1122 = vld [vmem:[#allocation5 + $0x78] sm:$0xff]
  %v1123 = vld [vmem:[%s2] sm:$0xff]
  %v1124 = vld [vmem:[%s2 + $0x8] sm:$0xff]
  %v1125 = vld [vmem:[%s2 + $0x10] sm:$0xff]
  %v1126 = vld [vmem:[%s2 + $0x18] sm:$0xff]
  %v1127 = vld [vmem:[%s2 + $0x20] sm:$0xff]
  %v1128 = vld [vmem:[%s2 + $0x28] sm:$0xff]
  %v1129 = vld [vmem:[%s2 + $0x30] sm:$0xff]
  %v1130 = vld [vmem:[%s2 + $0x38] sm:$0xff]
  %v1131 = vld [vmem:[%s2 + $0x40] sm:$0xff]
  %v1132 = vld [vmem:[%s2 + $0x48] sm:$0xff]
  %v1133 = vld [vmem:[%s2 + $0x50] sm:$0xff]
  %v1134 = vld [vmem:[%s2 + $0x58] sm:$0xff]
  %v1135 = vld [vmem:[%s2 + $0x60] sm:$0xff]
  %v1136 = vld [vmem:[%s2 + $0x68] sm:$0xff]
  %v1137 = vld [vmem:[%s2 + $0x70] sm:$0xff]
  %v1138 = vld [vmem:[%s2 + $0x78] sm:$0xff]
  %v1139 = vld [vmem:[%s2 + $0x80] sm:$0xff]
  %v1140 = vld [vmem:[%s2 + $0x88] sm:$0xff]
  %v1141 = vld [vmem:[%s2 + $0x90] sm:$0xff]
  %v1142 = vld [vmem:[%s2 + $0x98] sm:$0xff]
  %v1143 = vld [vmem:[%s2 + $0xa0] sm:$0xff]
  %v1144 = vld [vmem:[%s2 + $0xa8] sm:$0xff]
  %v1145 = vld [vmem:[%s2 + $0xb0] sm:$0xff]
  %v1146 = vld [vmem:[%s2 + $0xb8] sm:$0xff]
  %v1147 = vld [vmem:[%s2 + $0xc0] sm:$0xff]
  %v1148 = vld [vmem:[%s2 + $0xc8] sm:$0xff]
  %v1149 = vld [vmem:[%s2 + $0xd0] sm:$0xff]
  %v1150 = vld [vmem:[%s2 + $0xd8] sm:$0xff]
  %v1151 = vld [vmem:[%s2 + $0xe0] sm:$0xff]
  %v1152 = vld [vmem:[%s2 + $0xe8] sm:$0xff]
  %v1153 = vld [vmem:[%s2 + $0xf0] sm:$0xff]
  %v1154 = vld [vmem:[%s2 + $0xf8] sm:$0xff]
  %v1155 = vld [vmem:[%s2 + $0x100] sm:$0xff]
  %v1156 = vld [vmem:[%s2 + $0x108] sm:$0xff]
  %v1157 = vld [vmem:[%s2 + $0x110] sm:$0xff]
  %v1158 = vld [vmem:[%s2 + $0x118] sm:$0xff]
  %v1159 = vld [vmem:[%s2 + $0x120] sm:$0xff]
  %v1160 = vld [vmem:[%s2 + $0x128] sm:$0xff]
  %v1161 = vld [vmem:[%s2 + $0x130] sm:$0xff]
  %v1162 = vld [vmem:[%s2 + $0x138] sm:$0xff]
  %v1163 = vld [vmem:[%s2 + $0x140] sm:$0xff]
  %v1164 = vld [vmem:[%s2 + $0x148] sm:$0xff]
  %v1165 = vld [vmem:[%s2 + $0x150] sm:$0xff]
  %v1166 = vld [vmem:[%s2 + $0x158] sm:$0xff]
  %v1167 = vld [vmem:[%s2 + $0x160] sm:$0xff]
  %v1168 = vld [vmem:[%s2 + $0x168] sm:$0xff]
  %v1169 = vld [vmem:[%s2 + $0x170] sm:$0xff]
  %v1170 = vld [vmem:[%s2 + $0x178] sm:$0xff]
  %v1171 = vld [vmem:[%s2 + $0x180] sm:$0xff]
  %v1172 = vld [vmem:[%s2 + $0x188] sm:$0xff]
  %v1173 = vld [vmem:[%s2 + $0x190] sm:$0xff]
  %v1174 = vld [vmem:[%s2 + $0x198] sm:$0xff]
  %v1175 = vld [vmem:[%s2 + $0x1a0] sm:$0xff]
  %v1176 = vld [vmem:[%s2 + $0x1a8] sm:$0xff]
  %v1177 = vld [vmem:[%s2 + $0x1b0] sm:$0xff]
  %v1178 = vld [vmem:[%s2 + $0x1b8] sm:$0xff]
  %v1179 = vld [vmem:[%s2 + $0x1c0] sm:$0xff]
  %v1180 = vld [vmem:[%s2 + $0x1c8] sm:$0xff]
  %v1181 = vld [vmem:[%s2 + $0x1d0] sm:$0xff]
  %v1182 = vld [vmem:[%s2 + $0x1d8] sm:$0xff]
  %v1183 = vld [vmem:[%s2 + $0x1e0] sm:$0xff]
  %v1184 = vld [vmem:[%s2 + $0x1e8] sm:$0xff]
  %v1185 = vld [vmem:[%s2 + $0x1f0] sm:$0xff]
  %v1186 = vld [vmem:[%s2 + $0x1f8] sm:$0xff]
  %1187 = vmatprep.subr.mxu0 %v1124
  %1188 = vmatpush1.msra.mxu0 %v1123
  %1189 = vmatprep.subr.mxu0 %v1128
  %1190 = vmatpush1.msra.mxu0 %v1127
  %1191 = vmatprep.subr.mxu0 %v1132
  %1192 = vmatpush1.msra.mxu0 %v1131
  %1193 = vmatprep.subr.mxu0 %v1136
  %1194 = vmatpush1.msra.mxu0 %v1135
  %1195 = vmatprep.subr.mxu0 %v1140
  %1196 = vmatpush1.msra.mxu0 %v1139
  %1197 = vmatprep.subr.mxu0 %v1144
  %1198 = vmatpush1.msra.mxu0 %v1143
  %1199 = vmatprep.subr.mxu0 %v1148
  %1200 = vmatpush1.msra.mxu0 %v1147
  %1201 = vmatprep.subr.mxu0 %v1152
  %1202 = vmatpush1.msra.mxu0 %v1151
  %1203 = vmatprep.subr.mxu0 %v1156
  %1204 = vmatpush1.msra.mxu0 %v1155
  %1205 = vmatprep.subr.mxu0 %v1160
  %1206 = vmatpush1.msra.mxu0 %v1159
  %1207 = vmatprep.subr.mxu0 %v1164
  %1208 = vmatpush1.msra.mxu0 %v1163
  %1209 = vmatprep.subr.mxu0 %v1168
  %1210 = vmatpush1.msra.mxu0 %v1167
  %1211 = vmatprep.subr.mxu0 %v1172
  %1212 = vmatpush1.msra.mxu0 %v1171
  %1213 = vmatprep.subr.mxu0 %v1176
  %1214 = vmatpush1.msra.mxu0 %v1175
  %1215 = vmatprep.subr.mxu0 %v1180
  %1216 = vmatpush1.msra.mxu0 %v1179
  %1217 = vmatprep.subr.mxu0 %v1184
  %1218 = vmatpush1.msra.mxu0 %v1183
  %1219 = vmatprep.subr.mxu0 0.0
  %1220 = vmatpush1.msra.mxu0 0.0
  %1221 = vmatprep.subr.mxu0 0.0
  %1222 = vmatpush1.msra.mxu0 0.0
  %1223 = vmatprep.subr.mxu0 0.0
  %1224 = vmatpush1.msra.mxu0 0.0
  %1225 = vmatprep.subr.mxu0 0.0
  %1226 = vmatpush1.msra.mxu0 0.0
  %1227 = vmatprep.subr.mxu0 0.0
  %1228 = vmatpush1.msra.mxu0 0.0
  %1229 = vmatprep.subr.mxu0 0.0
  %1230 = vmatpush1.msra.mxu0 0.0
  %1231 = vmatprep.subr.mxu0 0.0
  %1232 = vmatpush1.msra.mxu0 0.0
  %1233 = vmatprep.subr.mxu0 0.0
  %1234 = vmatpush1.msra.mxu0 0.0
  %1235 = vmatprep.subr.mxu0 0.0
  %1236 = vmatpush1.msra.mxu0 0.0
  %1237 = vmatprep.subr.mxu0 0.0
  %1238 = vmatpush1.msra.mxu0 0.0
  %1239 = vmatprep.subr.mxu0 0.0
  %1240 = vmatpush1.msra.mxu0 0.0
  %1241 = vmatprep.subr.mxu0 0.0
  %1242 = vmatpush1.msra.mxu0 0.0
  %1243 = vmatprep.subr.mxu0 0.0
  %1244 = vmatpush1.msra.mxu0 0.0
  %1245 = vmatprep.subr.mxu0 0.0
  %1246 = vmatpush1.msra.mxu0 0.0
  %1247 = vmatprep.subr.mxu0 0.0
  %1248 = vmatpush1.msra.mxu0 0.0
  %1249 = vmatprep.subr.mxu0 0.0
  %1250 = vmatpush1.msra.mxu0 0.0
  %1251 = vmatprep.mubr.f32.mxu0 0.0
  %1252 = vmatmul.mubr.f32.gmra.mrb[0].mxu0 %v1117
  %v1253 = vpop.f32.mrb[0].mxu0
  %v1254 = vadd.f32 0.0, %v1253
  %v1255 = vpop.f32.mrb[0].mxu0
  %v1256 = vadd.f32 0.0, %v1255
  %1257 = vdwg.mxu0
  %1258 = vmatprep.subr.mxu0 %v1126
  %1259 = vmatpush1.msra.mxu0 %v1125
  %1260 = vmatprep.subr.mxu0 %v1130
  %1261 = vmatpush1.msra.mxu0 %v1129
  %1262 = vmatprep.subr.mxu0 %v1134
  %1263 = vmatpush1.msra.mxu0 %v1133
  %1264 = vmatprep.subr.mxu0 %v1138
  %1265 = vmatpush1.msra.mxu0 %v1137
  %1266 = vmatprep.subr.mxu0 %v1142
  %1267 = vmatpush1.msra.mxu0 %v1141
  %1268 = vmatprep.subr.mxu0 %v1146
  %1269 = vmatpush1.msra.mxu0 %v1145
  %1270 = vmatprep.subr.mxu0 %v1150
  %1271 = vmatpush1.msra.mxu0 %v1149
  %1272 = vmatprep.subr.mxu0 %v1154
  %1273 = vmatpush1.msra.mxu0 %v1153
  %1274 = vmatprep.subr.mxu0 %v1158
  %1275 = vmatpush1.msra.mxu0 %v1157
  %1276 = vmatprep.subr.mxu0 %v1162
  %1277 = vmatpush1.msra.mxu0 %v1161
  %1278 = vmatprep.subr.mxu0 %v1166
  %1279 = vmatpush1.msra.mxu0 %v1165
  %1280 = vmatprep.subr.mxu0 %v1170
  %1281 = vmatpush1.msra.mxu0 %v1169
  %1282 = vmatprep.subr.mxu0 %v1174
  %1283 = vmatpush1.msra.mxu0 %v1173
  %1284 = vmatprep.subr.mxu0 %v1178
  %1285 = vmatpush1.msra.mxu0 %v1177
  %1286 = vmatprep.subr.mxu0 %v1182
  %1287 = vmatpush1.msra.mxu0 %v1181
  %1288 = vmatprep.subr.mxu0 %v1186
  %1289 = vmatpush1.msra.mxu0 %v1185
  %1290 = vmatprep.subr.mxu0 0.0
  %1291 = vmatpush1.msra.mxu0 0.0
  %1292 = vmatprep.subr.mxu0 0.0
  %1293 = vmatpush1.msra.mxu0 0.0
  %1294 = vmatprep.subr.mxu0 0.0
  %1295 = vmatpush1.msra.mxu0 0.0
  %1296 = vmatprep.subr.mxu0 0.0
  %1297 = vmatpush1.msra.mxu0 0.0
  %1298 = vmatprep.subr.mxu0 0.0
  %1299 = vmatpush1.msra.mxu0 0.0
  %1300 = vmatprep.subr.mxu0 0.0
  %1301 = vmatpush1.msra.mxu0 0.0
  %1302 = vmatprep.subr.mxu0 0.0
  %1303 = vmatpush1.msra.mxu0 0.0
  %1304 = vmatprep.subr.mxu0 0.0
  %1305 = vmatpush1.msra.mxu0 0.0
  %1306 = vmatprep.subr.mxu0 0.0
  %1307 = vmatpush1.msra.mxu0 0.0
  %1308 = vmatprep.subr.mxu0 0.0
  %1309 = vmatpush1.msra.mxu0 0.0
  %1310 = vmatprep.subr.mxu0 0.0
  %1311 = vmatpush1.msra.mxu0 0.0
  %1312 = vmatprep.subr.mxu0 0.0
  %1313 = vmatpush1.msra.mxu0 0.0
  %1314 = vmatprep.subr.mxu0 0.0
  %1315 = vmatpush1.msra.mxu0 0.0
  %1316 = vmatprep.subr.mxu0 0.0
  %1317 = vmatpush1.msra.mxu0 0.0
  %1318 = vmatprep.subr.mxu0 0.0
  %1319 = vmatpush1.msra.mxu0 0.0
  %1320 = vmatprep.subr.mxu0 0.0
  %1321 = vmatpush1.msra.mxu0 0.0
  %1322 = vmatprep.mubr.f32.mxu0 0.0
  %1323 = vmatmul.mubr.f32.gmra.mrb[0].mxu0 %v1117
  %v1324 = vpop.f32.mrb[0].mxu0
  %v1325 = vadd.f32 0.0, %v1324
  %v1326 = vpop.f32.mrb[0].mxu0
  %v1327 = vadd.f32 0.0, %v1326
  %1328 = vdwg.mxu0
  %v1329 = vadd.f32 %v1119, %v1254
  %v1330 = vadd.f32 %v1120, %v1256
  %v1331 = vadd.f32 %v1121, %v1325
  %v1332 = vadd.f32 %v1122, %v1327
  %v1333 = vxor.u32 %v1329, 2147483648
  %v1334 = vmul.f32 %v1333, 1.442695
  %v1335 = vpow.pop %v1334
  %v1336 = vadd.f32 %v1335, 1.0
  %v1337 = vrcp.pop %v1336
  %v1338 = vmul.f32 1.0, %v1337
  %v1339 = vxor.u32 %v1330, 2147483648
  %v1340 = vmul.f32 %v1339, 1.442695
  %v1341 = vpow.pop %v1340
  %v1342 = vadd.f32 %v1341, 1.0
  %v1343 = vrcp.pop %v1342
  %v1344 = vmul.f32 1.0, %v1343
  %v1345 = vtanh.pop %v1331
  %v1346 = vxor.u32 %v1332, 2147483648
  %v1347 = vmul.f32 %v1346, 1.442695
  %v1348 = vpow.pop %v1347
  %v1349 = vadd.f32 %v1348, 1.0
  %v1350 = vrcp.pop %v1349
  %v1351 = vmul.f32 1.0, %v1350
  %v1352 = vmul.f32 %v1344, %v1118
  %v1353 = vmul.f32 %v1338, %v1345
  %v1354 = vadd.f32 %v1352, %v1353
  %v1355 = vtanh.pop %v1354
  %v1356 = vmul.f32 %v1351, %v1355
  %1357 = vst [vmem:[#allocation2] sm:$0xff] %v1356
  %1358 = vst [vmem:[#allocation3] sm:$0xff] %v1354
  %1359 = vst [vmem:[#allocation4 + $0x18] sm:$0xff] %v1356
  %v1360 = vld [vmem:[#allocation2] sm:$0xff]
  %v1361 = vld [vmem:[#allocation3] sm:$0xff]
  %v1362 = vld [vmem:[#allocation5 + $0x80] sm:$0xff]
  %v1363 = vld [vmem:[#allocation5 + $0x88] sm:$0xff]
  %v1364 = vld [vmem:[#allocation5 + $0x90] sm:$0xff]
  %v1365 = vld [vmem:[#allocation5 + $0x98] sm:$0xff]
  %v1366 = vld [vmem:[%s2] sm:$0xff]
  %v1367 = vld [vmem:[%s2 + $0x8] sm:$0xff]
  %v1368 = vld [vmem:[%s2 + $0x10] sm:$0xff]
  %v1369 = vld [vmem:[%s2 + $0x18] sm:$0xff]
  %v1370 = vld [vmem:[%s2 + $0x20] sm:$0xff]
  %v1371 = vld [vmem:[%s2 + $0x28] sm:$0xff]
  %v1372 = vld [vmem:[%s2 + $0x30] sm:$0xff]
  %v1373 = vld [vmem:[%s2 + $0x38] sm:$0xff]
  %v1374 = vld [vmem:[%s2 + $0x40] sm:$0xff]
  %v1375 = vld [vmem:[%s2 + $0x48] sm:$0xff]
  %v1376 = vld [vmem:[%s2 + $0x50] sm:$0xff]
  %v1377 = vld [vmem:[%s2 + $0x58] sm:$0xff]
  %v1378 = vld [vmem:[%s2 + $0x60] sm:$0xff]
  %v1379 = vld [vmem:[%s2 + $0x68] sm:$0xff]
  %v1380 = vld [vmem:[%s2 + $0x70] sm:$0xff]
  %v1381 = vld [vmem:[%s2 + $0x78] sm:$0xff]
  %v1382 = vld [vmem:[%s2 + $0x80] sm:$0xff]
  %v1383 = vld [vmem:[%s2 + $0x88] sm:$0xff]
  %v1384 = vld [vmem:[%s2 + $0x90] sm:$0xff]
  %v1385 = vld [vmem:[%s2 + $0x98] sm:$0xff]
  %v1386 = vld [vmem:[%s2 + $0xa0] sm:$0xff]
  %v1387 = vld [vmem:[%s2 + $0xa8] sm:$0xff]
  %v1388 = vld [vmem:[%s2 + $0xb0] sm:$0xff]
  %v1389 = vld [vmem:[%s2 + $0xb8] sm:$0xff]
  %v1390 = vld [vmem:[%s2 + $0xc0] sm:$0xff]
  %v1391 = vld [vmem:[%s2 + $0xc8] sm:$0xff]
  %v1392 = vld [vmem:[%s2 + $0xd0] sm:$0xff]
  %v1393 = vld [vmem:[%s2 + $0xd8] sm:$0xff]
  %v1394 = vld [vmem:[%s2 + $0xe0] sm:$0xff]
  %v1395 = vld [vmem:[%s2 + $0xe8] sm:$0xff]
  %v1396 = vld [vmem:[%s2 + $0xf0] sm:$0xff]
  %v1397 = vld [vmem:[%s2 + $0xf8] sm:$0xff]
  %v1398 = vld [vmem:[%s2 + $0x100] sm:$0xff]
  %v1399 = vld [vmem:[%s2 + $0x108] sm:$0xff]
  %v1400 = vld [vmem:[%s2 + $0x110] sm:$0xff]
  %v1401 = vld [vmem:[%s2 + $0x118] sm:$0xff]
  %v1402 = vld [vmem:[%s2 + $0x120] sm:$0xff]
  %v1403 = vld [vmem:[%s2 + $0x128] sm:$0xff]
  %v1404 = vld [vmem:[%s2 + $0x130] sm:$0xff]
  %v1405 = vld [vmem:[%s2 + $0x138] sm:$0xff]
  %v1406 = vld [vmem:[%s2 + $0x140] sm:$0xff]
  %v1407 = vld [vmem:[%s2 + $0x148] sm:$0xff]
  %v1408 = vld [vmem:[%s2 + $0x150] sm:$0xff]
  %v1409 = vld [vmem:[%s2 + $0x158] sm:$0xff]
  %v1410 = vld [vmem:[%s2 + $0x160] sm:$0xff]
  %v1411 = vld [vmem:[%s2 + $0x168] sm:$0xff]
  %v1412 = vld [vmem:[%s2 + $0x170] sm:$0xff]
  %v1413 = vld [vmem:[%s2 + $0x178] sm:$0xff]
  %v1414 = vld [vmem:[%s2 + $0x180] sm:$0xff]
  %v1415 = vld [vmem:[%s2 + $0x188] sm:$0xff]
  %v1416 = vld [vmem:[%s2 + $0x190] sm:$0xff]
  %v1417 = vld [vmem:[%s2 + $0x198] sm:$0xff]
  %v1418 = vld [vmem:[%s2 + $0x1a0] sm:$0xff]
  %v1419 = vld [vmem:[%s2 + $0x1a8] sm:$0xff]
  %v1420 = vld [vmem:[%s2 + $0x1b0] sm:$0xff]
  %v1421 = vld [vmem:[%s2 + $0x1b8] sm:$0xff]
  %v1422 = vld [vmem:[%s2 + $0x1c0] sm:$0xff]
  %v1423 = vld [vmem:[%s2 + $0x1c8] sm:$0xff]
  %v1424 = vld [vmem:[%s2 + $0x1d0] sm:$0xff]
  %v1425 = vld [vmem:[%s2 + $0x1d8] sm:$0xff]
  %v1426 = vld [vmem:[%s2 + $0x1e0] sm:$0xff]
  %v1427 = vld [vmem:[%s2 + $0x1e8] sm:$0xff]
  %v1428 = vld [vmem:[%s2 + $0x1f0] sm:$0xff]
  %v1429 = vld [vmem:[%s2 + $0x1f8] sm:$0xff]
  %1430 = vmatprep.subr.mxu0 %v1367
  %1431 = vmatpush1.msra.mxu0 %v1366
  %1432 = vmatprep.subr.mxu0 %v1371
  %1433 = vmatpush1.msra.mxu0 %v1370
  %1434 = vmatprep.subr.mxu0 %v1375
  %1435 = vmatpush1.msra.mxu0 %v1374
  %1436 = vmatprep.subr.mxu0 %v1379
  %1437 = vmatpush1.msra.mxu0 %v1378
  %1438 = vmatprep.subr.mxu0 %v1383
  %1439 = vmatpush1.msra.mxu0 %v1382
  %1440 = vmatprep.subr.mxu0 %v1387
  %1441 = vmatpush1.msra.mxu0 %v1386
  %1442 = vmatprep.subr.mxu0 %v1391
  %1443 = vmatpush1.msra.mxu0 %v1390
  %1444 = vmatprep.subr.mxu0 %v1395
  %1445 = vmatpush1.msra.mxu0 %v1394
  %1446 = vmatprep.subr.mxu0 %v1399
  %1447 = vmatpush1.msra.mxu0 %v1398
  %1448 = vmatprep.subr.mxu0 %v1403
  %1449 = vmatpush1.msra.mxu0 %v1402
  %1450 = vmatprep.subr.mxu0 %v1407
  %1451 = vmatpush1.msra.mxu0 %v1406
  %1452 = vmatprep.subr.mxu0 %v1411
  %1453 = vmatpush1.msra.mxu0 %v1410
  %1454 = vmatprep.subr.mxu0 %v1415
  %1455 = vmatpush1.msra.mxu0 %v1414
  %1456 = vmatprep.subr.mxu0 %v1419
  %1457 = vmatpush1.msra.mxu0 %v1418
  %1458 = vmatprep.subr.mxu0 %v1423
  %1459 = vmatpush1.msra.mxu0 %v1422
  %1460 = vmatprep.subr.mxu0 %v1427
  %1461 = vmatpush1.msra.mxu0 %v1426
  %1462 = vmatprep.subr.mxu0 0.0
  %1463 = vmatpush1.msra.mxu0 0.0
  %1464 = vmatprep.subr.mxu0 0.0
  %1465 = vmatpush1.msra.mxu0 0.0
  %1466 = vmatprep.subr.mxu0 0.0
  %1467 = vmatpush1.msra.mxu0 0.0
  %1468 = vmatprep.subr.mxu0 0.0
  %1469 = vmatpush1.msra.mxu0 0.0
  %1470 = vmatprep.subr.mxu0 0.0
  %1471 = vmatpush1.msra.mxu0 0.0
  %1472 = vmatprep.subr.mxu0 0.0
  %1473 = vmatpush1.msra.mxu0 0.0
  %1474 = vmatprep.subr.mxu0 0.0
  %1475 = vmatpush1.msra.mxu0 0.0
  %1476 = vmatprep.subr.mxu0 0.0
  %1477 = vmatpush1.msra.mxu0 0.0
  %1478 = vmatprep.subr.mxu0 0.0
  %1479 = vmatpush1.msra.mxu0 0.0
  %1480 = vmatprep.subr.mxu0 0.0
  %1481 = vmatpush1.msra.mxu0 0.0
  %1482 = vmatprep.subr.mxu0 0.0
  %1483 = vmatpush1.msra.mxu0 0.0
  %1484 = vmatprep.subr.mxu0 0.0
  %1485 = vmatpush1.msra.mxu0 0.0
  %1486 = vmatprep.subr.mxu0 0.0
  %1487 = vmatpush1.msra.mxu0 0.0
  %1488 = vmatprep.subr.mxu0 0.0
  %1489 = vmatpush1.msra.mxu0 0.0
  %1490 = vmatprep.subr.mxu0 0.0
  %1491 = vmatpush1.msra.mxu0 0.0
  %1492 = vmatprep.subr.mxu0 0.0
  %1493 = vmatpush1.msra.mxu0 0.0
  %1494 = vmatprep.mubr.f32.mxu0 0.0
  %1495 = vmatmul.mubr.f32.gmra.mrb[0].mxu0 %v1360
  %v1496 = vpop.f32.mrb[0].mxu0
  %v1497 = vadd.f32 0.0, %v1496
  %v1498 = vpop.f32.mrb[0].mxu0
  %v1499 = vadd.f32 0.0, %v1498
  %1500 = vdwg.mxu0
  %1501 = vmatprep.subr.mxu0 %v1369
  %1502 = vmatpush1.msra.mxu0 %v1368
  %1503 = vmatprep.subr.mxu0 %v1373
  %1504 = vmatpush1.msra.mxu0 %v1372
  %1505 = vmatprep.subr.mxu0 %v1377
  %1506 = vmatpush1.msra.mxu0 %v1376
  %1507 = vmatprep.subr.mxu0 %v1381
  %1508 = vmatpush1.msra.mxu0 %v1380
  %1509 = vmatprep.subr.mxu0 %v1385
  %1510 = vmatpush1.msra.mxu0 %v1384
  %1511 = vmatprep.subr.mxu0 %v1389
  %1512 = vmatpush1.msra.mxu0 %v1388
  %1513 = vmatprep.subr.mxu0 %v1393
  %1514 = vmatpush1.msra.mxu0 %v1392
  %1515 = vmatprep.subr.mxu0 %v1397
  %1516 = vmatpush1.msra.mxu0 %v1396
  %1517 = vmatprep.subr.mxu0 %v1401
  %1518 = vmatpush1.msra.mxu0 %v1400
  %1519 = vmatprep.subr.mxu0 %v1405
  %1520 = vmatpush1.msra.mxu0 %v1404
  %1521 = vmatprep.subr.mxu0 %v1409
  %1522 = vmatpush1.msra.mxu0 %v1408
  %1523 = vmatprep.subr.mxu0 %v1413
  %1524 = vmatpush1.msra.mxu0 %v1412
  %1525 = vmatprep.subr.mxu0 %v1417
  %1526 = vmatpush1.msra.mxu0 %v1416
  %1527 = vmatprep.subr.mxu0 %v1421
  %1528 = vmatpush1.msra.mxu0 %v1420
  %1529 = vmatprep.subr.mxu0 %v1425
  %1530 = vmatpush1.msra.mxu0 %v1424
  %1531 = vmatprep.subr.mxu0 %v1429
  %1532 = vmatpush1.msra.mxu0 %v1428
  %1533 = vmatprep.subr.mxu0 0.0
  %1534 = vmatpush1.msra.mxu0 0.0
  %1535 = vmatprep.subr.mxu0 0.0
  %1536 = vmatpush1.msra.mxu0 0.0
  %1537 = vmatprep.subr.mxu0 0.0
  %1538 = vmatpush1.msra.mxu0 0.0
  %1539 = vmatprep.subr.mxu0 0.0
  %1540 = vmatpush1.msra.mxu0 0.0
  %1541 = vmatprep.subr.mxu0 0.0
  %1542 = vmatpush1.msra.mxu0 0.0
  %1543 = vmatprep.subr.mxu0 0.0
  %1544 = vmatpush1.msra.mxu0 0.0
  %1545 = vmatprep.subr.mxu0 0.0
  %1546 = vmatpush1.msra.mxu0 0.0
  %1547 = vmatprep.subr.mxu0 0.0
  %1548 = vmatpush1.msra.mxu0 0.0
  %1549 = vmatprep.subr.mxu0 0.0
  %1550 = vmatpush1.msra.mxu0 0.0
  %1551 = vmatprep.subr.mxu0 0.0
  %1552 = vmatpush1.msra.mxu0 0.0
  %1553 = vmatprep.subr.mxu0 0.0
  %1554 = vmatpush1.msra.mxu0 0.0
  %1555 = vmatprep.subr.mxu0 0.0
  %1556 = vmatpush1.msra.mxu0 0.0
  %1557 = vmatprep.subr.mxu0 0.0
  %1558 = vmatpush1.msra.mxu0 0.0
  %1559 = vmatprep.subr.mxu0 0.0
  %1560 = vmatpush1.msra.mxu0 0.0
  %1561 = vmatprep.subr.mxu0 0.0
  %1562 = vmatpush1.msra.mxu0 0.0
  %1563 = vmatprep.subr.mxu0 0.0
  %1564 = vmatpush1.msra.mxu0 0.0
  %1565 = vmatprep.mubr.f32.mxu0 0.0
  %1566 = vmatmul.mubr.f32.gmra.mrb[0].mxu0 %v1360
  %v1567 = vpop.f32.mrb[0].mxu0
  %v1568 = vadd.f32 0.0, %v1567
  %v1569 = vpop.f32.mrb[0].mxu0
  %v1570 = vadd.f32 0.0, %v1569
  %1571 = vdwg.mxu0
  %v1572 = vadd.f32 %v1362, %v1497
  %v1573 = vadd.f32 %v1363, %v1499
  %v1574 = vadd.f32 %v1364, %v1568
  %v1575 = vadd.f32 %v1365, %v1570
  %v1576 = vxor.u32 %v1572, 2147483648
  %v1577 = vmul.f32 %v1576, 1.442695
  %v1578 = vpow.pop %v1577
  %v1579 = vadd.f32 %v1578, 1.0
  %v1580 = vrcp.pop %v1579
  %v1581 = vmul.f32 1.0, %v1580
  %v1582 = vxor.u32 %v1573, 2147483648
  %v1583 = vmul.f32 %v1582, 1.442695
  %v1584 = vpow.pop %v1583
  %v1585 = vadd.f32 %v1584, 1.0
  %v1586 = vrcp.pop %v1585
  %v1587 = vmul.f32 1.0, %v1586
  %v1588 = vtanh.pop %v1574
  %v1589 = vxor.u32 %v1575, 2147483648
  %v1590 = vmul.f32 %v1589, 1.442695
  %v1591 = vpow.pop %v1590
  %v1592 = vadd.f32 %v1591, 1.0
  %v1593 = vrcp.pop %v1592
  %v1594 = vmul.f32 1.0, %v1593
  %v1595 = vmul.f32 %v1587, %v1361
  %v1596 = vmul.f32 %v1581, %v1588
  %v1597 = vadd.f32 %v1595, %v1596
  %v1598 = vtanh.pop %v1597
  %v1599 = vmul.f32 %v1594, %v1598
  %1600 = vst [vmem:[#allocation2] sm:$0xff] %v1599
  %1601 = vst [vmem:[#allocation3] sm:$0xff] %v1597
  %1602 = vst [vmem:[#allocation4 + $0x20] sm:$0xff] %v1599
  %v1603 = vld [vmem:[#allocation2] sm:$0xff]
  %v1604 = vld [vmem:[#allocation3] sm:$0xff]
  %v1605 = vld [vmem:[#allocation5 + $0xa0] sm:$0xff]
  %v1606 = vld [vmem:[#allocation5 + $0xa8] sm:$0xff]
  %v1607 = vld [vmem:[#allocation5 + $0xb0] sm:$0xff]
  %v1608 = vld [vmem:[#allocation5 + $0xb8] sm:$0xff]
  %v1609 = vld [vmem:[%s2] sm:$0xff]
  %v1610 = vld [vmem:[%s2 + $0x8] sm:$0xff]
  %v1611 = vld [vmem:[%s2 + $0x10] sm:$0xff]
  %v1612 = vld [vmem:[%s2 + $0x18] sm:$0xff]
  %v1613 = vld [vmem:[%s2 + $0x20] sm:$0xff]
  %v1614 = vld [vmem:[%s2 + $0x28] sm:$0xff]
  %v1615 = vld [vmem:[%s2 + $0x30] sm:$0xff]
  %v1616 = vld [vmem:[%s2 + $0x38] sm:$0xff]
  %v1617 = vld [vmem:[%s2 + $0x40] sm:$0xff]
  %v1618 = vld [vmem:[%s2 + $0x48] sm:$0xff]
  %v1619 = vld [vmem:[%s2 + $0x50] sm:$0xff]
  %v1620 = vld [vmem:[%s2 + $0x58] sm:$0xff]
  %v1621 = vld [vmem:[%s2 + $0x60] sm:$0xff]
  %v1622 = vld [vmem:[%s2 + $0x68] sm:$0xff]
  %v1623 = vld [vmem:[%s2 + $0x70] sm:$0xff]
  %v1624 = vld [vmem:[%s2 + $0x78] sm:$0xff]
  %v1625 = vld [vmem:[%s2 + $0x80] sm:$0xff]
  %v1626 = vld [vmem:[%s2 + $0x88] sm:$0xff]
  %v1627 = vld [vmem:[%s2 + $0x90] sm:$0xff]
  %v1628 = vld [vmem:[%s2 + $0x98] sm:$0xff]
  %v1629 = vld [vmem:[%s2 + $0xa0] sm:$0xff]
  %v1630 = vld [vmem:[%s2 + $0xa8] sm:$0xff]
  %v1631 = vld [vmem:[%s2 + $0xb0] sm:$0xff]
  %v1632 = vld [vmem:[%s2 + $0xb8] sm:$0xff]
  %v1633 = vld [vmem:[%s2 + $0xc0] sm:$0xff]
  %v1634 = vld [vmem:[%s2 + $0xc8] sm:$0xff]
  %v1635 = vld [vmem:[%s2 + $0xd0] sm:$0xff]
  %v1636 = vld [vmem:[%s2 + $0xd8] sm:$0xff]
  %v1637 = vld [vmem:[%s2 + $0xe0] sm:$0xff]
  %v1638 = vld [vmem:[%s2 + $0xe8] sm:$0xff]
  %v1639 = vld [vmem:[%s2 + $0xf0] sm:$0xff]
  %v1640 = vld [vmem:[%s2 + $0xf8] sm:$0xff]
  %v1641 = vld [vmem:[%s2 + $0x100] sm:$0xff]
  %v1642 = vld [vmem:[%s2 + $0x108] sm:$0xff]
  %v1643 = vld [vmem:[%s2 + $0x110] sm:$0xff]
  %v1644 = vld [vmem:[%s2 + $0x118] sm:$0xff]
  %v1645 = vld [vmem:[%s2 + $0x120] sm:$0xff]
  %v1646 = vld [vmem:[%s2 + $0x128] sm:$0xff]
  %v1647 = vld [vmem:[%s2 + $0x130] sm:$0xff]
  %v1648 = vld [vmem:[%s2 + $0x138] sm:$0xff]
  %v1649 = vld [vmem:[%s2 + $0x140] sm:$0xff]
  %v1650 = vld [vmem:[%s2 + $0x148] sm:$0xff]
  %v1651 = vld [vmem:[%s2 + $0x150] sm:$0xff]
  %v1652 = vld [vmem:[%s2 + $0x158] sm:$0xff]
  %v1653 = vld [vmem:[%s2 + $0x160] sm:$0xff]
  %v1654 = vld [vmem:[%s2 + $0x168] sm:$0xff]
  %v1655 = vld [vmem:[%s2 + $0x170] sm:$0xff]
  %v1656 = vld [vmem:[%s2 + $0x178] sm:$0xff]
  %v1657 = vld [vmem:[%s2 + $0x180] sm:$0xff]
  %v1658 = vld [vmem:[%s2 + $0x188] sm:$0xff]
  %v1659 = vld [vmem:[%s2 + $0x190] sm:$0xff]
  %v1660 = vld [vmem:[%s2 + $0x198] sm:$0xff]
  %v1661 = vld [vmem:[%s2 + $0x1a0] sm:$0xff]
  %v1662 = vld [vmem:[%s2 + $0x1a8] sm:$0xff]
  %v1663 = vld [vmem:[%s2 + $0x1b0] sm:$0xff]
  %v1664 = vld [vmem:[%s2 + $0x1b8] sm:$0xff]
  %v1665 = vld [vmem:[%s2 + $0x1c0] sm:$0xff]
  %v1666 = vld [vmem:[%s2 + $0x1c8] sm:$0xff]
  %v1667 = vld [vmem:[%s2 + $0x1d0] sm:$0xff]
  %v1668 = vld [vmem:[%s2 + $0x1d8] sm:$0xff]
  %v1669 = vld [vmem:[%s2 + $0x1e0] sm:$0xff]
  %v1670 = vld [vmem:[%s2 + $0x1e8] sm:$0xff]
  %v1671 = vld [vmem:[%s2 + $0x1f0] sm:$0xff]
  %v1672 = vld [vmem:[%s2 + $0x1f8] sm:$0xff]
  %1673 = vmatprep.subr.mxu0 %v1610
  %1674 = vmatpush1.msra.mxu0 %v1609
  %1675 = vmatprep.subr.mxu0 %v1614
  %1676 = vmatpush1.msra.mxu0 %v1613
  %1677 = vmatprep.subr.mxu0 %v1618
  %1678 = vmatpush1.msra.mxu0 %v1617
  %1679 = vmatprep.subr.mxu0 %v1622
  %1680 = vmatpush1.msra.mxu0 %v1621
  %1681 = vmatprep.subr.mxu0 %v1626
  %1682 = vmatpush1.msra.mxu0 %v1625
  %1683 = vmatprep.subr.mxu0 %v1630
  %1684 = vmatpush1.msra.mxu0 %v1629
  %1685 = vmatprep.subr.mxu0 %v1634
  %1686 = vmatpush1.msra.mxu0 %v1633
  %1687 = vmatprep.subr.mxu0 %v1638
  %1688 = vmatpush1.msra.mxu0 %v1637
  %1689 = vmatprep.subr.mxu0 %v1642
  %1690 = vmatpush1.msra.mxu0 %v1641
  %1691 = vmatprep.subr.mxu0 %v1646
  %1692 = vmatpush1.msra.mxu0 %v1645
  %1693 = vmatprep.subr.mxu0 %v1650
  %1694 = vmatpush1.msra.mxu0 %v1649
  %1695 = vmatprep.subr.mxu0 %v1654
  %1696 = vmatpush1.msra.mxu0 %v1653
  %1697 = vmatprep.subr.mxu0 %v1658
  %1698 = vmatpush1.msra.mxu0 %v1657
  %1699 = vmatprep.subr.mxu0 %v1662
  %1700 = vmatpush1.msra.mxu0 %v1661
  %1701 = vmatprep.subr.mxu0 %v1666
  %1702 = vmatpush1.msra.mxu0 %v1665
  %1703 = vmatprep.subr.mxu0 %v1670
  %1704 = vmatpush1.msra.mxu0 %v1669
  %1705 = vmatprep.subr.mxu0 0.0
  %1706 = vmatpush1.msra.mxu0 0.0
  %1707 = vmatprep.subr.mxu0 0.0
  %1708 = vmatpush1.msra.mxu0 0.0
  %1709 = vmatprep.subr.mxu0 0.0
  %1710 = vmatpush1.msra.mxu0 0.0
  %1711 = vmatprep.subr.mxu0 0.0
  %1712 = vmatpush1.msra.mxu0 0.0
  %1713 = vmatprep.subr.mxu0 0.0
  %1714 = vmatpush1.msra.mxu0 0.0
  %1715 = vmatprep.subr.mxu0 0.0
  %1716 = vmatpush1.msra.mxu0 0.0
  %1717 = vmatprep.subr.mxu0 0.0
  %1718 = vmatpush1.msra.mxu0 0.0
  %1719 = vmatprep.subr.mxu0 0.0
  %1720 = vmatpush1.msra.mxu0 0.0
  %1721 = vmatprep.subr.mxu0 0.0
  %1722 = vmatpush1.msra.mxu0 0.0
  %1723 = vmatprep.subr.mxu0 0.0
  %1724 = vmatpush1.msra.mxu0 0.0
  %1725 = vmatprep.subr.mxu0 0.0
  %1726 = vmatpush1.msra.mxu0 0.0
  %1727 = vmatprep.subr.mxu0 0.0
  %1728 = vmatpush1.msra.mxu0 0.0
  %1729 = vmatprep.subr.mxu0 0.0
  %1730 = vmatpush1.msra.mxu0 0.0
  %1731 = vmatprep.subr.mxu0 0.0
  %1732 = vmatpush1.msra.mxu0 0.0
  %1733 = vmatprep.subr.mxu0 0.0
  %1734 = vmatpush1.msra.mxu0 0.0
  %1735 = vmatprep.subr.mxu0 0.0
  %1736 = vmatpush1.msra.mxu0 0.0
  %1737 = vmatprep.mubr.f32.mxu0 0.0
  %1738 = vmatmul.mubr.f32.gmra.mrb[0].mxu0 %v1603
  %v1739 = vpop.f32.mrb[0].mxu0
  %v1740 = vadd.f32 0.0, %v1739
  %v1741 = vpop.f32.mrb[0].mxu0
  %v1742 = vadd.f32 0.0, %v1741
  %1743 = vdwg.mxu0
  %1744 = vmatprep.subr.mxu0 %v1612
  %1745 = vmatpush1.msra.mxu0 %v1611
  %1746 = vmatprep.subr.mxu0 %v1616
  %1747 = vmatpush1.msra.mxu0 %v1615
  %1748 = vmatprep.subr.mxu0 %v1620
  %1749 = vmatpush1.msra.mxu0 %v1619
  %1750 = vmatprep.subr.mxu0 %v1624
  %1751 = vmatpush1.msra.mxu0 %v1623
  %1752 = vmatprep.subr.mxu0 %v1628
  %1753 = vmatpush1.msra.mxu0 %v1627
  %1754 = vmatprep.subr.mxu0 %v1632
  %1755 = vmatpush1.msra.mxu0 %v1631
  %1756 = vmatprep.subr.mxu0 %v1636
  %1757 = vmatpush1.msra.mxu0 %v1635
  %1758 = vmatprep.subr.mxu0 %v1640
  %1759 = vmatpush1.msra.mxu0 %v1639
  %1760 = vmatprep.subr.mxu0 %v1644
  %1761 = vmatpush1.msra.mxu0 %v1643
  %1762 = vmatprep.subr.mxu0 %v1648
  %1763 = vmatpush1.msra.mxu0 %v1647
  %1764 = vmatprep.subr.mxu0 %v1652
  %1765 = vmatpush1.msra.mxu0 %v1651
  %1766 = vmatprep.subr.mxu0 %v1656
  %1767 = vmatpush1.msra.mxu0 %v1655
  %1768 = vmatprep.subr.mxu0 %v1660
  %1769 = vmatpush1.msra.mxu0 %v1659
  %1770 = vmatprep.subr.mxu0 %v1664
  %1771 = vmatpush1.msra.mxu0 %v1663
  %1772 = vmatprep.subr.mxu0 %v1668
  %1773 = vmatpush1.msra.mxu0 %v1667
  %1774 = vmatprep.subr.mxu0 %v1672
  %1775 = vmatpush1.msra.mxu0 %v1671
  %1776 = vmatprep.subr.mxu0 0.0
  %1777 = vmatpush1.msra.mxu0 0.0
  %1778 = vmatprep.subr.mxu0 0.0
  %1779 = vmatpush1.msra.mxu0 0.0
  %1780 = vmatprep.subr.mxu0 0.0
  %1781 = vmatpush1.msra.mxu0 0.0
  %1782 = vmatprep.subr.mxu0 0.0
  %1783 = vmatpush1.msra.mxu0 0.0
  %1784 = vmatprep.subr.mxu0 0.0
  %1785 = vmatpush1.msra.mxu0 0.0
  %1786 = vmatprep.subr.mxu0 0.0
  %1787 = vmatpush1.msra.mxu0 0.0
  %1788 = vmatprep.subr.mxu0 0.0
  %1789 = vmatpush1.msra.mxu0 0.0
  %1790 = vmatprep.subr.mxu0 0.0
  %1791 = vmatpush1.msra.mxu0 0.0
  %1792 = vmatprep.subr.mxu0 0.0
  %1793 = vmatpush1.msra.mxu0 0.0
  %1794 = vmatprep.subr.mxu0 0.0
  %1795 = vmatpush1.msra.mxu0 0.0
  %1796 = vmatprep.subr.mxu0 0.0
  %1797 = vmatpush1.msra.mxu0 0.0
  %1798 = vmatprep.subr.mxu0 0.0
  %1799 = vmatpush1.msra.mxu0 0.0
  %1800 = vmatprep.subr.mxu0 0.0
  %1801 = vmatpush1.msra.mxu0 0.0
  %1802 = vmatprep.subr.mxu0 0.0
  %1803 = vmatpush1.msra.mxu0 0.0
  %1804 = vmatprep.subr.mxu0 0.0
  %1805 = vmatpush1.msra.mxu0 0.0
  %1806 = vmatprep.subr.mxu0 0.0
  %1807 = vmatpush1.msra.mxu0 0.0
  %1808 = vmatprep.mubr.f32.mxu0 0.0
  %1809 = vmatmul.mubr.f32.gmra.mrb[0].mxu0 %v1603
  %v1810 = vpop.f32.mrb[0].mxu0
  %v1811 = vadd.f32 0.0, %v1810
  %v1812 = vpop.f32.mrb[0].mxu0
  %v1813 = vadd.f32 0.0, %v1812
  %1814 = vdwg.mxu0
  %v1815 = vadd.f32 %v1605, %v1740
  %v1816 = vadd.f32 %v1606, %v1742
  %v1817 = vadd.f32 %v1607, %v1811
  %v1818 = vadd.f32 %v1608, %v1813
  %v1819 = vxor.u32 %v1815, 2147483648
  %v1820 = vmul.f32 %v1819, 1.442695
  %v1821 = vpow.pop %v1820
  %v1822 = vadd.f32 %v1821, 1.0
  %v1823 = vrcp.pop %v1822
  %v1824 = vmul.f32 1.0, %v1823
  %v1825 = vxor.u32 %v1816, 2147483648
  %v1826 = vmul.f32 %v1825, 1.442695
  %v1827 = vpow.pop %v1826
  %v1828 = vadd.f32 %v1827, 1.0
  %v1829 = vrcp.pop %v1828
  %v1830 = vmul.f32 1.0, %v1829
  %v1831 = vtanh.pop %v1817
  %v1832 = vxor.u32 %v1818, 2147483648
  %v1833 = vmul.f32 %v1832, 1.442695
  %v1834 = vpow.pop %v1833
  %v1835 = vadd.f32 %v1834, 1.0
  %v1836 = vrcp.pop %v1835
  %v1837 = vmul.f32 1.0, %v1836
  %v1838 = vmul.f32 %v1830, %v1604
  %v1839 = vmul.f32 %v1824, %v1831
  %v1840 = vadd.f32 %v1838, %v1839
  %v1841 = vtanh.pop %v1840
  %v1842 = vmul.f32 %v1837, %v1841
  %1843 = vst [vmem:[#allocation2] sm:$0xff] %v1842
  %1844 = vst [vmem:[#allocation3] sm:$0xff] %v1840
  %1845 = vst [vmem:[#allocation4 + $0x28] sm:$0xff] %v1842
  %v1846 = vld [vmem:[#allocation2] sm:$0xff]
  %v1847 = vld [vmem:[#allocation3] sm:$0xff]
  %v1848 = vld [vmem:[#allocation5 + $0xc0] sm:$0xff]
  %v1849 = vld [vmem:[#allocation5 + $0xc8] sm:$0xff]
  %v1850 = vld [vmem:[#allocation5 + $0xd0] sm:$0xff]
  %v1851 = vld [vmem:[#allocation5 + $0xd8] sm:$0xff]
  %v1852 = vld [vmem:[%s2] sm:$0xff]
  %v1853 = vld [vmem:[%s2 + $0x8] sm:$0xff]
  %v1854 = vld [vmem:[%s2 + $0x10] sm:$0xff]
  %v1855 = vld [vmem:[%s2 + $0x18] sm:$0xff]
  %v1856 = vld [vmem:[%s2 + $0x20] sm:$0xff]
  %v1857 = vld [vmem:[%s2 + $0x28] sm:$0xff]
  %v1858 = vld [vmem:[%s2 + $0x30] sm:$0xff]
  %v1859 = vld [vmem:[%s2 + $0x38] sm:$0xff]
  %v1860 = vld [vmem:[%s2 + $0x40] sm:$0xff]
  %v1861 = vld [vmem:[%s2 + $0x48] sm:$0xff]
  %v1862 = vld [vmem:[%s2 + $0x50] sm:$0xff]
  %v1863 = vld [vmem:[%s2 + $0x58] sm:$0xff]
  %v1864 = vld [vmem:[%s2 + $0x60] sm:$0xff]
  %v1865 = vld [vmem:[%s2 + $0x68] sm:$0xff]
  %v1866 = vld [vmem:[%s2 + $0x70] sm:$0xff]
  %v1867 = vld [vmem:[%s2 + $0x78] sm:$0xff]
  %v1868 = vld [vmem:[%s2 + $0x80] sm:$0xff]
  %v1869 = vld [vmem:[%s2 + $0x88] sm:$0xff]
  %v1870 = vld [vmem:[%s2 + $0x90] sm:$0xff]
  %v1871 = vld [vmem:[%s2 + $0x98] sm:$0xff]
  %v1872 = vld [vmem:[%s2 + $0xa0] sm:$0xff]
  %v1873 = vld [vmem:[%s2 + $0xa8] sm:$0xff]
  %v1874 = vld [vmem:[%s2 + $0xb0] sm:$0xff]
  %v1875 = vld [vmem:[%s2 + $0xb8] sm:$0xff]
  %v1876 = vld [vmem:[%s2 + $0xc0] sm:$0xff]
  %v1877 = vld [vmem:[%s2 + $0xc8] sm:$0xff]
  %v1878 = vld [vmem:[%s2 + $0xd0] sm:$0xff]
  %v1879 = vld [vmem:[%s2 + $0xd8] sm:$0xff]
  %v1880 = vld [vmem:[%s2 + $0xe0] sm:$0xff]
  %v1881 = vld [vmem:[%s2 + $0xe8] sm:$0xff]
  %v1882 = vld [vmem:[%s2 + $0xf0] sm:$0xff]
  %v1883 = vld [vmem:[%s2 + $0xf8] sm:$0xff]
  %v1884 = vld [vmem:[%s2 + $0x100] sm:$0xff]
  %v1885 = vld [vmem:[%s2 + $0x108] sm:$0xff]
  %v1886 = vld [vmem:[%s2 + $0x110] sm:$0xff]
  %v1887 = vld [vmem:[%s2 + $0x118] sm:$0xff]
  %v1888 = vld [vmem:[%s2 + $0x120] sm:$0xff]
  %v1889 = vld [vmem:[%s2 + $0x128] sm:$0xff]
  %v1890 = vld [vmem:[%s2 + $0x130] sm:$0xff]
  %v1891 = vld [vmem:[%s2 + $0x138] sm:$0xff]
  %v1892 = vld [vmem:[%s2 + $0x140] sm:$0xff]
  %v1893 = vld [vmem:[%s2 + $0x148] sm:$0xff]
  %v1894 = vld [vmem:[%s2 + $0x150] sm:$0xff]
  %v1895 = vld [vmem:[%s2 + $0x158] sm:$0xff]
  %v1896 = vld [vmem:[%s2 + $0x160] sm:$0xff]
  %v1897 = vld [vmem:[%s2 + $0x168] sm:$0xff]
  %v1898 = vld [vmem:[%s2 + $0x170] sm:$0xff]
  %v1899 = vld [vmem:[%s2 + $0x178] sm:$0xff]
  %v1900 = vld [vmem:[%s2 + $0x180] sm:$0xff]
  %v1901 = vld [vmem:[%s2 + $0x188] sm:$0xff]
  %v1902 = vld [vmem:[%s2 + $0x190] sm:$0xff]
  %v1903 = vld [vmem:[%s2 + $0x198] sm:$0xff]
  %v1904 = vld [vmem:[%s2 + $0x1a0] sm:$0xff]
  %v1905 = vld [vmem:[%s2 + $0x1a8] sm:$0xff]
  %v1906 = vld [vmem:[%s2 + $0x1b0] sm:$0xff]
  %v1907 = vld [vmem:[%s2 + $0x1b8] sm:$0xff]
  %v1908 = vld [vmem:[%s2 + $0x1c0] sm:$0xff]
  %v1909 = vld [vmem:[%s2 + $0x1c8] sm:$0xff]
  %v1910 = vld [vmem:[%s2 + $0x1d0] sm:$0xff]
  %v1911 = vld [vmem:[%s2 + $0x1d8] sm:$0xff]
  %v1912 = vld [vmem:[%s2 + $0x1e0] sm:$0xff]
  %v1913 = vld [vmem:[%s2 + $0x1e8] sm:$0xff]
  %v1914 = vld [vmem:[%s2 + $0x1f0] sm:$0xff]
  %v1915 = vld [vmem:[%s2 + $0x1f8] sm:$0xff]
  %1916 = vmatprep.subr.mxu0 %v1853
  %1917 = vmatpush1.msra.mxu0 %v1852
  %1918 = vmatprep.subr.mxu0 %v1857
  %1919 = vmatpush1.msra.mxu0 %v1856
  %1920 = vmatprep.subr.mxu0 %v1861
  %1921 = vmatpush1.msra.mxu0 %v1860
  %1922 = vmatprep.subr.mxu0 %v1865
  %1923 = vmatpush1.msra.mxu0 %v1864
  %1924 = vmatprep.subr.mxu0 %v1869
  %1925 = vmatpush1.msra.mxu0 %v1868
  %1926 = vmatprep.subr.mxu0 %v1873
  %1927 = vmatpush1.msra.mxu0 %v1872
  %1928 = vmatprep.subr.mxu0 %v1877
  %1929 = vmatpush1.msra.mxu0 %v1876
  %1930 = vmatprep.subr.mxu0 %v1881
  %1931 = vmatpush1.msra.mxu0 %v1880
  %1932 = vmatprep.subr.mxu0 %v1885
  %1933 = vmatpush1.msra.mxu0 %v1884
  %1934 = vmatprep.subr.mxu0 %v1889
  %1935 = vmatpush1.msra.mxu0 %v1888
  %1936 = vmatprep.subr.mxu0 %v1893
  %1937 = vmatpush1.msra.mxu0 %v1892
  %1938 = vmatprep.subr.mxu0 %v1897
  %1939 = vmatpush1.msra.mxu0 %v1896
  %1940 = vmatprep.subr.mxu0 %v1901
  %1941 = vmatpush1.msra.mxu0 %v1900
  %1942 = vmatprep.subr.mxu0 %v1905
  %1943 = vmatpush1.msra.mxu0 %v1904
  %1944 = vmatprep.subr.mxu0 %v1909
  %1945 = vmatpush1.msra.mxu0 %v1908
  %1946 = vmatprep.subr.mxu0 %v1913
  %1947 = vmatpush1.msra.mxu0 %v1912
  %1948 = vmatprep.subr.mxu0 0.0
  %1949 = vmatpush1.msra.mxu0 0.0
  %1950 = vmatprep.subr.mxu0 0.0
  %1951 = vmatpush1.msra.mxu0 0.0
  %1952 = vmatprep.subr.mxu0 0.0
  %1953 = vmatpush1.msra.mxu0 0.0
  %1954 = vmatprep.subr.mxu0 0.0
  %1955 = vmatpush1.msra.mxu0 0.0
  %1956 = vmatprep.subr.mxu0 0.0
  %1957 = vmatpush1.msra.mxu0 0.0
  %1958 = vmatprep.subr.mxu0 0.0
  %1959 = vmatpush1.msra.mxu0 0.0
  %1960 = vmatprep.subr.mxu0 0.0
  %1961 = vmatpush1.msra.mxu0 0.0
  %1962 = vmatprep.subr.mxu0 0.0
  %1963 = vmatpush1.msra.mxu0 0.0
  %1964 = vmatprep.subr.mxu0 0.0
  %1965 = vmatpush1.msra.mxu0 0.0
  %1966 = vmatprep.subr.mxu0 0.0
  %1967 = vmatpush1.msra.mxu0 0.0
  %1968 = vmatprep.subr.mxu0 0.0
  %1969 = vmatpush1.msra.mxu0 0.0
  %1970 = vmatprep.subr.mxu0 0.0
  %1971 = vmatpush1.msra.mxu0 0.0
  %1972 = vmatprep.subr.mxu0 0.0
  %1973 = vmatpush1.msra.mxu0 0.0
  %1974 = vmatprep.subr.mxu0 0.0
  %1975 = vmatpush1.msra.mxu0 0.0
  %1976 = vmatprep.subr.mxu0 0.0
  %1977 = vmatpush1.msra.mxu0 0.0
  %1978 = vmatprep.subr.mxu0 0.0
  %1979 = vmatpush1.msra.mxu0 0.0
  %1980 = vmatprep.mubr.f32.mxu0 0.0
  %1981 = vmatmul.mubr.f32.gmra.mrb[0].mxu0 %v1846
  %v1982 = vpop.f32.mrb[0].mxu0
  %v1983 = vadd.f32 0.0, %v1982
  %v1984 = vpop.f32.mrb[0].mxu0
  %v1985 = vadd.f32 0.0, %v1984
  %1986 = vdwg.mxu0
  %1987 = vmatprep.subr.mxu0 %v1855
  %1988 = vmatpush1.msra.mxu0 %v1854
  %1989 = vmatprep.subr.mxu0 %v1859
  %1990 = vmatpush1.msra.mxu0 %v1858
  %1991 = vmatprep.subr.mxu0 %v1863
  %1992 = vmatpush1.msra.mxu0 %v1862
  %1993 = vmatprep.subr.mxu0 %v1867
  %1994 = vmatpush1.msra.mxu0 %v1866
  %1995 = vmatprep.subr.mxu0 %v1871
  %1996 = vmatpush1.msra.mxu0 %v1870
  %1997 = vmatprep.subr.mxu0 %v1875
  %1998 = vmatpush1.msra.mxu0 %v1874
  %1999 = vmatprep.subr.mxu0 %v1879
  %2000 = vmatpush1.msra.mxu0 %v1878
  %2001 = vmatprep.subr.mxu0 %v1883
  %2002 = vmatpush1.msra.mxu0 %v1882
  %2003 = vmatprep.subr.mxu0 %v1887
  %2004 = vmatpush1.msra.mxu0 %v1886
  %2005 = vmatprep.subr.mxu0 %v1891
  %2006 = vmatpush1.msra.mxu0 %v1890
  %2007 = vmatprep.subr.mxu0 %v1895
  %2008 = vmatpush1.msra.mxu0 %v1894
  %2009 = vmatprep.subr.mxu0 %v1899
  %2010 = vmatpush1.msra.mxu0 %v1898
  %2011 = vmatprep.subr.mxu0 %v1903
  %2012 = vmatpush1.msra.mxu0 %v1902
  %2013 = vmatprep.subr.mxu0 %v1907
  %2014 = vmatpush1.msra.mxu0 %v1906
  %2015 = vmatprep.subr.mxu0 %v1911
  %2016 = vmatpush1.msra.mxu0 %v1910
  %2017 = vmatprep.subr.mxu0 %v1915
  %2018 = vmatpush1.msra.mxu0 %v1914
  %2019 = vmatprep.subr.mxu0 0.0
  %2020 = vmatpush1.msra.mxu0 0.0
  %2021 = vmatprep.subr.mxu0 0.0
  %2022 = vmatpush1.msra.mxu0 0.0
  %2023 = vmatprep.subr.mxu0 0.0
  %2024 = vmatpush1.msra.mxu0 0.0
  %2025 = vmatprep.subr.mxu0 0.0
  %2026 = vmatpush1.msra.mxu0 0.0
  %2027 = vmatprep.subr.mxu0 0.0
  %2028 = vmatpush1.msra.mxu0 0.0
  %2029 = vmatprep.subr.mxu0 0.0
  %2030 = vmatpush1.msra.mxu0 0.0
  %2031 = vmatprep.subr.mxu0 0.0
  %2032 = vmatpush1.msra.mxu0 0.0
  %2033 = vmatprep.subr.mxu0 0.0
  %2034 = vmatpush1.msra.mxu0 0.0
  %2035 = vmatprep.subr.mxu0 0.0
  %2036 = vmatpush1.msra.mxu0 0.0
  %2037 = vmatprep.subr.mxu0 0.0
  %2038 = vmatpush1.msra.mxu0 0.0
  %2039 = vmatprep.subr.mxu0 0.0
  %2040 = vmatpush1.msra.mxu0 0.0
  %2041 = vmatprep.subr.mxu0 0.0
  %2042 = vmatpush1.msra.mxu0 0.0
  %2043 = vmatprep.subr.mxu0 0.0
  %2044 = vmatpush1.msra.mxu0 0.0
  %2045 = vmatprep.subr.mxu0 0.0
  %2046 = vmatpush1.msra.mxu0 0.0
  %2047 = vmatprep.subr.mxu0 0.0
  %2048 = vmatpush1.msra.mxu0 0.0
  %2049 = vmatprep.subr.mxu0 0.0
  %2050 = vmatpush1.msra.mxu0 0.0
  %2051 = vmatprep.mubr.f32.mxu0 0.0
  %2052 = vmatmul.mubr.f32.gmra.mrb[0].mxu0 %v1846
  %v2053 = vpop.f32.mrb[0].mxu0
  %v2054 = vadd.f32 0.0, %v2053
  %v2055 = vpop.f32.mrb[0].mxu0
  %v2056 = vadd.f32 0.0, %v2055
  %2057 = vdwg.mxu0
  %v2058 = vadd.f32 %v1848, %v1983
  %v2059 = vadd.f32 %v1849, %v1985
  %v2060 = vadd.f32 %v1850, %v2054
  %v2061 = vadd.f32 %v1851, %v2056
  %v2062 = vxor.u32 %v2058, 2147483648
  %v2063 = vmul.f32 %v2062, 1.442695
  %v2064 = vpow.pop %v2063
  %v2065 = vadd.f32 %v2064, 1.0
  %v2066 = vrcp.pop %v2065
  %v2067 = vmul.f32 1.0, %v2066
  %v2068 = vxor.u32 %v2059, 2147483648
  %v2069 = vmul.f32 %v2068, 1.442695
  %v2070 = vpow.pop %v2069
  %v2071 = vadd.f32 %v2070, 1.0
  %v2072 = vrcp.pop %v2071
  %v2073 = vmul.f32 1.0, %v2072
  %v2074 = vtanh.pop %v2060
  %v2075 = vxor.u32 %v2061, 2147483648
  %v2076 = vmul.f32 %v2075, 1.442695
  %v2077 = vpow.pop %v2076
  %v2078 = vadd.f32 %v2077, 1.0
  %v2079 = vrcp.pop %v2078
  %v2080 = vmul.f32 1.0, %v2079
  %v2081 = vmul.f32 %v2073, %v1847
  %v2082 = vmul.f32 %v2067, %v2074
  %v2083 = vadd.f32 %v2081, %v2082
  %v2084 = vtanh.pop %v2083
  %v2085 = vmul.f32 %v2080, %v2084
  %2086 = vst [vmem:[#allocation2] sm:$0xff] %v2085
  %2087 = vst [vmem:[#allocation3] sm:$0xff] %v2083
  %2088 = vst [vmem:[#allocation4 + $0x30] sm:$0xff] %v2085
  %v2089 = vld [vmem:[#allocation2] sm:$0xff]
  %v2090 = vld [vmem:[#allocation3] sm:$0xff]
  %v2091 = vld [vmem:[#allocation5 + $0xe0] sm:$0xff]
  %v2092 = vld [vmem:[#allocation5 + $0xe8] sm:$0xff]
  %v2093 = vld [vmem:[#allocation5 + $0xf0] sm:$0xff]
  %v2094 = vld [vmem:[#allocation5 + $0xf8] sm:$0xff]
  %v2095 = vld [vmem:[%s2] sm:$0xff]
  %v2096 = vld [vmem:[%s2 + $0x8] sm:$0xff]
  %v2097 = vld [vmem:[%s2 + $0x10] sm:$0xff]
  %v2098 = vld [vmem:[%s2 + $0x18] sm:$0xff]
  %v2099 = vld [vmem:[%s2 + $0x20] sm:$0xff]
  %v2100 = vld [vmem:[%s2 + $0x28] sm:$0xff]
  %v2101 = vld [vmem:[%s2 + $0x30] sm:$0xff]
  %v2102 = vld [vmem:[%s2 + $0x38] sm:$0xff]
  %v2103 = vld [vmem:[%s2 + $0x40] sm:$0xff]
  %v2104 = vld [vmem:[%s2 + $0x48] sm:$0xff]
  %v2105 = vld [vmem:[%s2 + $0x50] sm:$0xff]
  %v2106 = vld [vmem:[%s2 + $0x58] sm:$0xff]
  %v2107 = vld [vmem:[%s2 + $0x60] sm:$0xff]
  %v2108 = vld [vmem:[%s2 + $0x68] sm:$0xff]
  %v2109 = vld [vmem:[%s2 + $0x70] sm:$0xff]
  %v2110 = vld [vmem:[%s2 + $0x78] sm:$0xff]
  %v2111 = vld [vmem:[%s2 + $0x80] sm:$0xff]
  %v2112 = vld [vmem:[%s2 + $0x88] sm:$0xff]
  %v2113 = vld [vmem:[%s2 + $0x90] sm:$0xff]
  %v2114 = vld [vmem:[%s2 + $0x98] sm:$0xff]
  %v2115 = vld [vmem:[%s2 + $0xa0] sm:$0xff]
  %v2116 = vld [vmem:[%s2 + $0xa8] sm:$0xff]
  %v2117 = vld [vmem:[%s2 + $0xb0] sm:$0xff]
  %v2118 = vld [vmem:[%s2 + $0xb8] sm:$0xff]
  %v2119 = vld [vmem:[%s2 + $0xc0] sm:$0xff]
  %v2120 = vld [vmem:[%s2 + $0xc8] sm:$0xff]
  %v2121 = vld [vmem:[%s2 + $0xd0] sm:$0xff]
  %v2122 = vld [vmem:[%s2 + $0xd8] sm:$0xff]
  %v2123 = vld [vmem:[%s2 + $0xe0] sm:$0xff]
  %v2124 = vld [vmem:[%s2 + $0xe8] sm:$0xff]
  %v2125 = vld [vmem:[%s2 + $0xf0] sm:$0xff]
  %v2126 = vld [vmem:[%s2 + $0xf8] sm:$0xff]
  %v2127 = vld [vmem:[%s2 + $0x100] sm:$0xff]
  %v2128 = vld [vmem:[%s2 + $0x108] sm:$0xff]
  %v2129 = vld [vmem:[%s2 + $0x110] sm:$0xff]
  %v2130 = vld [vmem:[%s2 + $0x118] sm:$0xff]
  %v2131 = vld [vmem:[%s2 + $0x120] sm:$0xff]
  %v2132 = vld [vmem:[%s2 + $0x128] sm:$0xff]
  %v2133 = vld [vmem:[%s2 + $0x130] sm:$0xff]
  %v2134 = vld [vmem:[%s2 + $0x138] sm:$0xff]
  %v2135 = vld [vmem:[%s2 + $0x140] sm:$0xff]
  %v2136 = vld [vmem:[%s2 + $0x148] sm:$0xff]
  %v2137 = vld [vmem:[%s2 + $0x150] sm:$0xff]
  %v2138 = vld [vmem:[%s2 + $0x158] sm:$0xff]
  %v2139 = vld [vmem:[%s2 + $0x160] sm:$0xff]
  %v2140 = vld [vmem:[%s2 + $0x168] sm:$0xff]
  %v2141 = vld [vmem:[%s2 + $0x170] sm:$0xff]
  %v2142 = vld [vmem:[%s2 + $0x178] sm:$0xff]
  %v2143 = vld [vmem:[%s2 + $0x180] sm:$0xff]
  %v2144 = vld [vmem:[%s2 + $0x188] sm:$0xff]
  %v2145 = vld [vmem:[%s2 + $0x190] sm:$0xff]
  %v2146 = vld [vmem:[%s2 + $0x198] sm:$0xff]
  %v2147 = vld [vmem:[%s2 + $0x1a0] sm:$0xff]
  %v2148 = vld [vmem:[%s2 + $0x1a8] sm:$0xff]
  %v2149 = vld [vmem:[%s2 + $0x1b0] sm:$0xff]
  %v2150 = vld [vmem:[%s2 + $0x1b8] sm:$0xff]
  %v2151 = vld [vmem:[%s2 + $0x1c0] sm:$0xff]
  %v2152 = vld [vmem:[%s2 + $0x1c8] sm:$0xff]
  %v2153 = vld [vmem:[%s2 + $0x1d0] sm:$0xff]
  %v2154 = vld [vmem:[%s2 + $0x1d8] sm:$0xff]
  %v2155 = vld [vmem:[%s2 + $0x1e0] sm:$0xff]
  %v2156 = vld [vmem:[%s2 + $0x1e8] sm:$0xff]
  %v2157 = vld [vmem:[%s2 + $0x1f0] sm:$0xff]
  %v2158 = vld [vmem:[%s2 + $0x1f8] sm:$0xff]
  %2159 = vmatprep.subr.mxu0 %v2096
  %2160 = vmatpush1.msra.mxu0 %v2095
  %2161 = vmatprep.subr.mxu0 %v2100
  %2162 = vmatpush1.msra.mxu0 %v2099
  %2163 = vmatprep.subr.mxu0 %v2104
  %2164 = vmatpush1.msra.mxu0 %v2103
  %2165 = vmatprep.subr.mxu0 %v2108
  %2166 = vmatpush1.msra.mxu0 %v2107
  %2167 = vmatprep.subr.mxu0 %v2112
  %2168 = vmatpush1.msra.mxu0 %v2111
  %2169 = vmatprep.subr.mxu0 %v2116
  %2170 = vmatpush1.msra.mxu0 %v2115
  %2171 = vmatprep.subr.mxu0 %v2120
  %2172 = vmatpush1.msra.mxu0 %v2119
  %2173 = vmatprep.subr.mxu0 %v2124
  %2174 = vmatpush1.msra.mxu0 %v2123
  %2175 = vmatprep.subr.mxu0 %v2128
  %2176 = vmatpush1.msra.mxu0 %v2127
  %2177 = vmatprep.subr.mxu0 %v2132
  %2178 = vmatpush1.msra.mxu0 %v2131
  %2179 = vmatprep.subr.mxu0 %v2136
  %2180 = vmatpush1.msra.mxu0 %v2135
  %2181 = vmatprep.subr.mxu0 %v2140
  %2182 = vmatpush1.msra.mxu0 %v2139
  %2183 = vmatprep.subr.mxu0 %v2144
  %2184 = vmatpush1.msra.mxu0 %v2143
  %2185 = vmatprep.subr.mxu0 %v2148
  %2186 = vmatpush1.msra.mxu0 %v2147
  %2187 = vmatprep.subr.mxu0 %v2152
  %2188 = vmatpush1.msra.mxu0 %v2151
  %2189 = vmatprep.subr.mxu0 %v2156
  %2190 = vmatpush1.msra.mxu0 %v2155
  %2191 = vmatprep.subr.mxu0 0.0
  %2192 = vmatpush1.msra.mxu0 0.0
  %2193 = vmatprep.subr.mxu0 0.0
  %2194 = vmatpush1.msra.mxu0 0.0
  %2195 = vmatprep.subr.mxu0 0.0
  %2196 = vmatpush1.msra.mxu0 0.0
  %2197 = vmatprep.subr.mxu0 0.0
  %2198 = vmatpush1.msra.mxu0 0.0
  %2199 = vmatprep.subr.mxu0 0.0
  %2200 = vmatpush1.msra.mxu0 0.0
  %2201 = vmatprep.subr.mxu0 0.0
  %2202 = vmatpush1.msra.mxu0 0.0
  %2203 = vmatprep.subr.mxu0 0.0
  %2204 = vmatpush1.msra.mxu0 0.0
  %2205 = vmatprep.subr.mxu0 0.0
  %2206 = vmatpush1.msra.mxu0 0.0
  %2207 = vmatprep.subr.mxu0 0.0
  %2208 = vmatpush1.msra.mxu0 0.0
  %2209 = vmatprep.subr.mxu0 0.0
  %2210 = vmatpush1.msra.mxu0 0.0
  %2211 = vmatprep.subr.mxu0 0.0
  %2212 = vmatpush1.msra.mxu0 0.0
  %2213 = vmatprep.subr.mxu0 0.0
  %2214 = vmatpush1.msra.mxu0 0.0
  %2215 = vmatprep.subr.mxu0 0.0
  %2216 = vmatpush1.msra.mxu0 0.0
  %2217 = vmatprep.subr.mxu0 0.0
  %2218 = vmatpush1.msra.mxu0 0.0
  %2219 = vmatprep.subr.mxu0 0.0
  %2220 = vmatpush1.msra.mxu0 0.0
  %2221 = vmatprep.subr.mxu0 0.0
  %2222 = vmatpush1.msra.mxu0 0.0
  %2223 = vmatprep.mubr.f32.mxu0 0.0
  %2224 = vmatmul.mubr.f32.gmra.mrb[0].mxu0 %v2089
  %v2225 = vpop.f32.mrb[0].mxu0
  %v2226 = vadd.f32 0.0, %v2225
  %v2227 = vpop.f32.mrb[0].mxu0
  %v2228 = vadd.f32 0.0, %v2227
  %2229 = vdwg.mxu0
  %2230 = vmatprep.subr.mxu0 %v2098
  %2231 = vmatpush1.msra.mxu0 %v2097
  %2232 = vmatprep.subr.mxu0 %v2102
  %2233 = vmatpush1.msra.mxu0 %v2101
  %2234 = vmatprep.subr.mxu0 %v2106
  %2235 = vmatpush1.msra.mxu0 %v2105
  %2236 = vmatprep.subr.mxu0 %v2110
  %2237 = vmatpush1.msra.mxu0 %v2109
  %2238 = vmatprep.subr.mxu0 %v2114
  %2239 = vmatpush1.msra.mxu0 %v2113
  %2240 = vmatprep.subr.mxu0 %v2118
  %2241 = vmatpush1.msra.mxu0 %v2117
  %2242 = vmatprep.subr.mxu0 %v2122
  %2243 = vmatpush1.msra.mxu0 %v2121
  %2244 = vmatprep.subr.mxu0 %v2126
  %2245 = vmatpush1.msra.mxu0 %v2125
  %2246 = vmatprep.subr.mxu0 %v2130
  %2247 = vmatpush1.msra.mxu0 %v2129
  %2248 = vmatprep.subr.mxu0 %v2134
  %2249 = vmatpush1.msra.mxu0 %v2133
  %2250 = vmatprep.subr.mxu0 %v2138
  %2251 = vmatpush1.msra.mxu0 %v2137
  %2252 = vmatprep.subr.mxu0 %v2142
  %2253 = vmatpush1.msra.mxu0 %v2141
  %2254 = vmatprep.subr.mxu0 %v2146
  %2255 = vmatpush1.msra.mxu0 %v2145
  %2256 = vmatprep.subr.mxu0 %v2150
  %2257 = vmatpush1.msra.mxu0 %v2149
  %2258 = vmatprep.subr.mxu0 %v2154
  %2259 = vmatpush1.msra.mxu0 %v2153
  %2260 = vmatprep.subr.mxu0 %v2158
  %2261 = vmatpush1.msra.mxu0 %v2157
  %2262 = vmatprep.subr.mxu0 0.0
  %2263 = vmatpush1.msra.mxu0 0.0
  %2264 = vmatprep.subr.mxu0 0.0
  %2265 = vmatpush1.msra.mxu0 0.0
  %2266 = vmatprep.subr.mxu0 0.0
  %2267 = vmatpush1.msra.mxu0 0.0
  %2268 = vmatprep.subr.mxu0 0.0
  %2269 = vmatpush1.msra.mxu0 0.0
  %2270 = vmatprep.subr.mxu0 0.0
  %2271 = vmatpush1.msra.mxu0 0.0
  %2272 = vmatprep.subr.mxu0 0.0
  %2273 = vmatpush1.msra.mxu0 0.0
  %2274 = vmatprep.subr.mxu0 0.0
  %2275 = vmatpush1.msra.mxu0 0.0
  %2276 = vmatprep.subr.mxu0 0.0
  %2277 = vmatpush1.msra.mxu0 0.0
  %2278 = vmatprep.subr.mxu0 0.0
  %2279 = vmatpush1.msra.mxu0 0.0
  %2280 = vmatprep.subr.mxu0 0.0
  %2281 = vmatpush1.msra.mxu0 0.0
  %2282 = vmatprep.subr.mxu0 0.0
  %2283 = vmatpush1.msra.mxu0 0.0
  %2284 = vmatprep.subr.mxu0 0.0
  %2285 = vmatpush1.msra.mxu0 0.0
  %2286 = vmatprep.subr.mxu0 0.0
  %2287 = vmatpush1.msra.mxu0 0.0
  %2288 = vmatprep.subr.mxu0 0.0
  %2289 = vmatpush1.msra.mxu0 0.0
  %2290 = vmatprep.subr.mxu0 0.0
  %2291 = vmatpush1.msra.mxu0 0.0
  %2292 = vmatprep.subr.mxu0 0.0
  %2293 = vmatpush1.msra.mxu0 0.0
  %2294 = vmatprep.mubr.f32.mxu0 0.0
  %2295 = vmatmul.mubr.f32.gmra.mrb[0].mxu0 %v2089
  %v2296 = vpop.f32.mrb[0].mxu0
  %v2297 = vadd.f32 0.0, %v2296
  %v2298 = vpop.f32.mrb[0].mxu0
  %v2299 = vadd.f32 0.0, %v2298
  %2300 = vdwg.mxu0
  %v2301 = vadd.f32 %v2091, %v2226
  %v2302 = vadd.f32 %v2092, %v2228
  %v2303 = vadd.f32 %v2093, %v2297
  %v2304 = vadd.f32 %v2094, %v2299
  %v2305 = vxor.u32 %v2301, 2147483648
  %v2306 = vmul.f32 %v2305, 1.442695
  %v2307 = vpow.pop %v2306
  %v2308 = vadd.f32 %v2307, 1.0
  %v2309 = vrcp.pop %v2308
  %v2310 = vmul.f32 1.0, %v2309
  %v2311 = vxor.u32 %v2302, 2147483648
  %v2312 = vmul.f32 %v2311, 1.442695
  %v2313 = vpow.pop %v2312
  %v2314 = vadd.f32 %v2313, 1.0
  %v2315 = vrcp.pop %v2314
  %v2316 = vmul.f32 1.0, %v2315
  %v2317 = vtanh.pop %v2303
  %v2318 = vxor.u32 %v2304, 2147483648
  %v2319 = vmul.f32 %v2318, 1.442695
  %v2320 = vpow.pop %v2319
  %v2321 = vadd.f32 %v2320, 1.0
  %v2322 = vrcp.pop %v2321
  %v2323 = vmul.f32 1.0, %v2322
  %v2324 = vmul.f32 %v2316, %v2090
  %v2325 = vmul.f32 %v2310, %v2317
  %v2326 = vadd.f32 %v2324, %v2325
  %v2327 = vtanh.pop %v2326
  %v2328 = vmul.f32 %v2323, %v2327
  %2329 = vst [vmem:[#allocation2] sm:$0xff] %v2328
  %2330 = vst [vmem:[#allocation3] sm:$0xff] %v2326
  %2331 = vst [vmem:[#allocation4 + $0x38] sm:$0xff] %v2328
  %v2332 = vld [vmem:[#allocation4] sm:$0xff]
  %v2333 = vld [vmem:[#allocation4 + $0x8] sm:$0xff]
  %v2334 = vld [vmem:[#allocation4 + $0x10] sm:$0xff]
  %v2335 = vld [vmem:[#allocation4 + $0x18] sm:$0xff]
  %v2336 = vld [vmem:[#allocation4 + $0x20] sm:$0xff]
  %v2337 = vld [vmem:[#allocation4 + $0x28] sm:$0xff]
  %v2338 = vld [vmem:[#allocation4 + $0x30] sm:$0xff]
  %v2339 = vld [vmem:[#allocation4 + $0x38] sm:$0xff]
  %v2340 = vld [vmem:[%s4] sm:$0xff]
  %v2341 = vld [vmem:[%s4 + $0x8] sm:$0xff]
  %v2342 = vld [vmem:[%s4 + $0x10] sm:$0xff]
  %v2343 = vld [vmem:[%s4 + $0x18] sm:$0xff]
  %v2344 = vld [vmem:[%s4 + $0x20] sm:$0xff]
  %v2345 = vld [vmem:[%s4 + $0x28] sm:$0xff]
  %v2346 = vld [vmem:[%s4 + $0x30] sm:$0xff]
  %v2347 = vld [vmem:[%s4 + $0x38] sm:$0xff]
  %v2348 = vld [vmem:[%s4 + $0x40] sm:$0xff]
  %v2349 = vld [vmem:[%s4 + $0x48] sm:$0xff]
  %v2350 = vld [vmem:[%s4 + $0x50] sm:$0xff]
  %v2351 = vld [vmem:[%s4 + $0x58] sm:$0xff]
  %v2352 = vld [vmem:[%s4 + $0x60] sm:$0xff]
  %v2353 = vld [vmem:[%s4 + $0x68] sm:$0xff]
  %v2354 = vld [vmem:[%s4 + $0x70] sm:$0xff]
  %v2355 = vld [vmem:[%s4 + $0x78] sm:$0xff]
  %v2356 = vld [vmem:[%s4 + $0x80] sm:$0xff]
  %v2357 = vld [vmem:[%s4 + $0x88] sm:$0xff]
  %v2358 = vld [vmem:[%s4 + $0x90] sm:$0xff]
  %v2359 = vld [vmem:[%s4 + $0x98] sm:$0xff]
  %v2360 = vld [vmem:[%s4 + $0xa0] sm:$0xff]
  %v2361 = vld [vmem:[%s4 + $0xa8] sm:$0xff]
  %v2362 = vld [vmem:[%s4 + $0xb0] sm:$0xff]
  %v2363 = vld [vmem:[%s4 + $0xb8] sm:$0xff]
  %v2364 = vld [vmem:[%s4 + $0xc0] sm:$0xff]
  %v2365 = vld [vmem:[%s4 + $0xc8] sm:$0xff]
  %v2366 = vld [vmem:[%s4 + $0xd0] sm:$0xff]
  %v2367 = vld [vmem:[%s4 + $0xd8] sm:$0xff]
  %v2368 = vld [vmem:[%s4 + $0xe0] sm:$0xff]
  %v2369 = vld [vmem:[%s4 + $0xe8] sm:$0xff]
  %v2370 = vld [vmem:[%s4 + $0xf0] sm:$0xff]
  %v2371 = vld [vmem:[%s4 + $0xf8] sm:$0xff]
  %v2372 = vld [vmem:[%s4 + $0x100] sm:$0xff]
  %v2373 = vld [vmem:[%s4 + $0x108] sm:$0xff]
  %v2374 = vld [vmem:[%s4 + $0x110] sm:$0xff]
  %v2375 = vld [vmem:[%s4 + $0x118] sm:$0xff]
  %v2376 = vld [vmem:[%s4 + $0x120] sm:$0xff]
  %v2377 = vld [vmem:[%s4 + $0x128] sm:$0xff]
  %v2378 = vld [vmem:[%s4 + $0x130] sm:$0xff]
  %v2379 = vld [vmem:[%s4 + $0x138] sm:$0xff]
  %v2380 = vld [vmem:[%s4 + $0x140] sm:$0xff]
  %v2381 = vld [vmem:[%s4 + $0x148] sm:$0xff]
  %v2382 = vld [vmem:[%s4 + $0x150] sm:$0xff]
  %v2383 = vld [vmem:[%s4 + $0x158] sm:$0xff]
  %v2384 = vld [vmem:[%s4 + $0x160] sm:$0xff]
  %v2385 = vld [vmem:[%s4 + $0x168] sm:$0xff]
  %v2386 = vld [vmem:[%s4 + $0x170] sm:$0xff]
  %v2387 = vld [vmem:[%s4 + $0x178] sm:$0xff]
  %v2388 = vld [vmem:[%s4 + $0x180] sm:$0xff]
  %v2389 = vld [vmem:[%s4 + $0x188] sm:$0xff]
  %v2390 = vld [vmem:[%s4 + $0x190] sm:$0xff]
  %v2391 = vld [vmem:[%s4 + $0x198] sm:$0xff]
  %v2392 = vld [vmem:[%s4 + $0x1a0] sm:$0xff]
  %v2393 = vld [vmem:[%s4 + $0x1a8] sm:$0xff]
  %v2394 = vld [vmem:[%s4 + $0x1b0] sm:$0xff]
  %v2395 = vld [vmem:[%s4 + $0x1b8] sm:$0xff]
  %v2396 = vld [vmem:[%s4 + $0x1c0] sm:$0xff]
  %v2397 = vld [vmem:[%s4 + $0x1c8] sm:$0xff]
  %v2398 = vld [vmem:[%s4 + $0x1d0] sm:$0xff]
  %v2399 = vld [vmem:[%s4 + $0x1d8] sm:$0xff]
  %v2400 = vld [vmem:[%s4 + $0x1e0] sm:$0xff]
  %v2401 = vld [vmem:[%s4 + $0x1e8] sm:$0xff]
  %v2402 = vld [vmem:[%s4 + $0x1f0] sm:$0xff]
  %v2403 = vld [vmem:[%s4 + $0x1f8] sm:$0xff]
  %v2404 = vld [vmem:[%s6] sm:$0xf]
  %v2406 = vlaneseq
  %v2407 = vshrl.u32 %v2406, 7
  %v2408 = vsub.s32 0, %v2407
  %v2409 = vrot.slane %v2404, %v2408
  %v2410 = vlaneseq
  %v2411 = vshrl.u32 %v2410, 7
  %v2412 = vsub.s32 1, %v2411
  %v2413 = vrot.slane %v2404, %v2412
  %v2414 = vlaneseq
  %v2415 = vshrl.u32 %v2414, 7
  %v2416 = vsub.s32 2, %v2415
  %v2417 = vrot.slane %v2404, %v2416
  %v2418 = vlaneseq
  %v2419 = vshrl.u32 %v2418, 7
  %v2420 = vsub.s32 3, %v2419
  %v2421 = vrot.slane %v2404, %v2420
  %2426 = vmatprep.subr.mxu0 %v2341
  %2427 = vmatpush1.msra.mxu0 %v2340
  %2428 = vmatprep.subr.mxu0 %v2345
  %2429 = vmatpush1.msra.mxu0 %v2344
  %2430 = vmatprep.subr.mxu0 %v2349
  %2431 = vmatpush1.msra.mxu0 %v2348
  %2432 = vmatprep.subr.mxu0 %v2353
  %2433 = vmatpush1.msra.mxu0 %v2352
  %2434 = vmatprep.subr.mxu0 %v2357
  %2435 = vmatpush1.msra.mxu0 %v2356
  %2436 = vmatprep.subr.mxu0 %v2361
  %2437 = vmatpush1.msra.mxu0 %v2360
  %2438 = vmatprep.subr.mxu0 %v2365
  %2439 = vmatpush1.msra.mxu0 %v2364
  %2440 = vmatprep.subr.mxu0 %v2369
  %2441 = vmatpush1.msra.mxu0 %v2368
  %2442 = vmatprep.subr.mxu0 %v2373
  %2443 = vmatpush1.msra.mxu0 %v2372
  %2444 = vmatprep.subr.mxu0 %v2377
  %2445 = vmatpush1.msra.mxu0 %v2376
  %2446 = vmatprep.subr.mxu0 %v2381
  %2447 = vmatpush1.msra.mxu0 %v2380
  %2448 = vmatprep.subr.mxu0 %v2385
  %2449 = vmatpush1.msra.mxu0 %v2384
  %2450 = vmatprep.subr.mxu0 %v2389
  %2451 = vmatpush1.msra.mxu0 %v2388
  %2452 = vmatprep.subr.mxu0 %v2393
  %2453 = vmatpush1.msra.mxu0 %v2392
  %2454 = vmatprep.subr.mxu0 %v2397
  %2455 = vmatpush1.msra.mxu0 %v2396
  %2456 = vmatprep.subr.mxu0 %v2401
  %2457 = vmatpush1.msra.mxu0 %v2400
  %2458 = vmatprep.subr.mxu0 0.0
  %2459 = vmatpush1.msra.mxu0 0.0
  %2460 = vmatprep.subr.mxu0 0.0
  %2461 = vmatpush1.msra.mxu0 0.0
  %2462 = vmatprep.subr.mxu0 0.0
  %2463 = vmatpush1.msra.mxu0 0.0
  %2464 = vmatprep.subr.mxu0 0.0
  %2465 = vmatpush1.msra.mxu0 0.0
  %2466 = vmatprep.subr.mxu0 0.0
  %2467 = vmatpush1.msra.mxu0 0.0
  %2468 = vmatprep.subr.mxu0 0.0
  %2469 = vmatpush1.msra.mxu0 0.0
  %2470 = vmatprep.subr.mxu0 0.0
  %2471 = vmatpush1.msra.mxu0 0.0
  %2472 = vmatprep.subr.mxu0 0.0
  %2473 = vmatpush1.msra.mxu0 0.0
  %2474 = vmatprep.subr.mxu0 0.0
  %2475 = vmatpush1.msra.mxu0 0.0
  %2476 = vmatprep.subr.mxu0 0.0
  %2477 = vmatpush1.msra.mxu0 0.0
  %2478 = vmatprep.subr.mxu0 0.0
  %2479 = vmatpush1.msra.mxu0 0.0
  %2480 = vmatprep.subr.mxu0 0.0
  %2481 = vmatpush1.msra.mxu0 0.0
  %2482 = vmatprep.subr.mxu0 0.0
  %2483 = vmatpush1.msra.mxu0 0.0
  %2484 = vmatprep.subr.mxu0 0.0
  %2485 = vmatpush1.msra.mxu0 0.0
  %2486 = vmatprep.subr.mxu0 0.0
  %2487 = vmatpush1.msra.mxu0 0.0
  %2488 = vmatprep.subr.mxu0 0.0
  %2489 = vmatpush1.msra.mxu0 0.0
  %2490 = vmatprep.mubr.f32.mxu0 0.0
  %2491 = vmatmul.mubr.f32.gmra.mrb[0].mxu0 %v2332
  %v2492 = vpop.f32.mrb[0].mxu0
  %v2493 = vadd.f32 %v2409, %v2492
  %v2494 = vpop.f32.mrb[0].mxu0
  %v2495 = vadd.f32 %v2413, %v2494
  %2496 = vmatprep.mubr.f32.mxu0 0.0
  %2497 = vmatmul.mubr.f32.gmra.mrb[0].mxu0 %v2333
  %v2498 = vpop.f32.mrb[0].mxu0
  %v2499 = vadd.f32 %v2409, %v2498
  %v2500 = vpop.f32.mrb[0].mxu0
  %v2501 = vadd.f32 %v2413, %v2500
  %2502 = vmatprep.mubr.f32.mxu0 0.0
  %2503 = vmatmul.mubr.f32.gmra.mrb[0].mxu0 %v2334
  %v2504 = vpop.f32.mrb[0].mxu0
  %v2505 = vadd.f32 %v2409, %v2504
  %v2506 = vpop.f32.mrb[0].mxu0
  %v2507 = vadd.f32 %v2413, %v2506
  %2508 = vmatprep.mubr.f32.mxu0 0.0
  %2509 = vmatmul.mubr.f32.gmra.mrb[0].mxu0 %v2335
  %v2510 = vpop.f32.mrb[0].mxu0
  %v2511 = vadd.f32 %v2409, %v2510
  %v2512 = vpop.f32.mrb[0].mxu0
  %v2513 = vadd.f32 %v2413, %v2512
  %2514 = vmatprep.mubr.f32.mxu0 0.0
  %2515 = vmatmul.mubr.f32.gmra.mrb[0].mxu0 %v2336
  %v2516 = vpop.f32.mrb[0].mxu0
  %v2517 = vadd.f32 %v2409, %v2516
  %v2518 = vpop.f32.mrb[0].mxu0
  %v2519 = vadd.f32 %v2413, %v2518
  %2520 = vmatprep.mubr.f32.mxu0 0.0
  %2521 = vmatmul.mubr.f32.gmra.mrb[0].mxu0 %v2337
  %v2522 = vpop.f32.mrb[0].mxu0
  %v2523 = vadd.f32 %v2409, %v2522
  %v2524 = vpop.f32.mrb[0].mxu0
  %v2525 = vadd.f32 %v2413, %v2524
  %2526 = vmatprep.mubr.f32.mxu0 0.0
  %2527 = vmatmul.mubr.f32.gmra.mrb[0].mxu0 %v2338
  %v2528 = vpop.f32.mrb[0].mxu0
  %v2529 = vadd.f32 %v2409, %v2528
  %v2530 = vpop.f32.mrb[0].mxu0
  %v2531 = vadd.f32 %v2413, %v2530
  %2532 = vmatprep.mubr.f32.mxu0 0.0
  %2533 = vmatmul.mubr.f32.gmra.mrb[0].mxu0 %v2339
  %v2534 = vpop.f32.mrb[0].mxu0
  %v2535 = vadd.f32 %v2409, %v2534
  %v2536 = vpop.f32.mrb[0].mxu0
  %v2537 = vadd.f32 %v2413, %v2536
  %2538 = vdwg.mxu0
  %2539 = vmatprep.subr.mxu0 %v2343
  %2540 = vmatpush1.msra.mxu0 %v2342
  %2541 = vmatprep.subr.mxu0 %v2347
  %2542 = vmatpush1.msra.mxu0 %v2346
  %2543 = vmatprep.subr.mxu0 %v2351
  %2544 = vmatpush1.msra.mxu0 %v2350
  %2545 = vmatprep.subr.mxu0 %v2355
  %2546 = vmatpush1.msra.mxu0 %v2354
  %2547 = vmatprep.subr.mxu0 %v2359
  %2548 = vmatpush1.msra.mxu0 %v2358
  %2549 = vmatprep.subr.mxu0 %v2363
  %2550 = vmatpush1.msra.mxu0 %v2362
  %2551 = vmatprep.subr.mxu0 %v2367
  %2552 = vmatpush1.msra.mxu0 %v2366
  %2553 = vmatprep.subr.mxu0 %v2371
  %2554 = vmatpush1.msra.mxu0 %v2370
  %2555 = vmatprep.subr.mxu0 %v2375
  %2556 = vmatpush1.msra.mxu0 %v2374
  %2557 = vmatprep.subr.mxu0 %v2379
  %2558 = vmatpush1.msra.mxu0 %v2378
  %2559 = vmatprep.subr.mxu0 %v2383
  %2560 = vmatpush1.msra.mxu0 %v2382
  %2561 = vmatprep.subr.mxu0 %v2387
  %2562 = vmatpush1.msra.mxu0 %v2386
  %2563 = vmatprep.subr.mxu0 %v2391
  %2564 = vmatpush1.msra.mxu0 %v2390
  %2565 = vmatprep.subr.mxu0 %v2395
  %2566 = vmatpush1.msra.mxu0 %v2394
  %2567 = vmatprep.subr.mxu0 %v2399
  %2568 = vmatpush1.msra.mxu0 %v2398
  %2569 = vmatprep.subr.mxu0 %v2403
  %2570 = vmatpush1.msra.mxu0 %v2402
  %2571 = vmatprep.subr.mxu0 0.0
  %2572 = vmatpush1.msra.mxu0 0.0
  %2573 = vmatprep.subr.mxu0 0.0
  %2574 = vmatpush1.msra.mxu0 0.0
  %2575 = vmatprep.subr.mxu0 0.0
  %2576 = vmatpush1.msra.mxu0 0.0
  %2577 = vmatprep.subr.mxu0 0.0
  %2578 = vmatpush1.msra.mxu0 0.0
  %2579 = vmatprep.subr.mxu0 0.0
  %2580 = vmatpush1.msra.mxu0 0.0
  %2581 = vmatprep.subr.mxu0 0.0
  %2582 = vmatpush1.msra.mxu0 0.0
  %2583 = vmatprep.subr.mxu0 0.0
  %2584 = vmatpush1.msra.mxu0 0.0
  %2585 = vmatprep.subr.mxu0 0.0
  %2586 = vmatpush1.msra.mxu0 0.0
  %2587 = vmatprep.subr.mxu0 0.0
  %2588 = vmatpush1.msra.mxu0 0.0
  %2589 = vmatprep.subr.mxu0 0.0
  %2590 = vmatpush1.msra.mxu0 0.0
  %2591 = vmatprep.subr.mxu0 0.0
  %2592 = vmatpush1.msra.mxu0 0.0
  %2593 = vmatprep.subr.mxu0 0.0
  %2594 = vmatpush1.msra.mxu0 0.0
  %2595 = vmatprep.subr.mxu0 0.0
  %2596 = vmatpush1.msra.mxu0 0.0
  %2597 = vmatprep.subr.mxu0 0.0
  %2598 = vmatpush1.msra.mxu0 0.0
  %2599 = vmatprep.subr.mxu0 0.0
  %2600 = vmatpush1.msra.mxu0 0.0
  %2601 = vmatprep.subr.mxu0 0.0
  %2602 = vmatpush1.msra.mxu0 0.0
  %2603 = vmatprep.mubr.f32.mxu0 0.0
  %2604 = vmatmul.mubr.f32.gmra.mrb[0].mxu0 %v2332
  %v2605 = vpop.f32.mrb[0].mxu0
  %v2606 = vadd.f32 %v2417, %v2605
  %v2607 = vpop.f32.mrb[0].mxu0
  %v2608 = vadd.f32 %v2421, %v2607
  %2609 = vmatprep.mubr.f32.mxu0 0.0
  %2610 = vmatmul.mubr.f32.gmra.mrb[0].mxu0 %v2333
  %v2611 = vpop.f32.mrb[0].mxu0
  %v2612 = vadd.f32 %v2417, %v2611
  %v2613 = vpop.f32.mrb[0].mxu0
  %v2614 = vadd.f32 %v2421, %v2613
  %2615 = vmatprep.mubr.f32.mxu0 0.0
  %2616 = vmatmul.mubr.f32.gmra.mrb[0].mxu0 %v2334
  %v2617 = vpop.f32.mrb[0].mxu0
  %v2618 = vadd.f32 %v2417, %v2617
  %v2619 = vpop.f32.mrb[0].mxu0
  %v2620 = vadd.f32 %v2421, %v2619
  %2621 = vmatprep.mubr.f32.mxu0 0.0
  %2622 = vmatmul.mubr.f32.gmra.mrb[0].mxu0 %v2335
  %v2623 = vpop.f32.mrb[0].mxu0
  %v2624 = vadd.f32 %v2417, %v2623
  %v2625 = vpop.f32.mrb[0].mxu0
  %v2626 = vadd.f32 %v2421, %v2625
  %2627 = vmatprep.mubr.f32.mxu0 0.0
  %2628 = vmatmul.mubr.f32.gmra.mrb[0].mxu0 %v2336
  %v2629 = vpop.f32.mrb[0].mxu0
  %v2630 = vadd.f32 %v2417, %v2629
  %v2631 = vpop.f32.mrb[0].mxu0
  %v2632 = vadd.f32 %v2421, %v2631
  %2633 = vmatprep.mubr.f32.mxu0 0.0
  %2634 = vmatmul.mubr.f32.gmra.mrb[0].mxu0 %v2337
  %v2635 = vpop.f32.mrb[0].mxu0
  %v2636 = vadd.f32 %v2417, %v2635
  %v2637 = vpop.f32.mrb[0].mxu0
  %v2638 = vadd.f32 %v2421, %v2637
  %2639 = vmatprep.mubr.f32.mxu0 0.0
  %2640 = vmatmul.mubr.f32.gmra.mrb[0].mxu0 %v2338
  %v2641 = vpop.f32.mrb[0].mxu0
  %v2642 = vadd.f32 %v2417, %v2641
  %v2643 = vpop.f32.mrb[0].mxu0
  %v2644 = vadd.f32 %v2421, %v2643
  %2645 = vmatprep.mubr.f32.mxu0 0.0
  %2646 = vmatmul.mubr.f32.gmra.mrb[0].mxu0 %v2339
  %v2647 = vpop.f32.mrb[0].mxu0
  %v2648 = vadd.f32 %v2417, %v2647
  %v2649 = vpop.f32.mrb[0].mxu0
  %v2650 = vadd.f32 %v2421, %v2649
  %2651 = vdwg.mxu0
  %2652 = vst [vmem:[#allocation5] sm:$0xff] %v2493
  %2653 = vst [vmem:[#allocation5 + $0x8] sm:$0xff] %v2495
  %2654 = vst [vmem:[#allocation5 + $0x10] sm:$0xff] %v2606
  %2655 = vst [vmem:[#allocation5 + $0x18] sm:$0xff] %v2608
  %2656 = vst [vmem:[#allocation5 + $0x20] sm:$0xff] %v2499
  %2657 = vst [vmem:[#allocation5 + $0x28] sm:$0xff] %v2501
  %2658 = vst [vmem:[#allocation5 + $0x30] sm:$0xff] %v2612
  %2659 = vst [vmem:[#allocation5 + $0x38] sm:$0xff] %v2614
  %2660 = vst [vmem:[#allocation5 + $0x40] sm:$0xff] %v2505
  %2661 = vst [vmem:[#allocation5 + $0x48] sm:$0xff] %v2507
  %2662 = vst [vmem:[#allocation5 + $0x50] sm:$0xff] %v2618
  %2663 = vst [vmem:[#allocation5 + $0x58] sm:$0xff] %v2620
  %2664 = vst [vmem:[#allocation5 + $0x60] sm:$0xff] %v2511
  %2665 = vst [vmem:[#allocation5 + $0x68] sm:$0xff] %v2513
  %2666 = vst [vmem:[#allocation5 + $0x70] sm:$0xff] %v2624
  %2667 = vst [vmem:[#allocation5 + $0x78] sm:$0xff] %v2626
  %2668 = vst [vmem:[#allocation5 + $0x80] sm:$0xff] %v2517
  %2669 = vst [vmem:[#allocation5 + $0x88] sm:$0xff] %v2519
  %2670 = vst [vmem:[#allocation5 + $0x90] sm:$0xff] %v2630
  %2671 = vst [vmem:[#allocation5 + $0x98] sm:$0xff] %v2632
  %2672 = vst [vmem:[#allocation5 + $0xa0] sm:$0xff] %v2523
  %2673 = vst [vmem:[#allocation5 + $0xa8] sm:$0xff] %v2525
  %2674 = vst [vmem:[#allocation5 + $0xb0] sm:$0xff] %v2636
  %2675 = vst [vmem:[#allocation5 + $0xb8] sm:$0xff] %v2638
  %2676 = vst [vmem:[#allocation5 + $0xc0] sm:$0xff] %v2529
  %2677 = vst [vmem:[#allocation5 + $0xc8] sm:$0xff] %v2531
  %2678 = vst [vmem:[#allocation5 + $0xd0] sm:$0xff] %v2642
  %2679 = vst [vmem:[#allocation5 + $0xd8] sm:$0xff] %v2644
  %2680 = vst [vmem:[#allocation5 + $0xe0] sm:$0xff] %v2535
  %2681 = vst [vmem:[#allocation5 + $0xe8] sm:$0xff] %v2537
  %2682 = vst [vmem:[#allocation5 + $0xf0] sm:$0xff] %v2648
  %2683 = vst [vmem:[#allocation5 + $0xf8] sm:$0xff] %v2650
  %2684 = vst [vmem:[#allocation2] sm:$0xff] 0.0
  %2685 = vst [vmem:[#allocation3] sm:$0xff] 0.0
  %v2686 = vld [vmem:[#allocation2] sm:$0xff]
  %v2687 = vld [vmem:[#allocation3] sm:$0xff]
  %v2688 = vld [vmem:[#allocation5] sm:$0xff]
  %v2689 = vld [vmem:[#allocation5 + $0x8] sm:$0xff]
  %v2690 = vld [vmem:[#allocation5 + $0x10] sm:$0xff]
  %v2691 = vld [vmem:[#allocation5 + $0x18] sm:$0xff]
  %v2692 = vld [vmem:[%s5] sm:$0xff]
  %v2693 = vld [vmem:[%s5 + $0x8] sm:$0xff]
  %v2694 = vld [vmem:[%s5 + $0x10] sm:$0xff]
  %v2695 = vld [vmem:[%s5 + $0x18] sm:$0xff]
  %v2696 = vld [vmem:[%s5 + $0x20] sm:$0xff]
  %v2697 = vld [vmem:[%s5 + $0x28] sm:$0xff]
  %v2698 = vld [vmem:[%s5 + $0x30] sm:$0xff]
  %v2699 = vld [vmem:[%s5 + $0x38] sm:$0xff]
  %v2700 = vld [vmem:[%s5 + $0x40] sm:$0xff]
  %v2701 = vld [vmem:[%s5 + $0x48] sm:$0xff]
  %v2702 = vld [vmem:[%s5 + $0x50] sm:$0xff]
  %v2703 = vld [vmem:[%s5 + $0x58] sm:$0xff]
  %v2704 = vld [vmem:[%s5 + $0x60] sm:$0xff]
  %v2705 = vld [vmem:[%s5 + $0x68] sm:$0xff]
  %v2706 = vld [vmem:[%s5 + $0x70] sm:$0xff]
  %v2707 = vld [vmem:[%s5 + $0x78] sm:$0xff]
  %v2708 = vld [vmem:[%s5 + $0x80] sm:$0xff]
  %v2709 = vld [vmem:[%s5 + $0x88] sm:$0xff]
  %v2710 = vld [vmem:[%s5 + $0x90] sm:$0xff]
  %v2711 = vld [vmem:[%s5 + $0x98] sm:$0xff]
  %v2712 = vld [vmem:[%s5 + $0xa0] sm:$0xff]
  %v2713 = vld [vmem:[%s5 + $0xa8] sm:$0xff]
  %v2714 = vld [vmem:[%s5 + $0xb0] sm:$0xff]
  %v2715 = vld [vmem:[%s5 + $0xb8] sm:$0xff]
  %v2716 = vld [vmem:[%s5 + $0xc0] sm:$0xff]
  %v2717 = vld [vmem:[%s5 + $0xc8] sm:$0xff]
  %v2718 = vld [vmem:[%s5 + $0xd0] sm:$0xff]
  %v2719 = vld [vmem:[%s5 + $0xd8] sm:$0xff]
  %v2720 = vld [vmem:[%s5 + $0xe0] sm:$0xff]
  %v2721 = vld [vmem:[%s5 + $0xe8] sm:$0xff]
  %v2722 = vld [vmem:[%s5 + $0xf0] sm:$0xff]
  %v2723 = vld [vmem:[%s5 + $0xf8] sm:$0xff]
  %v2724 = vld [vmem:[%s5 + $0x100] sm:$0xff]
  %v2725 = vld [vmem:[%s5 + $0x108] sm:$0xff]
  %v2726 = vld [vmem:[%s5 + $0x110] sm:$0xff]
  %v2727 = vld [vmem:[%s5 + $0x118] sm:$0xff]
  %v2728 = vld [vmem:[%s5 + $0x120] sm:$0xff]
  %v2729 = vld [vmem:[%s5 + $0x128] sm:$0xff]
  %v2730 = vld [vmem:[%s5 + $0x130] sm:$0xff]
  %v2731 = vld [vmem:[%s5 + $0x138] sm:$0xff]
  %v2732 = vld [vmem:[%s5 + $0x140] sm:$0xff]
  %v2733 = vld [vmem:[%s5 + $0x148] sm:$0xff]
  %v2734 = vld [vmem:[%s5 + $0x150] sm:$0xff]
  %v2735 = vld [vmem:[%s5 + $0x158] sm:$0xff]
  %v2736 = vld [vmem:[%s5 + $0x160] sm:$0xff]
  %v2737 = vld [vmem:[%s5 + $0x168] sm:$0xff]
  %v2738 = vld [vmem:[%s5 + $0x170] sm:$0xff]
  %v2739 = vld [vmem:[%s5 + $0x178] sm:$0xff]
  %v2740 = vld [vmem:[%s5 + $0x180] sm:$0xff]
  %v2741 = vld [vmem:[%s5 + $0x188] sm:$0xff]
  %v2742 = vld [vmem:[%s5 + $0x190] sm:$0xff]
  %v2743 = vld [vmem:[%s5 + $0x198] sm:$0xff]
  %v2744 = vld [vmem:[%s5 + $0x1a0] sm:$0xff]
  %v2745 = vld [vmem:[%s5 + $0x1a8] sm:$0xff]
  %v2746 = vld [vmem:[%s5 + $0x1b0] sm:$0xff]
  %v2747 = vld [vmem:[%s5 + $0x1b8] sm:$0xff]
  %v2748 = vld [vmem:[%s5 + $0x1c0] sm:$0xff]
  %v2749 = vld [vmem:[%s5 + $0x1c8] sm:$0xff]
  %v2750 = vld [vmem:[%s5 + $0x1d0] sm:$0xff]
  %v2751 = vld [vmem:[%s5 + $0x1d8] sm:$0xff]
  %v2752 = vld [vmem:[%s5 + $0x1e0] sm:$0xff]
  %v2753 = vld [vmem:[%s5 + $0x1e8] sm:$0xff]
  %v2754 = vld [vmem:[%s5 + $0x1f0] sm:$0xff]
  %v2755 = vld [vmem:[%s5 + $0x1f8] sm:$0xff]
  %2756 = vmatprep.subr.mxu0 %v2693
  %2757 = vmatpush1.msra.mxu0 %v2692
  %2758 = vmatprep.subr.mxu0 %v2697
  %2759 = vmatpush1.msra.mxu0 %v2696
  %2760 = vmatprep.subr.mxu0 %v2701
  %2761 = vmatpush1.msra.mxu0 %v2700
  %2762 = vmatprep.subr.mxu0 %v2705
  %2763 = vmatpush1.msra.mxu0 %v2704
  %2764 = vmatprep.subr.mxu0 %v2709
  %2765 = vmatpush1.msra.mxu0 %v2708
  %2766 = vmatprep.subr.mxu0 %v2713
  %2767 = vmatpush1.msra.mxu0 %v2712
  %2768 = vmatprep.subr.mxu0 %v2717
  %2769 = vmatpush1.msra.mxu0 %v2716
  %2770 = vmatprep.subr.mxu0 %v2721
  %2771 = vmatpush1.msra.mxu0 %v2720
  %2772 = vmatprep.subr.mxu0 %v2725
  %2773 = vmatpush1.msra.mxu0 %v2724
  %2774 = vmatprep.subr.mxu0 %v2729
  %2775 = vmatpush1.msra.mxu0 %v2728
  %2776 = vmatprep.subr.mxu0 %v2733
  %2777 = vmatpush1.msra.mxu0 %v2732
  %2778 = vmatprep.subr.mxu0 %v2737
  %2779 = vmatpush1.msra.mxu0 %v2736
  %2780 = vmatprep.subr.mxu0 %v2741
  %2781 = vmatpush1.msra.mxu0 %v2740
  %2782 = vmatprep.subr.mxu0 %v2745
  %2783 = vmatpush1.msra.mxu0 %v2744
  %2784 = vmatprep.subr.mxu0 %v2749
  %2785 = vmatpush1.msra.mxu0 %v2748
  %2786 = vmatprep.subr.mxu0 %v2753
  %2787 = vmatpush1.msra.mxu0 %v2752
  %2788 = vmatprep.subr.mxu0 0.0
  %2789 = vmatpush1.msra.mxu0 0.0
  %2790 = vmatprep.subr.mxu0 0.0
  %2791 = vmatpush1.msra.mxu0 0.0
  %2792 = vmatprep.subr.mxu0 0.0
  %2793 = vmatpush1.msra.mxu0 0.0
  %2794 = vmatprep.subr.mxu0 0.0
  %2795 = vmatpush1.msra.mxu0 0.0
  %2796 = vmatprep.subr.mxu0 0.0
  %2797 = vmatpush1.msra.mxu0 0.0
  %2798 = vmatprep.subr.mxu0 0.0
  %2799 = vmatpush1.msra.mxu0 0.0
  %2800 = vmatprep.subr.mxu0 0.0
  %2801 = vmatpush1.msra.mxu0 0.0
  %2802 = vmatprep.subr.mxu0 0.0
  %2803 = vmatpush1.msra.mxu0 0.0
  %2804 = vmatprep.subr.mxu0 0.0
  %2805 = vmatpush1.msra.mxu0 0.0
  %2806 = vmatprep.subr.mxu0 0.0
  %2807 = vmatpush1.msra.mxu0 0.0
  %2808 = vmatprep.subr.mxu0 0.0
  %2809 = vmatpush1.msra.mxu0 0.0
  %2810 = vmatprep.subr.mxu0 0.0
  %2811 = vmatpush1.msra.mxu0 0.0
  %2812 = vmatprep.subr.mxu0 0.0
  %2813 = vmatpush1.msra.mxu0 0.0
  %2814 = vmatprep.subr.mxu0 0.0
  %2815 = vmatpush1.msra.mxu0 0.0
  %2816 = vmatprep.subr.mxu0 0.0
  %2817 = vmatpush1.msra.mxu0 0.0
  %2818 = vmatprep.subr.mxu0 0.0
  %2819 = vmatpush1.msra.mxu0 0.0
  %2820 = vmatprep.mubr.f32.mxu0 0.0
  %2821 = vmatmul.mubr.f32.gmra.mrb[0].mxu0 %v2686
  %v2822 = vpop.f32.mrb[0].mxu0
  %v2823 = vadd.f32 0.0, %v2822
  %v2824 = vpop.f32.mrb[0].mxu0
  %v2825 = vadd.f32 0.0, %v2824
  %2826 = vdwg.mxu0
  %2827 = vmatprep.subr.mxu0 %v2695
  %2828 = vmatpush1.msra.mxu0 %v2694
  %2829 = vmatprep.subr.mxu0 %v2699
  %2830 = vmatpush1.msra.mxu0 %v2698
  %2831 = vmatprep.subr.mxu0 %v2703
  %2832 = vmatpush1.msra.mxu0 %v2702
  %2833 = vmatprep.subr.mxu0 %v2707
  %2834 = vmatpush1.msra.mxu0 %v2706
  %2835 = vmatprep.subr.mxu0 %v2711
  %2836 = vmatpush1.msra.mxu0 %v2710
  %2837 = vmatprep.subr.mxu0 %v2715
  %2838 = vmatpush1.msra.mxu0 %v2714
  %2839 = vmatprep.subr.mxu0 %v2719
  %2840 = vmatpush1.msra.mxu0 %v2718
  %2841 = vmatprep.subr.mxu0 %v2723
  %2842 = vmatpush1.msra.mxu0 %v2722
  %2843 = vmatprep.subr.mxu0 %v2727
  %2844 = vmatpush1.msra.mxu0 %v2726
  %2845 = vmatprep.subr.mxu0 %v2731
  %2846 = vmatpush1.msra.mxu0 %v2730
  %2847 = vmatprep.subr.mxu0 %v2735
  %2848 = vmatpush1.msra.mxu0 %v2734
  %2849 = vmatprep.subr.mxu0 %v2739
  %2850 = vmatpush1.msra.mxu0 %v2738
  %2851 = vmatprep.subr.mxu0 %v2743
  %2852 = vmatpush1.msra.mxu0 %v2742
  %2853 = vmatprep.subr.mxu0 %v2747
  %2854 = vmatpush1.msra.mxu0 %v2746
  %2855 = vmatprep.subr.mxu0 %v2751
  %2856 = vmatpush1.msra.mxu0 %v2750
  %2857 = vmatprep.subr.mxu0 %v2755
  %2858 = vmatpush1.msra.mxu0 %v2754
  %2859 = vmatprep.subr.mxu0 0.0
  %2860 = vmatpush1.msra.mxu0 0.0
  %2861 = vmatprep.subr.mxu0 0.0
  %2862 = vmatpush1.msra.mxu0 0.0
  %2863 = vmatprep.subr.mxu0 0.0
  %2864 = vmatpush1.msra.mxu0 0.0
  %2865 = vmatprep.subr.mxu0 0.0
  %2866 = vmatpush1.msra.mxu0 0.0
  %2867 = vmatprep.subr.mxu0 0.0
  %2868 = vmatpush1.msra.mxu0 0.0
  %2869 = vmatprep.subr.mxu0 0.0
  %2870 = vmatpush1.msra.mxu0 0.0
  %2871 = vmatprep.subr.mxu0 0.0
  %2872 = vmatpush1.msra.mxu0 0.0
  %2873 = vmatprep.subr.mxu0 0.0
  %2874 = vmatpush1.msra.mxu0 0.0
  %2875 = vmatprep.subr.mxu0 0.0
  %2876 = vmatpush1.msra.mxu0 0.0
  %2877 = vmatprep.subr.mxu0 0.0
  %2878 = vmatpush1.msra.mxu0 0.0
  %2879 = vmatprep.subr.mxu0 0.0
  %2880 = vmatpush1.msra.mxu0 0.0
  %2881 = vmatprep.subr.mxu0 0.0
  %2882 = vmatpush1.msra.mxu0 0.0
  %2883 = vmatprep.subr.mxu0 0.0
  %2884 = vmatpush1.msra.mxu0 0.0
  %2885 = vmatprep.subr.mxu0 0.0
  %2886 = vmatpush1.msra.mxu0 0.0
  %2887 = vmatprep.subr.mxu0 0.0
  %2888 = vmatpush1.msra.mxu0 0.0
  %2889 = vmatprep.subr.mxu0 0.0
  %2890 = vmatpush1.msra.mxu0 0.0
  %2891 = vmatprep.mubr.f32.mxu0 0.0
  %2892 = vmatmul.mubr.f32.gmra.mrb[0].mxu0 %v2686
  %v2893 = vpop.f32.mrb[0].mxu0
  %v2894 = vadd.f32 0.0, %v2893
  %v2895 = vpop.f32.mrb[0].mxu0
  %v2896 = vadd.f32 0.0, %v2895
  %2897 = vdwg.mxu0
  %v2898 = vadd.f32 %v2688, %v2823
  %v2899 = vadd.f32 %v2689, %v2825
  %v2900 = vadd.f32 %v2690, %v2894
  %v2901 = vadd.f32 %v2691, %v2896
  %v2902 = vxor.u32 %v2898, 2147483648
  %v2903 = vmul.f32 %v2902, 1.442695
  %v2904 = vpow.pop %v2903
  %v2905 = vadd.f32 %v2904, 1.0
  %v2906 = vrcp.pop %v2905
  %v2907 = vmul.f32 1.0, %v2906
  %v2908 = vxor.u32 %v2899, 2147483648
  %v2909 = vmul.f32 %v2908, 1.442695
  %v2910 = vpow.pop %v2909
  %v2911 = vadd.f32 %v2910, 1.0
  %v2912 = vrcp.pop %v2911
  %v2913 = vmul.f32 1.0, %v2912
  %v2914 = vtanh.pop %v2900
  %v2915 = vxor.u32 %v2901, 2147483648
  %v2916 = vmul.f32 %v2915, 1.442695
  %v2917 = vpow.pop %v2916
  %v2918 = vadd.f32 %v2917, 1.0
  %v2919 = vrcp.pop %v2918
  %v2920 = vmul.f32 1.0, %v2919
  %v2921 = vmul.f32 %v2913, %v2687
  %v2922 = vmul.f32 %v2907, %v2914
  %v2923 = vadd.f32 %v2921, %v2922
  %v2924 = vtanh.pop %v2923
  %v2925 = vmul.f32 %v2920, %v2924
  %2926 = vst [vmem:[#allocation2] sm:$0xff] %v2925
  %2927 = vst [vmem:[#allocation3] sm:$0xff] %v2923
  %v2928 = vld [vmem:[#allocation2] sm:$0xff]
  %v2929 = vld [vmem:[#allocation3] sm:$0xff]
  %v2930 = vld [vmem:[#allocation5 + $0x20] sm:$0xff]
  %v2931 = vld [vmem:[#allocation5 + $0x28] sm:$0xff]
  %v2932 = vld [vmem:[#allocation5 + $0x30] sm:$0xff]
  %v2933 = vld [vmem:[#allocation5 + $0x38] sm:$0xff]
  %v2934 = vld [vmem:[%s5] sm:$0xff]
  %v2935 = vld [vmem:[%s5 + $0x8] sm:$0xff]
  %v2936 = vld [vmem:[%s5 + $0x10] sm:$0xff]
  %v2937 = vld [vmem:[%s5 + $0x18] sm:$0xff]
  %v2938 = vld [vmem:[%s5 + $0x20] sm:$0xff]
  %v2939 = vld [vmem:[%s5 + $0x28] sm:$0xff]
  %v2940 = vld [vmem:[%s5 + $0x30] sm:$0xff]
  %v2941 = vld [vmem:[%s5 + $0x38] sm:$0xff]
  %v2942 = vld [vmem:[%s5 + $0x40] sm:$0xff]
  %v2943 = vld [vmem:[%s5 + $0x48] sm:$0xff]
  %v2944 = vld [vmem:[%s5 + $0x50] sm:$0xff]
  %v2945 = vld [vmem:[%s5 + $0x58] sm:$0xff]
  %v2946 = vld [vmem:[%s5 + $0x60] sm:$0xff]
  %v2947 = vld [vmem:[%s5 + $0x68] sm:$0xff]
  %v2948 = vld [vmem:[%s5 + $0x70] sm:$0xff]
  %v2949 = vld [vmem:[%s5 + $0x78] sm:$0xff]
  %v2950 = vld [vmem:[%s5 + $0x80] sm:$0xff]
  %v2951 = vld [vmem:[%s5 + $0x88] sm:$0xff]
  %v2952 = vld [vmem:[%s5 + $0x90] sm:$0xff]
  %v2953 = vld [vmem:[%s5 + $0x98] sm:$0xff]
  %v2954 = vld [vmem:[%s5 + $0xa0] sm:$0xff]
  %v2955 = vld [vmem:[%s5 + $0xa8] sm:$0xff]
  %v2956 = vld [vmem:[%s5 + $0xb0] sm:$0xff]
  %v2957 = vld [vmem:[%s5 + $0xb8] sm:$0xff]
  %v2958 = vld [vmem:[%s5 + $0xc0] sm:$0xff]
  %v2959 = vld [vmem:[%s5 + $0xc8] sm:$0xff]
  %v2960 = vld [vmem:[%s5 + $0xd0] sm:$0xff]
  %v2961 = vld [vmem:[%s5 + $0xd8] sm:$0xff]
  %v2962 = vld [vmem:[%s5 + $0xe0] sm:$0xff]
  %v2963 = vld [vmem:[%s5 + $0xe8] sm:$0xff]
  %v2964 = vld [vmem:[%s5 + $0xf0] sm:$0xff]
  %v2965 = vld [vmem:[%s5 + $0xf8] sm:$0xff]
  %v2966 = vld [vmem:[%s5 + $0x100] sm:$0xff]
  %v2967 = vld [vmem:[%s5 + $0x108] sm:$0xff]
  %v2968 = vld [vmem:[%s5 + $0x110] sm:$0xff]
  %v2969 = vld [vmem:[%s5 + $0x118] sm:$0xff]
  %v2970 = vld [vmem:[%s5 + $0x120] sm:$0xff]
  %v2971 = vld [vmem:[%s5 + $0x128] sm:$0xff]
  %v2972 = vld [vmem:[%s5 + $0x130] sm:$0xff]
  %v2973 = vld [vmem:[%s5 + $0x138] sm:$0xff]
  %v2974 = vld [vmem:[%s5 + $0x140] sm:$0xff]
  %v2975 = vld [vmem:[%s5 + $0x148] sm:$0xff]
  %v2976 = vld [vmem:[%s5 + $0x150] sm:$0xff]
  %v2977 = vld [vmem:[%s5 + $0x158] sm:$0xff]
  %v2978 = vld [vmem:[%s5 + $0x160] sm:$0xff]
  %v2979 = vld [vmem:[%s5 + $0x168] sm:$0xff]
  %v2980 = vld [vmem:[%s5 + $0x170] sm:$0xff]
  %v2981 = vld [vmem:[%s5 + $0x178] sm:$0xff]
  %v2982 = vld [vmem:[%s5 + $0x180] sm:$0xff]
  %v2983 = vld [vmem:[%s5 + $0x188] sm:$0xff]
  %v2984 = vld [vmem:[%s5 + $0x190] sm:$0xff]
  %v2985 = vld [vmem:[%s5 + $0x198] sm:$0xff]
  %v2986 = vld [vmem:[%s5 + $0x1a0] sm:$0xff]
  %v2987 = vld [vmem:[%s5 + $0x1a8] sm:$0xff]
  %v2988 = vld [vmem:[%s5 + $0x1b0] sm:$0xff]
  %v2989 = vld [vmem:[%s5 + $0x1b8] sm:$0xff]
  %v2990 = vld [vmem:[%s5 + $0x1c0] sm:$0xff]
  %v2991 = vld [vmem:[%s5 + $0x1c8] sm:$0xff]
  %v2992 = vld [vmem:[%s5 + $0x1d0] sm:$0xff]
  %v2993 = vld [vmem:[%s5 + $0x1d8] sm:$0xff]
  %v2994 = vld [vmem:[%s5 + $0x1e0] sm:$0xff]
  %v2995 = vld [vmem:[%s5 + $0x1e8] sm:$0xff]
  %v2996 = vld [vmem:[%s5 + $0x1f0] sm:$0xff]
  %v2997 = vld [vmem:[%s5 + $0x1f8] sm:$0xff]
  %2998 = vmatprep.subr.mxu0 %v2935
  %2999 = vmatpush1.msra.mxu0 %v2934
  %3000 = vmatprep.subr.mxu0 %v2939
  %3001 = vmatpush1.msra.mxu0 %v2938
  %3002 = vmatprep.subr.mxu0 %v2943
  %3003 = vmatpush1.msra.mxu0 %v2942
  %3004 = vmatprep.subr.mxu0 %v2947
  %3005 = vmatpush1.msra.mxu0 %v2946
  %3006 = vmatprep.subr.mxu0 %v2951
  %3007 = vmatpush1.msra.mxu0 %v2950
  %3008 = vmatprep.subr.mxu0 %v2955
  %3009 = vmatpush1.msra.mxu0 %v2954
  %3010 = vmatprep.subr.mxu0 %v2959
  %3011 = vmatpush1.msra.mxu0 %v2958
  %3012 = vmatprep.subr.mxu0 %v2963
  %3013 = vmatpush1.msra.mxu0 %v2962
  %3014 = vmatprep.subr.mxu0 %v2967
  %3015 = vmatpush1.msra.mxu0 %v2966
  %3016 = vmatprep.subr.mxu0 %v2971
  %3017 = vmatpush1.msra.mxu0 %v2970
  %3018 = vmatprep.subr.mxu0 %v2975
  %3019 = vmatpush1.msra.mxu0 %v2974
  %3020 = vmatprep.subr.mxu0 %v2979
  %3021 = vmatpush1.msra.mxu0 %v2978
  %3022 = vmatprep.subr.mxu0 %v2983
  %3023 = vmatpush1.msra.mxu0 %v2982
  %3024 = vmatprep.subr.mxu0 %v2987
  %3025 = vmatpush1.msra.mxu0 %v2986
  %3026 = vmatprep.subr.mxu0 %v2991
  %3027 = vmatpush1.msra.mxu0 %v2990
  %3028 = vmatprep.subr.mxu0 %v2995
  %3029 = vmatpush1.msra.mxu0 %v2994
  %3030 = vmatprep.subr.mxu0 0.0
  %3031 = vmatpush1.msra.mxu0 0.0
  %3032 = vmatprep.subr.mxu0 0.0
  %3033 = vmatpush1.msra.mxu0 0.0
  %3034 = vmatprep.subr.mxu0 0.0
  %3035 = vmatpush1.msra.mxu0 0.0
  %3036 = vmatprep.subr.mxu0 0.0
  %3037 = vmatpush1.msra.mxu0 0.0
  %3038 = vmatprep.subr.mxu0 0.0
  %3039 = vmatpush1.msra.mxu0 0.0
  %3040 = vmatprep.subr.mxu0 0.0
  %3041 = vmatpush1.msra.mxu0 0.0
  %3042 = vmatprep.subr.mxu0 0.0
  %3043 = vmatpush1.msra.mxu0 0.0
  %3044 = vmatprep.subr.mxu0 0.0
  %3045 = vmatpush1.msra.mxu0 0.0
  %3046 = vmatprep.subr.mxu0 0.0
  %3047 = vmatpush1.msra.mxu0 0.0
  %3048 = vmatprep.subr.mxu0 0.0
  %3049 = vmatpush1.msra.mxu0 0.0
  %3050 = vmatprep.subr.mxu0 0.0
  %3051 = vmatpush1.msra.mxu0 0.0
  %3052 = vmatprep.subr.mxu0 0.0
  %3053 = vmatpush1.msra.mxu0 0.0
  %3054 = vmatprep.subr.mxu0 0.0
  %3055 = vmatpush1.msra.mxu0 0.0
  %3056 = vmatprep.subr.mxu0 0.0
  %3057 = vmatpush1.msra.mxu0 0.0
  %3058 = vmatprep.subr.mxu0 0.0
  %3059 = vmatpush1.msra.mxu0 0.0
  %3060 = vmatprep.subr.mxu0 0.0
  %3061 = vmatpush1.msra.mxu0 0.0
  %3062 = vmatprep.mubr.f32.mxu0 0.0
  %3063 = vmatmul.mubr.f32.gmra.mrb[0].mxu0 %v2928
  %v3064 = vpop.f32.mrb[0].mxu0
  %v3065 = vadd.f32 0.0, %v3064
  %v3066 = vpop.f32.mrb[0].mxu0
  %v3067 = vadd.f32 0.0, %v3066
  %3068 = vdwg.mxu0
  %3069 = vmatprep.subr.mxu0 %v2937
  %3070 = vmatpush1.msra.mxu0 %v2936
  %3071 = vmatprep.subr.mxu0 %v2941
  %3072 = vmatpush1.msra.mxu0 %v2940
  %3073 = vmatprep.subr.mxu0 %v2945
  %3074 = vmatpush1.msra.mxu0 %v2944
  %3075 = vmatprep.subr.mxu0 %v2949
  %3076 = vmatpush1.msra.mxu0 %v2948
  %3077 = vmatprep.subr.mxu0 %v2953
  %3078 = vmatpush1.msra.mxu0 %v2952
  %3079 = vmatprep.subr.mxu0 %v2957
  %3080 = vmatpush1.msra.mxu0 %v2956
  %3081 = vmatprep.subr.mxu0 %v2961
  %3082 = vmatpush1.msra.mxu0 %v2960
  %3083 = vmatprep.subr.mxu0 %v2965
  %3084 = vmatpush1.msra.mxu0 %v2964
  %3085 = vmatprep.subr.mxu0 %v2969
  %3086 = vmatpush1.msra.mxu0 %v2968
  %3087 = vmatprep.subr.mxu0 %v2973
  %3088 = vmatpush1.msra.mxu0 %v2972
  %3089 = vmatprep.subr.mxu0 %v2977
  %3090 = vmatpush1.msra.mxu0 %v2976
  %3091 = vmatprep.subr.mxu0 %v2981
  %3092 = vmatpush1.msra.mxu0 %v2980
  %3093 = vmatprep.subr.mxu0 %v2985
  %3094 = vmatpush1.msra.mxu0 %v2984
  %3095 = vmatprep.subr.mxu0 %v2989
  %3096 = vmatpush1.msra.mxu0 %v2988
  %3097 = vmatprep.subr.mxu0 %v2993
  %3098 = vmatpush1.msra.mxu0 %v2992
  %3099 = vmatprep.subr.mxu0 %v2997
  %3100 = vmatpush1.msra.mxu0 %v2996
  %3101 = vmatprep.subr.mxu0 0.0
  %3102 = vmatpush1.msra.mxu0 0.0
  %3103 = vmatprep.subr.mxu0 0.0
  %3104 = vmatpush1.msra.mxu0 0.0
  %3105 = vmatprep.subr.mxu0 0.0
  %3106 = vmatpush1.msra.mxu0 0.0
  %3107 = vmatprep.subr.mxu0 0.0
  %3108 = vmatpush1.msra.mxu0 0.0
  %3109 = vmatprep.subr.mxu0 0.0
  %3110 = vmatpush1.msra.mxu0 0.0
  %3111 = vmatprep.subr.mxu0 0.0
  %3112 = vmatpush1.msra.mxu0 0.0
  %3113 = vmatprep.subr.mxu0 0.0
  %3114 = vmatpush1.msra.mxu0 0.0
  %3115 = vmatprep.subr.mxu0 0.0
  %3116 = vmatpush1.msra.mxu0 0.0
  %3117 = vmatprep.subr.mxu0 0.0
  %3118 = vmatpush1.msra.mxu0 0.0
  %3119 = vmatprep.subr.mxu0 0.0
  %3120 = vmatpush1.msra.mxu0 0.0
  %3121 = vmatprep.subr.mxu0 0.0
  %3122 = vmatpush1.msra.mxu0 0.0
  %3123 = vmatprep.subr.mxu0 0.0
  %3124 = vmatpush1.msra.mxu0 0.0
  %3125 = vmatprep.subr.mxu0 0.0
  %3126 = vmatpush1.msra.mxu0 0.0
  %3127 = vmatprep.subr.mxu0 0.0
  %3128 = vmatpush1.msra.mxu0 0.0
  %3129 = vmatprep.subr.mxu0 0.0
  %3130 = vmatpush1.msra.mxu0 0.0
  %3131 = vmatprep.subr.mxu0 0.0
  %3132 = vmatpush1.msra.mxu0 0.0
  %3133 = vmatprep.mubr.f32.mxu0 0.0
  %3134 = vmatmul.mubr.f32.gmra.mrb[0].mxu0 %v2928
  %v3135 = vpop.f32.mrb[0].mxu0
  %v3136 = vadd.f32 0.0, %v3135
  %v3137 = vpop.f32.mrb[0].mxu0
  %v3138 = vadd.f32 0.0, %v3137
  %3139 = vdwg.mxu0
  %v3140 = vadd.f32 %v2930, %v3065
  %v3141 = vadd.f32 %v2931, %v3067
  %v3142 = vadd.f32 %v2932, %v3136
  %v3143 = vadd.f32 %v2933, %v3138
  %v3144 = vxor.u32 %v3140, 2147483648
  %v3145 = vmul.f32 %v3144, 1.442695
  %v3146 = vpow.pop %v3145
  %v3147 = vadd.f32 %v3146, 1.0
  %v3148 = vrcp.pop %v3147
  %v3149 = vmul.f32 1.0, %v3148
  %v3150 = vxor.u32 %v3141, 2147483648
  %v3151 = vmul.f32 %v3150, 1.442695
  %v3152 = vpow.pop %v3151
  %v3153 = vadd.f32 %v3152, 1.0
  %v3154 = vrcp.pop %v3153
  %v3155 = vmul.f32 1.0, %v3154
  %v3156 = vtanh.pop %v3142
  %v3157 = vxor.u32 %v3143, 2147483648
  %v3158 = vmul.f32 %v3157, 1.442695
  %v3159 = vpow.pop %v3158
  %v3160 = vadd.f32 %v3159, 1.0
  %v3161 = vrcp.pop %v3160
  %v3162 = vmul.f32 1.0, %v3161
  %v3163 = vmul.f32 %v3155, %v2929
  %v3164 = vmul.f32 %v3149, %v3156
  %v3165 = vadd.f32 %v3163, %v3164
  %v3166 = vtanh.pop %v3165
  %v3167 = vmul.f32 %v3162, %v3166
  %3168 = vst [vmem:[#allocation2] sm:$0xff] %v3167
  %3169 = vst [vmem:[#allocation3] sm:$0xff] %v3165
  %v3170 = vld [vmem:[#allocation2] sm:$0xff]
  %v3171 = vld [vmem:[#allocation3] sm:$0xff]
  %v3172 = vld [vmem:[#allocation5 + $0x40] sm:$0xff]
  %v3173 = vld [vmem:[#allocation5 + $0x48] sm:$0xff]
  %v3174 = vld [vmem:[#allocation5 + $0x50] sm:$0xff]
  %v3175 = vld [vmem:[#allocation5 + $0x58] sm:$0xff]
  %v3176 = vld [vmem:[%s5] sm:$0xff]
  %v3177 = vld [vmem:[%s5 + $0x8] sm:$0xff]
  %v3178 = vld [vmem:[%s5 + $0x10] sm:$0xff]
  %v3179 = vld [vmem:[%s5 + $0x18] sm:$0xff]
  %v3180 = vld [vmem:[%s5 + $0x20] sm:$0xff]
  %v3181 = vld [vmem:[%s5 + $0x28] sm:$0xff]
  %v3182 = vld [vmem:[%s5 + $0x30] sm:$0xff]
  %v3183 = vld [vmem:[%s5 + $0x38] sm:$0xff]
  %v3184 = vld [vmem:[%s5 + $0x40] sm:$0xff]
  %v3185 = vld [vmem:[%s5 + $0x48] sm:$0xff]
  %v3186 = vld [vmem:[%s5 + $0x50] sm:$0xff]
  %v3187 = vld [vmem:[%s5 + $0x58] sm:$0xff]
  %v3188 = vld [vmem:[%s5 + $0x60] sm:$0xff]
  %v3189 = vld [vmem:[%s5 + $0x68] sm:$0xff]
  %v3190 = vld [vmem:[%s5 + $0x70] sm:$0xff]
  %v3191 = vld [vmem:[%s5 + $0x78] sm:$0xff]
  %v3192 = vld [vmem:[%s5 + $0x80] sm:$0xff]
  %v3193 = vld [vmem:[%s5 + $0x88] sm:$0xff]
  %v3194 = vld [vmem:[%s5 + $0x90] sm:$0xff]
  %v3195 = vld [vmem:[%s5 + $0x98] sm:$0xff]
  %v3196 = vld [vmem:[%s5 + $0xa0] sm:$0xff]
  %v3197 = vld [vmem:[%s5 + $0xa8] sm:$0xff]
  %v3198 = vld [vmem:[%s5 + $0xb0] sm:$0xff]
  %v3199 = vld [vmem:[%s5 + $0xb8] sm:$0xff]
  %v3200 = vld [vmem:[%s5 + $0xc0] sm:$0xff]
  %v3201 = vld [vmem:[%s5 + $0xc8] sm:$0xff]
  %v3202 = vld [vmem:[%s5 + $0xd0] sm:$0xff]
  %v3203 = vld [vmem:[%s5 + $0xd8] sm:$0xff]
  %v3204 = vld [vmem:[%s5 + $0xe0] sm:$0xff]
  %v3205 = vld [vmem:[%s5 + $0xe8] sm:$0xff]
  %v3206 = vld [vmem:[%s5 + $0xf0] sm:$0xff]
  %v3207 = vld [vmem:[%s5 + $0xf8] sm:$0xff]
  %v3208 = vld [vmem:[%s5 + $0x100] sm:$0xff]
  %v3209 = vld [vmem:[%s5 + $0x108] sm:$0xff]
  %v3210 = vld [vmem:[%s5 + $0x110] sm:$0xff]
  %v3211 = vld [vmem:[%s5 + $0x118] sm:$0xff]
  %v3212 = vld [vmem:[%s5 + $0x120] sm:$0xff]
  %v3213 = vld [vmem:[%s5 + $0x128] sm:$0xff]
  %v3214 = vld [vmem:[%s5 + $0x130] sm:$0xff]
  %v3215 = vld [vmem:[%s5 + $0x138] sm:$0xff]
  %v3216 = vld [vmem:[%s5 + $0x140] sm:$0xff]
  %v3217 = vld [vmem:[%s5 + $0x148] sm:$0xff]
  %v3218 = vld [vmem:[%s5 + $0x150] sm:$0xff]
  %v3219 = vld [vmem:[%s5 + $0x158] sm:$0xff]
  %v3220 = vld [vmem:[%s5 + $0x160] sm:$0xff]
  %v3221 = vld [vmem:[%s5 + $0x168] sm:$0xff]
  %v3222 = vld [vmem:[%s5 + $0x170] sm:$0xff]
  %v3223 = vld [vmem:[%s5 + $0x178] sm:$0xff]
  %v3224 = vld [vmem:[%s5 + $0x180] sm:$0xff]
  %v3225 = vld [vmem:[%s5 + $0x188] sm:$0xff]
  %v3226 = vld [vmem:[%s5 + $0x190] sm:$0xff]
  %v3227 = vld [vmem:[%s5 + $0x198] sm:$0xff]
  %v3228 = vld [vmem:[%s5 + $0x1a0] sm:$0xff]
  %v3229 = vld [vmem:[%s5 + $0x1a8] sm:$0xff]
  %v3230 = vld [vmem:[%s5 + $0x1b0] sm:$0xff]
  %v3231 = vld [vmem:[%s5 + $0x1b8] sm:$0xff]
  %v3232 = vld [vmem:[%s5 + $0x1c0] sm:$0xff]
  %v3233 = vld [vmem:[%s5 + $0x1c8] sm:$0xff]
  %v3234 = vld [vmem:[%s5 + $0x1d0] sm:$0xff]
  %v3235 = vld [vmem:[%s5 + $0x1d8] sm:$0xff]
  %v3236 = vld [vmem:[%s5 + $0x1e0] sm:$0xff]
  %v3237 = vld [vmem:[%s5 + $0x1e8] sm:$0xff]
  %v3238 = vld [vmem:[%s5 + $0x1f0] sm:$0xff]
  %v3239 = vld [vmem:[%s5 + $0x1f8] sm:$0xff]
  %3240 = vmatprep.subr.mxu0 %v3177
  %3241 = vmatpush1.msra.mxu0 %v3176
  %3242 = vmatprep.subr.mxu0 %v3181
  %3243 = vmatpush1.msra.mxu0 %v3180
  %3244 = vmatprep.subr.mxu0 %v3185
  %3245 = vmatpush1.msra.mxu0 %v3184
  %3246 = vmatprep.subr.mxu0 %v3189
  %3247 = vmatpush1.msra.mxu0 %v3188
  %3248 = vmatprep.subr.mxu0 %v3193
  %3249 = vmatpush1.msra.mxu0 %v3192
  %3250 = vmatprep.subr.mxu0 %v3197
  %3251 = vmatpush1.msra.mxu0 %v3196
  %3252 = vmatprep.subr.mxu0 %v3201
  %3253 = vmatpush1.msra.mxu0 %v3200
  %3254 = vmatprep.subr.mxu0 %v3205
  %3255 = vmatpush1.msra.mxu0 %v3204
  %3256 = vmatprep.subr.mxu0 %v3209
  %3257 = vmatpush1.msra.mxu0 %v3208
  %3258 = vmatprep.subr.mxu0 %v3213
  %3259 = vmatpush1.msra.mxu0 %v3212
  %3260 = vmatprep.subr.mxu0 %v3217
  %3261 = vmatpush1.msra.mxu0 %v3216
  %3262 = vmatprep.subr.mxu0 %v3221
  %3263 = vmatpush1.msra.mxu0 %v3220
  %3264 = vmatprep.subr.mxu0 %v3225
  %3265 = vmatpush1.msra.mxu0 %v3224
  %3266 = vmatprep.subr.mxu0 %v3229
  %3267 = vmatpush1.msra.mxu0 %v3228
  %3268 = vmatprep.subr.mxu0 %v3233
  %3269 = vmatpush1.msra.mxu0 %v3232
  %3270 = vmatprep.subr.mxu0 %v3237
  %3271 = vmatpush1.msra.mxu0 %v3236
  %3272 = vmatprep.subr.mxu0 0.0
  %3273 = vmatpush1.msra.mxu0 0.0
  %3274 = vmatprep.subr.mxu0 0.0
  %3275 = vmatpush1.msra.mxu0 0.0
  %3276 = vmatprep.subr.mxu0 0.0
  %3277 = vmatpush1.msra.mxu0 0.0
  %3278 = vmatprep.subr.mxu0 0.0
  %3279 = vmatpush1.msra.mxu0 0.0
  %3280 = vmatprep.subr.mxu0 0.0
  %3281 = vmatpush1.msra.mxu0 0.0
  %3282 = vmatprep.subr.mxu0 0.0
  %3283 = vmatpush1.msra.mxu0 0.0
  %3284 = vmatprep.subr.mxu0 0.0
  %3285 = vmatpush1.msra.mxu0 0.0
  %3286 = vmatprep.subr.mxu0 0.0
  %3287 = vmatpush1.msra.mxu0 0.0
  %3288 = vmatprep.subr.mxu0 0.0
  %3289 = vmatpush1.msra.mxu0 0.0
  %3290 = vmatprep.subr.mxu0 0.0
  %3291 = vmatpush1.msra.mxu0 0.0
  %3292 = vmatprep.subr.mxu0 0.0
  %3293 = vmatpush1.msra.mxu0 0.0
  %3294 = vmatprep.subr.mxu0 0.0
  %3295 = vmatpush1.msra.mxu0 0.0
  %3296 = vmatprep.subr.mxu0 0.0
  %3297 = vmatpush1.msra.mxu0 0.0
  %3298 = vmatprep.subr.mxu0 0.0
  %3299 = vmatpush1.msra.mxu0 0.0
  %3300 = vmatprep.subr.mxu0 0.0
  %3301 = vmatpush1.msra.mxu0 0.0
  %3302 = vmatprep.subr.mxu0 0.0
  %3303 = vmatpush1.msra.mxu0 0.0
  %3304 = vmatprep.mubr.f32.mxu0 0.0
  %3305 = vmatmul.mubr.f32.gmra.mrb[0].mxu0 %v3170
  %v3306 = vpop.f32.mrb[0].mxu0
  %v3307 = vadd.f32 0.0, %v3306
  %v3308 = vpop.f32.mrb[0].mxu0
  %v3309 = vadd.f32 0.0, %v3308
  %3310 = vdwg.mxu0
  %3311 = vmatprep.subr.mxu0 %v3179
  %3312 = vmatpush1.msra.mxu0 %v3178
  %3313 = vmatprep.subr.mxu0 %v3183
  %3314 = vmatpush1.msra.mxu0 %v3182
  %3315 = vmatprep.subr.mxu0 %v3187
  %3316 = vmatpush1.msra.mxu0 %v3186
  %3317 = vmatprep.subr.mxu0 %v3191
  %3318 = vmatpush1.msra.mxu0 %v3190
  %3319 = vmatprep.subr.mxu0 %v3195
  %3320 = vmatpush1.msra.mxu0 %v3194
  %3321 = vmatprep.subr.mxu0 %v3199
  %3322 = vmatpush1.msra.mxu0 %v3198
  %3323 = vmatprep.subr.mxu0 %v3203
  %3324 = vmatpush1.msra.mxu0 %v3202
  %3325 = vmatprep.subr.mxu0 %v3207
  %3326 = vmatpush1.msra.mxu0 %v3206
  %3327 = vmatprep.subr.mxu0 %v3211
  %3328 = vmatpush1.msra.mxu0 %v3210
  %3329 = vmatprep.subr.mxu0 %v3215
  %3330 = vmatpush1.msra.mxu0 %v3214
  %3331 = vmatprep.subr.mxu0 %v3219
  %3332 = vmatpush1.msra.mxu0 %v3218
  %3333 = vmatprep.subr.mxu0 %v3223
  %3334 = vmatpush1.msra.mxu0 %v3222
  %3335 = vmatprep.subr.mxu0 %v3227
  %3336 = vmatpush1.msra.mxu0 %v3226
  %3337 = vmatprep.subr.mxu0 %v3231
  %3338 = vmatpush1.msra.mxu0 %v3230
  %3339 = vmatprep.subr.mxu0 %v3235
  %3340 = vmatpush1.msra.mxu0 %v3234
  %3341 = vmatprep.subr.mxu0 %v3239
  %3342 = vmatpush1.msra.mxu0 %v3238
  %3343 = vmatprep.subr.mxu0 0.0
  %3344 = vmatpush1.msra.mxu0 0.0
  %3345 = vmatprep.subr.mxu0 0.0
  %3346 = vmatpush1.msra.mxu0 0.0
  %3347 = vmatprep.subr.mxu0 0.0
  %3348 = vmatpush1.msra.mxu0 0.0
  %3349 = vmatprep.subr.mxu0 0.0
  %3350 = vmatpush1.msra.mxu0 0.0
  %3351 = vmatprep.subr.mxu0 0.0
  %3352 = vmatpush1.msra.mxu0 0.0
  %3353 = vmatprep.subr.mxu0 0.0
  %3354 = vmatpush1.msra.mxu0 0.0
  %3355 = vmatprep.subr.mxu0 0.0
  %3356 = vmatpush1.msra.mxu0 0.0
  %3357 = vmatprep.subr.mxu0 0.0
  %3358 = vmatpush1.msra.mxu0 0.0
  %3359 = vmatprep.subr.mxu0 0.0
  %3360 = vmatpush1.msra.mxu0 0.0
  %3361 = vmatprep.subr.mxu0 0.0
  %3362 = vmatpush1.msra.mxu0 0.0
  %3363 = vmatprep.subr.mxu0 0.0
  %3364 = vmatpush1.msra.mxu0 0.0
  %3365 = vmatprep.subr.mxu0 0.0
  %3366 = vmatpush1.msra.mxu0 0.0
  %3367 = vmatprep.subr.mxu0 0.0
  %3368 = vmatpush1.msra.mxu0 0.0
  %3369 = vmatprep.subr.mxu0 0.0
  %3370 = vmatpush1.msra.mxu0 0.0
  %3371 = vmatprep.subr.mxu0 0.0
  %3372 = vmatpush1.msra.mxu0 0.0
  %3373 = vmatprep.subr.mxu0 0.0
  %3374 = vmatpush1.msra.mxu0 0.0
  %3375 = vmatprep.mubr.f32.mxu0 0.0
  %3376 = vmatmul.mubr.f32.gmra.mrb[0].mxu0 %v3170
  %v3377 = vpop.f32.mrb[0].mxu0
  %v3378 = vadd.f32 0.0, %v3377
  %v3379 = vpop.f32.mrb[0].mxu0
  %v3380 = vadd.f32 0.0, %v3379
  %3381 = vdwg.mxu0
  %v3382 = vadd.f32 %v3172, %v3307
  %v3383 = vadd.f32 %v3173, %v3309
  %v3384 = vadd.f32 %v3174, %v3378
  %v3385 = vadd.f32 %v3175, %v3380
  %v3386 = vxor.u32 %v3382, 2147483648
  %v3387 = vmul.f32 %v3386, 1.442695
  %v3388 = vpow.pop %v3387
  %v3389 = vadd.f32 %v3388, 1.0
  %v3390 = vrcp.pop %v3389
  %v3391 = vmul.f32 1.0, %v3390
  %v3392 = vxor.u32 %v3383, 2147483648
  %v3393 = vmul.f32 %v3392, 1.442695
  %v3394 = vpow.pop %v3393
  %v3395 = vadd.f32 %v3394, 1.0
  %v3396 = vrcp.pop %v3395
  %v3397 = vmul.f32 1.0, %v3396
  %v3398 = vtanh.pop %v3384
  %v3399 = vxor.u32 %v3385, 2147483648
  %v3400 = vmul.f32 %v3399, 1.442695
  %v3401 = vpow.pop %v3400
  %v3402 = vadd.f32 %v3401, 1.0
  %v3403 = vrcp.pop %v3402
  %v3404 = vmul.f32 1.0, %v3403
  %v3405 = vmul.f32 %v3397, %v3171
  %v3406 = vmul.f32 %v3391, %v3398
  %v3407 = vadd.f32 %v3405, %v3406
  %v3408 = vtanh.pop %v3407
  %v3409 = vmul.f32 %v3404, %v3408
  %3410 = vst [vmem:[#allocation2] sm:$0xff] %v3409
  %3411 = vst [vmem:[#allocation3] sm:$0xff] %v3407
  %v3412 = vld [vmem:[#allocation2] sm:$0xff]
  %v3413 = vld [vmem:[#allocation3] sm:$0xff]
  %v3414 = vld [vmem:[#allocation5 + $0x60] sm:$0xff]
  %v3415 = vld [vmem:[#allocation5 + $0x68] sm:$0xff]
  %v3416 = vld [vmem:[#allocation5 + $0x70] sm:$0xff]
  %v3417 = vld [vmem:[#allocation5 + $0x78] sm:$0xff]
  %v3418 = vld [vmem:[%s5] sm:$0xff]
  %v3419 = vld [vmem:[%s5 + $0x8] sm:$0xff]
  %v3420 = vld [vmem:[%s5 + $0x10] sm:$0xff]
  %v3421 = vld [vmem:[%s5 + $0x18] sm:$0xff]
  %v3422 = vld [vmem:[%s5 + $0x20] sm:$0xff]
  %v3423 = vld [vmem:[%s5 + $0x28] sm:$0xff]
  %v3424 = vld [vmem:[%s5 + $0x30] sm:$0xff]
  %v3425 = vld [vmem:[%s5 + $0x38] sm:$0xff]
  %v3426 = vld [vmem:[%s5 + $0x40] sm:$0xff]
  %v3427 = vld [vmem:[%s5 + $0x48] sm:$0xff]
  %v3428 = vld [vmem:[%s5 + $0x50] sm:$0xff]
  %v3429 = vld [vmem:[%s5 + $0x58] sm:$0xff]
  %v3430 = vld [vmem:[%s5 + $0x60] sm:$0xff]
  %v3431 = vld [vmem:[%s5 + $0x68] sm:$0xff]
  %v3432 = vld [vmem:[%s5 + $0x70] sm:$0xff]
  %v3433 = vld [vmem:[%s5 + $0x78] sm:$0xff]
  %v3434 = vld [vmem:[%s5 + $0x80] sm:$0xff]
  %v3435 = vld [vmem:[%s5 + $0x88] sm:$0xff]
  %v3436 = vld [vmem:[%s5 + $0x90] sm:$0xff]
  %v3437 = vld [vmem:[%s5 + $0x98] sm:$0xff]
  %v3438 = vld [vmem:[%s5 + $0xa0] sm:$0xff]
  %v3439 = vld [vmem:[%s5 + $0xa8] sm:$0xff]
  %v3440 = vld [vmem:[%s5 + $0xb0] sm:$0xff]
  %v3441 = vld [vmem:[%s5 + $0xb8] sm:$0xff]
  %v3442 = vld [vmem:[%s5 + $0xc0] sm:$0xff]
  %v3443 = vld [vmem:[%s5 + $0xc8] sm:$0xff]
  %v3444 = vld [vmem:[%s5 + $0xd0] sm:$0xff]
  %v3445 = vld [vmem:[%s5 + $0xd8] sm:$0xff]
  %v3446 = vld [vmem:[%s5 + $0xe0] sm:$0xff]
  %v3447 = vld [vmem:[%s5 + $0xe8] sm:$0xff]
  %v3448 = vld [vmem:[%s5 + $0xf0] sm:$0xff]
  %v3449 = vld [vmem:[%s5 + $0xf8] sm:$0xff]
  %v3450 = vld [vmem:[%s5 + $0x100] sm:$0xff]
  %v3451 = vld [vmem:[%s5 + $0x108] sm:$0xff]
  %v3452 = vld [vmem:[%s5 + $0x110] sm:$0xff]
  %v3453 = vld [vmem:[%s5 + $0x118] sm:$0xff]
  %v3454 = vld [vmem:[%s5 + $0x120] sm:$0xff]
  %v3455 = vld [vmem:[%s5 + $0x128] sm:$0xff]
  %v3456 = vld [vmem:[%s5 + $0x130] sm:$0xff]
  %v3457 = vld [vmem:[%s5 + $0x138] sm:$0xff]
  %v3458 = vld [vmem:[%s5 + $0x140] sm:$0xff]
  %v3459 = vld [vmem:[%s5 + $0x148] sm:$0xff]
  %v3460 = vld [vmem:[%s5 + $0x150] sm:$0xff]
  %v3461 = vld [vmem:[%s5 + $0x158] sm:$0xff]
  %v3462 = vld [vmem:[%s5 + $0x160] sm:$0xff]
  %v3463 = vld [vmem:[%s5 + $0x168] sm:$0xff]
  %v3464 = vld [vmem:[%s5 + $0x170] sm:$0xff]
  %v3465 = vld [vmem:[%s5 + $0x178] sm:$0xff]
  %v3466 = vld [vmem:[%s5 + $0x180] sm:$0xff]
  %v3467 = vld [vmem:[%s5 + $0x188] sm:$0xff]
  %v3468 = vld [vmem:[%s5 + $0x190] sm:$0xff]
  %v3469 = vld [vmem:[%s5 + $0x198] sm:$0xff]
  %v3470 = vld [vmem:[%s5 + $0x1a0] sm:$0xff]
  %v3471 = vld [vmem:[%s5 + $0x1a8] sm:$0xff]
  %v3472 = vld [vmem:[%s5 + $0x1b0] sm:$0xff]
  %v3473 = vld [vmem:[%s5 + $0x1b8] sm:$0xff]
  %v3474 = vld [vmem:[%s5 + $0x1c0] sm:$0xff]
  %v3475 = vld [vmem:[%s5 + $0x1c8] sm:$0xff]
  %v3476 = vld [vmem:[%s5 + $0x1d0] sm:$0xff]
  %v3477 = vld [vmem:[%s5 + $0x1d8] sm:$0xff]
  %v3478 = vld [vmem:[%s5 + $0x1e0] sm:$0xff]
  %v3479 = vld [vmem:[%s5 + $0x1e8] sm:$0xff]
  %v3480 = vld [vmem:[%s5 + $0x1f0] sm:$0xff]
  %v3481 = vld [vmem:[%s5 + $0x1f8] sm:$0xff]
  %3482 = vmatprep.subr.mxu0 %v3419
  %3483 = vmatpush1.msra.mxu0 %v3418
  %3484 = vmatprep.subr.mxu0 %v3423
  %3485 = vmatpush1.msra.mxu0 %v3422
  %3486 = vmatprep.subr.mxu0 %v3427
  %3487 = vmatpush1.msra.mxu0 %v3426
  %3488 = vmatprep.subr.mxu0 %v3431
  %3489 = vmatpush1.msra.mxu0 %v3430
  %3490 = vmatprep.subr.mxu0 %v3435
  %3491 = vmatpush1.msra.mxu0 %v3434
  %3492 = vmatprep.subr.mxu0 %v3439
  %3493 = vmatpush1.msra.mxu0 %v3438
  %3494 = vmatprep.subr.mxu0 %v3443
  %3495 = vmatpush1.msra.mxu0 %v3442
  %3496 = vmatprep.subr.mxu0 %v3447
  %3497 = vmatpush1.msra.mxu0 %v3446
  %3498 = vmatprep.subr.mxu0 %v3451
  %3499 = vmatpush1.msra.mxu0 %v3450
  %3500 = vmatprep.subr.mxu0 %v3455
  %3501 = vmatpush1.msra.mxu0 %v3454
  %3502 = vmatprep.subr.mxu0 %v3459
  %3503 = vmatpush1.msra.mxu0 %v3458
  %3504 = vmatprep.subr.mxu0 %v3463
  %3505 = vmatpush1.msra.mxu0 %v3462
  %3506 = vmatprep.subr.mxu0 %v3467
  %3507 = vmatpush1.msra.mxu0 %v3466
  %3508 = vmatprep.subr.mxu0 %v3471
  %3509 = vmatpush1.msra.mxu0 %v3470
  %3510 = vmatprep.subr.mxu0 %v3475
  %3511 = vmatpush1.msra.mxu0 %v3474
  %3512 = vmatprep.subr.mxu0 %v3479
  %3513 = vmatpush1.msra.mxu0 %v3478
  %3514 = vmatprep.subr.mxu0 0.0
  %3515 = vmatpush1.msra.mxu0 0.0
  %3516 = vmatprep.subr.mxu0 0.0
  %3517 = vmatpush1.msra.mxu0 0.0
  %3518 = vmatprep.subr.mxu0 0.0
  %3519 = vmatpush1.msra.mxu0 0.0
  %3520 = vmatprep.subr.mxu0 0.0
  %3521 = vmatpush1.msra.mxu0 0.0
  %3522 = vmatprep.subr.mxu0 0.0
  %3523 = vmatpush1.msra.mxu0 0.0
  %3524 = vmatprep.subr.mxu0 0.0
  %3525 = vmatpush1.msra.mxu0 0.0
  %3526 = vmatprep.subr.mxu0 0.0
  %3527 = vmatpush1.msra.mxu0 0.0
  %3528 = vmatprep.subr.mxu0 0.0
  %3529 = vmatpush1.msra.mxu0 0.0
  %3530 = vmatprep.subr.mxu0 0.0
  %3531 = vmatpush1.msra.mxu0 0.0
  %3532 = vmatprep.subr.mxu0 0.0
  %3533 = vmatpush1.msra.mxu0 0.0
  %3534 = vmatprep.subr.mxu0 0.0
  %3535 = vmatpush1.msra.mxu0 0.0
  %3536 = vmatprep.subr.mxu0 0.0
  %3537 = vmatpush1.msra.mxu0 0.0
  %3538 = vmatprep.subr.mxu0 0.0
  %3539 = vmatpush1.msra.mxu0 0.0
  %3540 = vmatprep.subr.mxu0 0.0
  %3541 = vmatpush1.msra.mxu0 0.0
  %3542 = vmatprep.subr.mxu0 0.0
  %3543 = vmatpush1.msra.mxu0 0.0
  %3544 = vmatprep.subr.mxu0 0.0
  %3545 = vmatpush1.msra.mxu0 0.0
  %3546 = vmatprep.mubr.f32.mxu0 0.0
  %3547 = vmatmul.mubr.f32.gmra.mrb[0].mxu0 %v3412
  %v3548 = vpop.f32.mrb[0].mxu0
  %v3549 = vadd.f32 0.0, %v3548
  %v3550 = vpop.f32.mrb[0].mxu0
  %v3551 = vadd.f32 0.0, %v3550
  %3552 = vdwg.mxu0
  %3553 = vmatprep.subr.mxu0 %v3421
  %3554 = vmatpush1.msra.mxu0 %v3420
  %3555 = vmatprep.subr.mxu0 %v3425
  %3556 = vmatpush1.msra.mxu0 %v3424
  %3557 = vmatprep.subr.mxu0 %v3429
  %3558 = vmatpush1.msra.mxu0 %v3428
  %3559 = vmatprep.subr.mxu0 %v3433
  %3560 = vmatpush1.msra.mxu0 %v3432
  %3561 = vmatprep.subr.mxu0 %v3437
  %3562 = vmatpush1.msra.mxu0 %v3436
  %3563 = vmatprep.subr.mxu0 %v3441
  %3564 = vmatpush1.msra.mxu0 %v3440
  %3565 = vmatprep.subr.mxu0 %v3445
  %3566 = vmatpush1.msra.mxu0 %v3444
  %3567 = vmatprep.subr.mxu0 %v3449
  %3568 = vmatpush1.msra.mxu0 %v3448
  %3569 = vmatprep.subr.mxu0 %v3453
  %3570 = vmatpush1.msra.mxu0 %v3452
  %3571 = vmatprep.subr.mxu0 %v3457
  %3572 = vmatpush1.msra.mxu0 %v3456
  %3573 = vmatprep.subr.mxu0 %v3461
  %3574 = vmatpush1.msra.mxu0 %v3460
  %3575 = vmatprep.subr.mxu0 %v3465
  %3576 = vmatpush1.msra.mxu0 %v3464
  %3577 = vmatprep.subr.mxu0 %v3469
  %3578 = vmatpush1.msra.mxu0 %v3468
  %3579 = vmatprep.subr.mxu0 %v3473
  %3580 = vmatpush1.msra.mxu0 %v3472
  %3581 = vmatprep.subr.mxu0 %v3477
  %3582 = vmatpush1.msra.mxu0 %v3476
  %3583 = vmatprep.subr.mxu0 %v3481
  %3584 = vmatpush1.msra.mxu0 %v3480
  %3585 = vmatprep.subr.mxu0 0.0
  %3586 = vmatpush1.msra.mxu0 0.0
  %3587 = vmatprep.subr.mxu0 0.0
  %3588 = vmatpush1.msra.mxu0 0.0
  %3589 = vmatprep.subr.mxu0 0.0
  %3590 = vmatpush1.msra.mxu0 0.0
  %3591 = vmatprep.subr.mxu0 0.0
  %3592 = vmatpush1.msra.mxu0 0.0
  %3593 = vmatprep.subr.mxu0 0.0
  %3594 = vmatpush1.msra.mxu0 0.0
  %3595 = vmatprep.subr.mxu0 0.0
  %3596 = vmatpush1.msra.mxu0 0.0
  %3597 = vmatprep.subr.mxu0 0.0
  %3598 = vmatpush1.msra.mxu0 0.0
  %3599 = vmatprep.subr.mxu0 0.0
  %3600 = vmatpush1.msra.mxu0 0.0
  %3601 = vmatprep.subr.mxu0 0.0
  %3602 = vmatpush1.msra.mxu0 0.0
  %3603 = vmatprep.subr.mxu0 0.0
  %3604 = vmatpush1.msra.mxu0 0.0
  %3605 = vmatprep.subr.mxu0 0.0
  %3606 = vmatpush1.msra.mxu0 0.0
  %3607 = vmatprep.subr.mxu0 0.0
  %3608 = vmatpush1.msra.mxu0 0.0
  %3609 = vmatprep.subr.mxu0 0.0
  %3610 = vmatpush1.msra.mxu0 0.0
  %3611 = vmatprep.subr.mxu0 0.0
  %3612 = vmatpush1.msra.mxu0 0.0
  %3613 = vmatprep.subr.mxu0 0.0
  %3614 = vmatpush1.msra.mxu0 0.0
  %3615 = vmatprep.subr.mxu0 0.0
  %3616 = vmatpush1.msra.mxu0 0.0
  %3617 = vmatprep.mubr.f32.mxu0 0.0
  %3618 = vmatmul.mubr.f32.gmra.mrb[0].mxu0 %v3412
  %v3619 = vpop.f32.mrb[0].mxu0
  %v3620 = vadd.f32 0.0, %v3619
  %v3621 = vpop.f32.mrb[0].mxu0
  %v3622 = vadd.f32 0.0, %v3621
  %3623 = vdwg.mxu0
  %v3624 = vadd.f32 %v3414, %v3549
  %v3625 = vadd.f32 %v3415, %v3551
  %v3626 = vadd.f32 %v3416, %v3620
  %v3627 = vadd.f32 %v3417, %v3622
  %v3628 = vxor.u32 %v3624, 2147483648
  %v3629 = vmul.f32 %v3628, 1.442695
  %v3630 = vpow.pop %v3629
  %v3631 = vadd.f32 %v3630, 1.0
  %v3632 = vrcp.pop %v3631
  %v3633 = vmul.f32 1.0, %v3632
  %v3634 = vxor.u32 %v3625, 2147483648
  %v3635 = vmul.f32 %v3634, 1.442695
  %v3636 = vpow.pop %v3635
  %v3637 = vadd.f32 %v3636, 1.0
  %v3638 = vrcp.pop %v3637
  %v3639 = vmul.f32 1.0, %v3638
  %v3640 = vtanh.pop %v3626
  %v3641 = vxor.u32 %v3627, 2147483648
  %v3642 = vmul.f32 %v3641, 1.442695
  %v3643 = vpow.pop %v3642
  %v3644 = vadd.f32 %v3643, 1.0
  %v3645 = vrcp.pop %v3644
  %v3646 = vmul.f32 1.0, %v3645
  %v3647 = vmul.f32 %v3639, %v3413
  %v3648 = vmul.f32 %v3633, %v3640
  %v3649 = vadd.f32 %v3647, %v3648
  %v3650 = vtanh.pop %v3649
  %v3651 = vmul.f32 %v3646, %v3650
  %3652 = vst [vmem:[#allocation2] sm:$0xff] %v3651
  %3653 = vst [vmem:[#allocation3] sm:$0xff] %v3649
  %v3654 = vld [vmem:[#allocation2] sm:$0xff]
  %v3655 = vld [vmem:[#allocation3] sm:$0xff]
  %v3656 = vld [vmem:[#allocation5 + $0x80] sm:$0xff]
  %v3657 = vld [vmem:[#allocation5 + $0x88] sm:$0xff]
  %v3658 = vld [vmem:[#allocation5 + $0x90] sm:$0xff]
  %v3659 = vld [vmem:[#allocation5 + $0x98] sm:$0xff]
  %v3660 = vld [vmem:[%s5] sm:$0xff]
  %v3661 = vld [vmem:[%s5 + $0x8] sm:$0xff]
  %v3662 = vld [vmem:[%s5 + $0x10] sm:$0xff]
  %v3663 = vld [vmem:[%s5 + $0x18] sm:$0xff]
  %v3664 = vld [vmem:[%s5 + $0x20] sm:$0xff]
  %v3665 = vld [vmem:[%s5 + $0x28] sm:$0xff]
  %v3666 = vld [vmem:[%s5 + $0x30] sm:$0xff]
  %v3667 = vld [vmem:[%s5 + $0x38] sm:$0xff]
  %v3668 = vld [vmem:[%s5 + $0x40] sm:$0xff]
  %v3669 = vld [vmem:[%s5 + $0x48] sm:$0xff]
  %v3670 = vld [vmem:[%s5 + $0x50] sm:$0xff]
  %v3671 = vld [vmem:[%s5 + $0x58] sm:$0xff]
  %v3672 = vld [vmem:[%s5 + $0x60] sm:$0xff]
  %v3673 = vld [vmem:[%s5 + $0x68] sm:$0xff]
  %v3674 = vld [vmem:[%s5 + $0x70] sm:$0xff]
  %v3675 = vld [vmem:[%s5 + $0x78] sm:$0xff]
  %v3676 = vld [vmem:[%s5 + $0x80] sm:$0xff]
  %v3677 = vld [vmem:[%s5 + $0x88] sm:$0xff]
  %v3678 = vld [vmem:[%s5 + $0x90] sm:$0xff]
  %v3679 = vld [vmem:[%s5 + $0x98] sm:$0xff]
  %v3680 = vld [vmem:[%s5 + $0xa0] sm:$0xff]
  %v3681 = vld [vmem:[%s5 + $0xa8] sm:$0xff]
  %v3682 = vld [vmem:[%s5 + $0xb0] sm:$0xff]
  %v3683 = vld [vmem:[%s5 + $0xb8] sm:$0xff]
  %v3684 = vld [vmem:[%s5 + $0xc0] sm:$0xff]
  %v3685 = vld [vmem:[%s5 + $0xc8] sm:$0xff]
  %v3686 = vld [vmem:[%s5 + $0xd0] sm:$0xff]
  %v3687 = vld [vmem:[%s5 + $0xd8] sm:$0xff]
  %v3688 = vld [vmem:[%s5 + $0xe0] sm:$0xff]
  %v3689 = vld [vmem:[%s5 + $0xe8] sm:$0xff]
  %v3690 = vld [vmem:[%s5 + $0xf0] sm:$0xff]
  %v3691 = vld [vmem:[%s5 + $0xf8] sm:$0xff]
  %v3692 = vld [vmem:[%s5 + $0x100] sm:$0xff]
  %v3693 = vld [vmem:[%s5 + $0x108] sm:$0xff]
  %v3694 = vld [vmem:[%s5 + $0x110] sm:$0xff]
  %v3695 = vld [vmem:[%s5 + $0x118] sm:$0xff]
  %v3696 = vld [vmem:[%s5 + $0x120] sm:$0xff]
  %v3697 = vld [vmem:[%s5 + $0x128] sm:$0xff]
  %v3698 = vld [vmem:[%s5 + $0x130] sm:$0xff]
  %v3699 = vld [vmem:[%s5 + $0x138] sm:$0xff]
  %v3700 = vld [vmem:[%s5 + $0x140] sm:$0xff]
  %v3701 = vld [vmem:[%s5 + $0x148] sm:$0xff]
  %v3702 = vld [vmem:[%s5 + $0x150] sm:$0xff]
  %v3703 = vld [vmem:[%s5 + $0x158] sm:$0xff]
  %v3704 = vld [vmem:[%s5 + $0x160] sm:$0xff]
  %v3705 = vld [vmem:[%s5 + $0x168] sm:$0xff]
  %v3706 = vld [vmem:[%s5 + $0x170] sm:$0xff]
  %v3707 = vld [vmem:[%s5 + $0x178] sm:$0xff]
  %v3708 = vld [vmem:[%s5 + $0x180] sm:$0xff]
  %v3709 = vld [vmem:[%s5 + $0x188] sm:$0xff]
  %v3710 = vld [vmem:[%s5 + $0x190] sm:$0xff]
  %v3711 = vld [vmem:[%s5 + $0x198] sm:$0xff]
  %v3712 = vld [vmem:[%s5 + $0x1a0] sm:$0xff]
  %v3713 = vld [vmem:[%s5 + $0x1a8] sm:$0xff]
  %v3714 = vld [vmem:[%s5 + $0x1b0] sm:$0xff]
  %v3715 = vld [vmem:[%s5 + $0x1b8] sm:$0xff]
  %v3716 = vld [vmem:[%s5 + $0x1c0] sm:$0xff]
  %v3717 = vld [vmem:[%s5 + $0x1c8] sm:$0xff]
  %v3718 = vld [vmem:[%s5 + $0x1d0] sm:$0xff]
  %v3719 = vld [vmem:[%s5 + $0x1d8] sm:$0xff]
  %v3720 = vld [vmem:[%s5 + $0x1e0] sm:$0xff]
  %v3721 = vld [vmem:[%s5 + $0x1e8] sm:$0xff]
  %v3722 = vld [vmem:[%s5 + $0x1f0] sm:$0xff]
  %v3723 = vld [vmem:[%s5 + $0x1f8] sm:$0xff]
  %3724 = vmatprep.subr.mxu0 %v3661
  %3725 = vmatpush1.msra.mxu0 %v3660
  %3726 = vmatprep.subr.mxu0 %v3665
  %3727 = vmatpush1.msra.mxu0 %v3664
  %3728 = vmatprep.subr.mxu0 %v3669
  %3729 = vmatpush1.msra.mxu0 %v3668
  %3730 = vmatprep.subr.mxu0 %v3673
  %3731 = vmatpush1.msra.mxu0 %v3672
  %3732 = vmatprep.subr.mxu0 %v3677
  %3733 = vmatpush1.msra.mxu0 %v3676
  %3734 = vmatprep.subr.mxu0 %v3681
  %3735 = vmatpush1.msra.mxu0 %v3680
  %3736 = vmatprep.subr.mxu0 %v3685
  %3737 = vmatpush1.msra.mxu0 %v3684
  %3738 = vmatprep.subr.mxu0 %v3689
  %3739 = vmatpush1.msra.mxu0 %v3688
  %3740 = vmatprep.subr.mxu0 %v3693
  %3741 = vmatpush1.msra.mxu0 %v3692
  %3742 = vmatprep.subr.mxu0 %v3697
  %3743 = vmatpush1.msra.mxu0 %v3696
  %3744 = vmatprep.subr.mxu0 %v3701
  %3745 = vmatpush1.msra.mxu0 %v3700
  %3746 = vmatprep.subr.mxu0 %v3705
  %3747 = vmatpush1.msra.mxu0 %v3704
  %3748 = vmatprep.subr.mxu0 %v3709
  %3749 = vmatpush1.msra.mxu0 %v3708
  %3750 = vmatprep.subr.mxu0 %v3713
  %3751 = vmatpush1.msra.mxu0 %v3712
  %3752 = vmatprep.subr.mxu0 %v3717
  %3753 = vmatpush1.msra.mxu0 %v3716
  %3754 = vmatprep.subr.mxu0 %v3721
  %3755 = vmatpush1.msra.mxu0 %v3720
  %3756 = vmatprep.subr.mxu0 0.0
  %3757 = vmatpush1.msra.mxu0 0.0
  %3758 = vmatprep.subr.mxu0 0.0
  %3759 = vmatpush1.msra.mxu0 0.0
  %3760 = vmatprep.subr.mxu0 0.0
  %3761 = vmatpush1.msra.mxu0 0.0
  %3762 = vmatprep.subr.mxu0 0.0
  %3763 = vmatpush1.msra.mxu0 0.0
  %3764 = vmatprep.subr.mxu0 0.0
  %3765 = vmatpush1.msra.mxu0 0.0
  %3766 = vmatprep.subr.mxu0 0.0
  %3767 = vmatpush1.msra.mxu0 0.0
  %3768 = vmatprep.subr.mxu0 0.0
  %3769 = vmatpush1.msra.mxu0 0.0
  %3770 = vmatprep.subr.mxu0 0.0
  %3771 = vmatpush1.msra.mxu0 0.0
  %3772 = vmatprep.subr.mxu0 0.0
  %3773 = vmatpush1.msra.mxu0 0.0
  %3774 = vmatprep.subr.mxu0 0.0
  %3775 = vmatpush1.msra.mxu0 0.0
  %3776 = vmatprep.subr.mxu0 0.0
  %3777 = vmatpush1.msra.mxu0 0.0
  %3778 = vmatprep.subr.mxu0 0.0
  %3779 = vmatpush1.msra.mxu0 0.0
  %3780 = vmatprep.subr.mxu0 0.0
  %3781 = vmatpush1.msra.mxu0 0.0
  %3782 = vmatprep.subr.mxu0 0.0
  %3783 = vmatpush1.msra.mxu0 0.0
  %3784 = vmatprep.subr.mxu0 0.0
  %3785 = vmatpush1.msra.mxu0 0.0
  %3786 = vmatprep.subr.mxu0 0.0
  %3787 = vmatpush1.msra.mxu0 0.0
  %3788 = vmatprep.mubr.f32.mxu0 0.0
  %3789 = vmatmul.mubr.f32.gmra.mrb[0].mxu0 %v3654
  %v3790 = vpop.f32.mrb[0].mxu0
  %v3791 = vadd.f32 0.0, %v3790
  %v3792 = vpop.f32.mrb[0].mxu0
  %v3793 = vadd.f32 0.0, %v3792
  %3794 = vdwg.mxu0
  %3795 = vmatprep.subr.mxu0 %v3663
  %3796 = vmatpush1.msra.mxu0 %v3662
  %3797 = vmatprep.subr.mxu0 %v3667
  %3798 = vmatpush1.msra.mxu0 %v3666
  %3799 = vmatprep.subr.mxu0 %v3671
  %3800 = vmatpush1.msra.mxu0 %v3670
  %3801 = vmatprep.subr.mxu0 %v3675
  %3802 = vmatpush1.msra.mxu0 %v3674
  %3803 = vmatprep.subr.mxu0 %v3679
  %3804 = vmatpush1.msra.mxu0 %v3678
  %3805 = vmatprep.subr.mxu0 %v3683
  %3806 = vmatpush1.msra.mxu0 %v3682
  %3807 = vmatprep.subr.mxu0 %v3687
  %3808 = vmatpush1.msra.mxu0 %v3686
  %3809 = vmatprep.subr.mxu0 %v3691
  %3810 = vmatpush1.msra.mxu0 %v3690
  %3811 = vmatprep.subr.mxu0 %v3695
  %3812 = vmatpush1.msra.mxu0 %v3694
  %3813 = vmatprep.subr.mxu0 %v3699
  %3814 = vmatpush1.msra.mxu0 %v3698
  %3815 = vmatprep.subr.mxu0 %v3703
  %3816 = vmatpush1.msra.mxu0 %v3702
  %3817 = vmatprep.subr.mxu0 %v3707
  %3818 = vmatpush1.msra.mxu0 %v3706
  %3819 = vmatprep.subr.mxu0 %v3711
  %3820 = vmatpush1.msra.mxu0 %v3710
  %3821 = vmatprep.subr.mxu0 %v3715
  %3822 = vmatpush1.msra.mxu0 %v3714
  %3823 = vmatprep.subr.mxu0 %v3719
  %3824 = vmatpush1.msra.mxu0 %v3718
  %3825 = vmatprep.subr.mxu0 %v3723
  %3826 = vmatpush1.msra.mxu0 %v3722
  %3827 = vmatprep.subr.mxu0 0.0
  %3828 = vmatpush1.msra.mxu0 0.0
  %3829 = vmatprep.subr.mxu0 0.0
  %3830 = vmatpush1.msra.mxu0 0.0
  %3831 = vmatprep.subr.mxu0 0.0
  %3832 = vmatpush1.msra.mxu0 0.0
  %3833 = vmatprep.subr.mxu0 0.0
  %3834 = vmatpush1.msra.mxu0 0.0
  %3835 = vmatprep.subr.mxu0 0.0
  %3836 = vmatpush1.msra.mxu0 0.0
  %3837 = vmatprep.subr.mxu0 0.0
  %3838 = vmatpush1.msra.mxu0 0.0
  %3839 = vmatprep.subr.mxu0 0.0
  %3840 = vmatpush1.msra.mxu0 0.0
  %3841 = vmatprep.subr.mxu0 0.0
  %3842 = vmatpush1.msra.mxu0 0.0
  %3843 = vmatprep.subr.mxu0 0.0
  %3844 = vmatpush1.msra.mxu0 0.0
  %3845 = vmatprep.subr.mxu0 0.0
  %3846 = vmatpush1.msra.mxu0 0.0
  %3847 = vmatprep.subr.mxu0 0.0
  %3848 = vmatpush1.msra.mxu0 0.0
  %3849 = vmatprep.subr.mxu0 0.0
  %3850 = vmatpush1.msra.mxu0 0.0
  %3851 = vmatprep.subr.mxu0 0.0
  %3852 = vmatpush1.msra.mxu0 0.0
  %3853 = vmatprep.subr.mxu0 0.0
  %3854 = vmatpush1.msra.mxu0 0.0
  %3855 = vmatprep.subr.mxu0 0.0
  %3856 = vmatpush1.msra.mxu0 0.0
  %3857 = vmatprep.subr.mxu0 0.0
  %3858 = vmatpush1.msra.mxu0 0.0
  %3859 = vmatprep.mubr.f32.mxu0 0.0
  %3860 = vmatmul.mubr.f32.gmra.mrb[0].mxu0 %v3654
  %v3861 = vpop.f32.mrb[0].mxu0
  %v3862 = vadd.f32 0.0, %v3861
  %v3863 = vpop.f32.mrb[0].mxu0
  %v3864 = vadd.f32 0.0, %v3863
  %3865 = vdwg.mxu0
  %v3866 = vadd.f32 %v3656, %v3791
  %v3867 = vadd.f32 %v3657, %v3793
  %v3868 = vadd.f32 %v3658, %v3862
  %v3869 = vadd.f32 %v3659, %v3864
  %v3870 = vxor.u32 %v3866, 2147483648
  %v3871 = vmul.f32 %v3870, 1.442695
  %v3872 = vpow.pop %v3871
  %v3873 = vadd.f32 %v3872, 1.0
  %v3874 = vrcp.pop %v3873
  %v3875 = vmul.f32 1.0, %v3874
  %v3876 = vxor.u32 %v3867, 2147483648
  %v3877 = vmul.f32 %v3876, 1.442695
  %v3878 = vpow.pop %v3877
  %v3879 = vadd.f32 %v3878, 1.0
  %v3880 = vrcp.pop %v3879
  %v3881 = vmul.f32 1.0, %v3880
  %v3882 = vtanh.pop %v3868
  %v3883 = vxor.u32 %v3869, 2147483648
  %v3884 = vmul.f32 %v3883, 1.442695
  %v3885 = vpow.pop %v3884
  %v3886 = vadd.f32 %v3885, 1.0
  %v3887 = vrcp.pop %v3886
  %v3888 = vmul.f32 1.0, %v3887
  %v3889 = vmul.f32 %v3881, %v3655
  %v3890 = vmul.f32 %v3875, %v3882
  %v3891 = vadd.f32 %v3889, %v3890
  %v3892 = vtanh.pop %v3891
  %v3893 = vmul.f32 %v3888, %v3892
  %3894 = vst [vmem:[#allocation2] sm:$0xff] %v3893
  %3895 = vst [vmem:[#allocation3] sm:$0xff] %v3891
  %v3896 = vld [vmem:[#allocation2] sm:$0xff]
  %v3897 = vld [vmem:[#allocation3] sm:$0xff]
  %v3898 = vld [vmem:[#allocation5 + $0xa0] sm:$0xff]
  %v3899 = vld [vmem:[#allocation5 + $0xa8] sm:$0xff]
  %v3900 = vld [vmem:[#allocation5 + $0xb0] sm:$0xff]
  %v3901 = vld [vmem:[#allocation5 + $0xb8] sm:$0xff]
  %v3902 = vld [vmem:[%s5] sm:$0xff]
  %v3903 = vld [vmem:[%s5 + $0x8] sm:$0xff]
  %v3904 = vld [vmem:[%s5 + $0x10] sm:$0xff]
  %v3905 = vld [vmem:[%s5 + $0x18] sm:$0xff]
  %v3906 = vld [vmem:[%s5 + $0x20] sm:$0xff]
  %v3907 = vld [vmem:[%s5 + $0x28] sm:$0xff]
  %v3908 = vld [vmem:[%s5 + $0x30] sm:$0xff]
  %v3909 = vld [vmem:[%s5 + $0x38] sm:$0xff]
  %v3910 = vld [vmem:[%s5 + $0x40] sm:$0xff]
  %v3911 = vld [vmem:[%s5 + $0x48] sm:$0xff]
  %v3912 = vld [vmem:[%s5 + $0x50] sm:$0xff]
  %v3913 = vld [vmem:[%s5 + $0x58] sm:$0xff]
  %v3914 = vld [vmem:[%s5 + $0x60] sm:$0xff]
  %v3915 = vld [vmem:[%s5 + $0x68] sm:$0xff]
  %v3916 = vld [vmem:[%s5 + $0x70] sm:$0xff]
  %v3917 = vld [vmem:[%s5 + $0x78] sm:$0xff]
  %v3918 = vld [vmem:[%s5 + $0x80] sm:$0xff]
  %v3919 = vld [vmem:[%s5 + $0x88] sm:$0xff]
  %v3920 = vld [vmem:[%s5 + $0x90] sm:$0xff]
  %v3921 = vld [vmem:[%s5 + $0x98] sm:$0xff]
  %v3922 = vld [vmem:[%s5 + $0xa0] sm:$0xff]
  %v3923 = vld [vmem:[%s5 + $0xa8] sm:$0xff]
  %v3924 = vld [vmem:[%s5 + $0xb0] sm:$0xff]
  %v3925 = vld [vmem:[%s5 + $0xb8] sm:$0xff]
  %v3926 = vld [vmem:[%s5 + $0xc0] sm:$0xff]
  %v3927 = vld [vmem:[%s5 + $0xc8] sm:$0xff]
  %v3928 = vld [vmem:[%s5 + $0xd0] sm:$0xff]
  %v3929 = vld [vmem:[%s5 + $0xd8] sm:$0xff]
  %v3930 = vld [vmem:[%s5 + $0xe0] sm:$0xff]
  %v3931 = vld [vmem:[%s5 + $0xe8] sm:$0xff]
  %v3932 = vld [vmem:[%s5 + $0xf0] sm:$0xff]
  %v3933 = vld [vmem:[%s5 + $0xf8] sm:$0xff]
  %v3934 = vld [vmem:[%s5 + $0x100] sm:$0xff]
  %v3935 = vld [vmem:[%s5 + $0x108] sm:$0xff]
  %v3936 = vld [vmem:[%s5 + $0x110] sm:$0xff]
  %v3937 = vld [vmem:[%s5 + $0x118] sm:$0xff]
  %v3938 = vld [vmem:[%s5 + $0x120] sm:$0xff]
  %v3939 = vld [vmem:[%s5 + $0x128] sm:$0xff]
  %v3940 = vld [vmem:[%s5 + $0x130] sm:$0xff]
  %v3941 = vld [vmem:[%s5 + $0x138] sm:$0xff]
  %v3942 = vld [vmem:[%s5 + $0x140] sm:$0xff]
  %v3943 = vld [vmem:[%s5 + $0x148] sm:$0xff]
  %v3944 = vld [vmem:[%s5 + $0x150] sm:$0xff]
  %v3945 = vld [vmem:[%s5 + $0x158] sm:$0xff]
  %v3946 = vld [vmem:[%s5 + $0x160] sm:$0xff]
  %v3947 = vld [vmem:[%s5 + $0x168] sm:$0xff]
  %v3948 = vld [vmem:[%s5 + $0x170] sm:$0xff]
  %v3949 = vld [vmem:[%s5 + $0x178] sm:$0xff]
  %v3950 = vld [vmem:[%s5 + $0x180] sm:$0xff]
  %v3951 = vld [vmem:[%s5 + $0x188] sm:$0xff]
  %v3952 = vld [vmem:[%s5 + $0x190] sm:$0xff]
  %v3953 = vld [vmem:[%s5 + $0x198] sm:$0xff]
  %v3954 = vld [vmem:[%s5 + $0x1a0] sm:$0xff]
  %v3955 = vld [vmem:[%s5 + $0x1a8] sm:$0xff]
  %v3956 = vld [vmem:[%s5 + $0x1b0] sm:$0xff]
  %v3957 = vld [vmem:[%s5 + $0x1b8] sm:$0xff]
  %v3958 = vld [vmem:[%s5 + $0x1c0] sm:$0xff]
  %v3959 = vld [vmem:[%s5 + $0x1c8] sm:$0xff]
  %v3960 = vld [vmem:[%s5 + $0x1d0] sm:$0xff]
  %v3961 = vld [vmem:[%s5 + $0x1d8] sm:$0xff]
  %v3962 = vld [vmem:[%s5 + $0x1e0] sm:$0xff]
  %v3963 = vld [vmem:[%s5 + $0x1e8] sm:$0xff]
  %v3964 = vld [vmem:[%s5 + $0x1f0] sm:$0xff]
  %v3965 = vld [vmem:[%s5 + $0x1f8] sm:$0xff]
  %3966 = vmatprep.subr.mxu0 %v3903
  %3967 = vmatpush1.msra.mxu0 %v3902
  %3968 = vmatprep.subr.mxu0 %v3907
  %3969 = vmatpush1.msra.mxu0 %v3906
  %3970 = vmatprep.subr.mxu0 %v3911
  %3971 = vmatpush1.msra.mxu0 %v3910
  %3972 = vmatprep.subr.mxu0 %v3915
  %3973 = vmatpush1.msra.mxu0 %v3914
  %3974 = vmatprep.subr.mxu0 %v3919
  %3975 = vmatpush1.msra.mxu0 %v3918
  %3976 = vmatprep.subr.mxu0 %v3923
  %3977 = vmatpush1.msra.mxu0 %v3922
  %3978 = vmatprep.subr.mxu0 %v3927
  %3979 = vmatpush1.msra.mxu0 %v3926
  %3980 = vmatprep.subr.mxu0 %v3931
  %3981 = vmatpush1.msra.mxu0 %v3930
  %3982 = vmatprep.subr.mxu0 %v3935
  %3983 = vmatpush1.msra.mxu0 %v3934
  %3984 = vmatprep.subr.mxu0 %v3939
  %3985 = vmatpush1.msra.mxu0 %v3938
  %3986 = vmatprep.subr.mxu0 %v3943
  %3987 = vmatpush1.msra.mxu0 %v3942
  %3988 = vmatprep.subr.mxu0 %v3947
  %3989 = vmatpush1.msra.mxu0 %v3946
  %3990 = vmatprep.subr.mxu0 %v3951
  %3991 = vmatpush1.msra.mxu0 %v3950
  %3992 = vmatprep.subr.mxu0 %v3955
  %3993 = vmatpush1.msra.mxu0 %v3954
  %3994 = vmatprep.subr.mxu0 %v3959
  %3995 = vmatpush1.msra.mxu0 %v3958
  %3996 = vmatprep.subr.mxu0 %v3963
  %3997 = vmatpush1.msra.mxu0 %v3962
  %3998 = vmatprep.subr.mxu0 0.0
  %3999 = vmatpush1.msra.mxu0 0.0
  %4000 = vmatprep.subr.mxu0 0.0
  %4001 = vmatpush1.msra.mxu0 0.0
  %4002 = vmatprep.subr.mxu0 0.0
  %4003 = vmatpush1.msra.mxu0 0.0
  %4004 = vmatprep.subr.mxu0 0.0
  %4005 = vmatpush1.msra.mxu0 0.0
  %4006 = vmatprep.subr.mxu0 0.0
  %4007 = vmatpush1.msra.mxu0 0.0
  %4008 = vmatprep.subr.mxu0 0.0
  %4009 = vmatpush1.msra.mxu0 0.0
  %4010 = vmatprep.subr.mxu0 0.0
  %4011 = vmatpush1.msra.mxu0 0.0
  %4012 = vmatprep.subr.mxu0 0.0
  %4013 = vmatpush1.msra.mxu0 0.0
  %4014 = vmatprep.subr.mxu0 0.0
  %4015 = vmatpush1.msra.mxu0 0.0
  %4016 = vmatprep.subr.mxu0 0.0
  %4017 = vmatpush1.msra.mxu0 0.0
  %4018 = vmatprep.subr.mxu0 0.0
  %4019 = vmatpush1.msra.mxu0 0.0
  %4020 = vmatprep.subr.mxu0 0.0
  %4021 = vmatpush1.msra.mxu0 0.0
  %4022 = vmatprep.subr.mxu0 0.0
  %4023 = vmatpush1.msra.mxu0 0.0
  %4024 = vmatprep.subr.mxu0 0.0
  %4025 = vmatpush1.msra.mxu0 0.0
  %4026 = vmatprep.subr.mxu0 0.0
  %4027 = vmatpush1.msra.mxu0 0.0
  %4028 = vmatprep.subr.mxu0 0.0
  %4029 = vmatpush1.msra.mxu0 0.0
  %4030 = vmatprep.mubr.f32.mxu0 0.0
  %4031 = vmatmul.mubr.f32.gmra.mrb[0].mxu0 %v3896
  %v4032 = vpop.f32.mrb[0].mxu0
  %v4033 = vadd.f32 0.0, %v4032
  %v4034 = vpop.f32.mrb[0].mxu0
  %v4035 = vadd.f32 0.0, %v4034
  %4036 = vdwg.mxu0
  %4037 = vmatprep.subr.mxu0 %v3905
  %4038 = vmatpush1.msra.mxu0 %v3904
  %4039 = vmatprep.subr.mxu0 %v3909
  %4040 = vmatpush1.msra.mxu0 %v3908
  %4041 = vmatprep.subr.mxu0 %v3913
  %4042 = vmatpush1.msra.mxu0 %v3912
  %4043 = vmatprep.subr.mxu0 %v3917
  %4044 = vmatpush1.msra.mxu0 %v3916
  %4045 = vmatprep.subr.mxu0 %v3921
  %4046 = vmatpush1.msra.mxu0 %v3920
  %4047 = vmatprep.subr.mxu0 %v3925
  %4048 = vmatpush1.msra.mxu0 %v3924
  %4049 = vmatprep.subr.mxu0 %v3929
  %4050 = vmatpush1.msra.mxu0 %v3928
  %4051 = vmatprep.subr.mxu0 %v3933
  %4052 = vmatpush1.msra.mxu0 %v3932
  %4053 = vmatprep.subr.mxu0 %v3937
  %4054 = vmatpush1.msra.mxu0 %v3936
  %4055 = vmatprep.subr.mxu0 %v3941
  %4056 = vmatpush1.msra.mxu0 %v3940
  %4057 = vmatprep.subr.mxu0 %v3945
  %4058 = vmatpush1.msra.mxu0 %v3944
  %4059 = vmatprep.subr.mxu0 %v3949
  %4060 = vmatpush1.msra.mxu0 %v3948
  %4061 = vmatprep.subr.mxu0 %v3953
  %4062 = vmatpush1.msra.mxu0 %v3952
  %4063 = vmatprep.subr.mxu0 %v3957
  %4064 = vmatpush1.msra.mxu0 %v3956
  %4065 = vmatprep.subr.mxu0 %v3961
  %4066 = vmatpush1.msra.mxu0 %v3960
  %4067 = vmatprep.subr.mxu0 %v3965
  %4068 = vmatpush1.msra.mxu0 %v3964
  %4069 = vmatprep.subr.mxu0 0.0
  %4070 = vmatpush1.msra.mxu0 0.0
  %4071 = vmatprep.subr.mxu0 0.0
  %4072 = vmatpush1.msra.mxu0 0.0
  %4073 = vmatprep.subr.mxu0 0.0
  %4074 = vmatpush1.msra.mxu0 0.0
  %4075 = vmatprep.subr.mxu0 0.0
  %4076 = vmatpush1.msra.mxu0 0.0
  %4077 = vmatprep.subr.mxu0 0.0
  %4078 = vmatpush1.msra.mxu0 0.0
  %4079 = vmatprep.subr.mxu0 0.0
  %4080 = vmatpush1.msra.mxu0 0.0
  %4081 = vmatprep.subr.mxu0 0.0
  %4082 = vmatpush1.msra.mxu0 0.0
  %4083 = vmatprep.subr.mxu0 0.0
  %4084 = vmatpush1.msra.mxu0 0.0
  %4085 = vmatprep.subr.mxu0 0.0
  %4086 = vmatpush1.msra.mxu0 0.0
  %4087 = vmatprep.subr.mxu0 0.0
  %4088 = vmatpush1.msra.mxu0 0.0
  %4089 = vmatprep.subr.mxu0 0.0
  %4090 = vmatpush1.msra.mxu0 0.0
  %4091 = vmatprep.subr.mxu0 0.0
  %4092 = vmatpush1.msra.mxu0 0.0
  %4093 = vmatprep.subr.mxu0 0.0
  %4094 = vmatpush1.msra.mxu0 0.0
  %4095 = vmatprep.subr.mxu0 0.0
  %4096 = vmatpush1.msra.mxu0 0.0
  %4097 = vmatprep.subr.mxu0 0.0
  %4098 = vmatpush1.msra.mxu0 0.0
  %4099 = vmatprep.subr.mxu0 0.0
  %4100 = vmatpush1.msra.mxu0 0.0
  %4101 = vmatprep.mubr.f32.mxu0 0.0
  %4102 = vmatmul.mubr.f32.gmra.mrb[0].mxu0 %v3896
  %v4103 = vpop.f32.mrb[0].mxu0
  %v4104 = vadd.f32 0.0, %v4103
  %v4105 = vpop.f32.mrb[0].mxu0
  %v4106 = vadd.f32 0.0, %v4105
  %4107 = vdwg.mxu0
  %v4108 = vadd.f32 %v3898, %v4033
  %v4109 = vadd.f32 %v3899, %v4035
  %v4110 = vadd.f32 %v3900, %v4104
  %v4111 = vadd.f32 %v3901, %v4106
  %v4112 = vxor.u32 %v4108, 2147483648
  %v4113 = vmul.f32 %v4112, 1.442695
  %v4114 = vpow.pop %v4113
  %v4115 = vadd.f32 %v4114, 1.0
  %v4116 = vrcp.pop %v4115
  %v4117 = vmul.f32 1.0, %v4116
  %v4118 = vxor.u32 %v4109, 2147483648
  %v4119 = vmul.f32 %v4118, 1.442695
  %v4120 = vpow.pop %v4119
  %v4121 = vadd.f32 %v4120, 1.0
  %v4122 = vrcp.pop %v4121
  %v4123 = vmul.f32 1.0, %v4122
  %v4124 = vtanh.pop %v4110
  %v4125 = vxor.u32 %v4111, 2147483648
  %v4126 = vmul.f32 %v4125, 1.442695
  %v4127 = vpow.pop %v4126
  %v4128 = vadd.f32 %v4127, 1.0
  %v4129 = vrcp.pop %v4128
  %v4130 = vmul.f32 1.0, %v4129
  %v4131 = vmul.f32 %v4123, %v3897
  %v4132 = vmul.f32 %v4117, %v4124
  %v4133 = vadd.f32 %v4131, %v4132
  %v4134 = vtanh.pop %v4133
  %v4135 = vmul.f32 %v4130, %v4134
  %4136 = vst [vmem:[#allocation2] sm:$0xff] %v4135
  %4137 = vst [vmem:[#allocation3] sm:$0xff] %v4133
  %v4138 = vld [vmem:[#allocation2] sm:$0xff]
  %v4139 = vld [vmem:[#allocation3] sm:$0xff]
  %v4140 = vld [vmem:[#allocation5 + $0xc0] sm:$0xff]
  %v4141 = vld [vmem:[#allocation5 + $0xc8] sm:$0xff]
  %v4142 = vld [vmem:[#allocation5 + $0xd0] sm:$0xff]
  %v4143 = vld [vmem:[#allocation5 + $0xd8] sm:$0xff]
  %v4144 = vld [vmem:[%s5] sm:$0xff]
  %v4145 = vld [vmem:[%s5 + $0x8] sm:$0xff]
  %v4146 = vld [vmem:[%s5 + $0x10] sm:$0xff]
  %v4147 = vld [vmem:[%s5 + $0x18] sm:$0xff]
  %v4148 = vld [vmem:[%s5 + $0x20] sm:$0xff]
  %v4149 = vld [vmem:[%s5 + $0x28] sm:$0xff]
  %v4150 = vld [vmem:[%s5 + $0x30] sm:$0xff]
  %v4151 = vld [vmem:[%s5 + $0x38] sm:$0xff]
  %v4152 = vld [vmem:[%s5 + $0x40] sm:$0xff]
  %v4153 = vld [vmem:[%s5 + $0x48] sm:$0xff]
  %v4154 = vld [vmem:[%s5 + $0x50] sm:$0xff]
  %v4155 = vld [vmem:[%s5 + $0x58] sm:$0xff]
  %v4156 = vld [vmem:[%s5 + $0x60] sm:$0xff]
  %v4157 = vld [vmem:[%s5 + $0x68] sm:$0xff]
  %v4158 = vld [vmem:[%s5 + $0x70] sm:$0xff]
  %v4159 = vld [vmem:[%s5 + $0x78] sm:$0xff]
  %v4160 = vld [vmem:[%s5 + $0x80] sm:$0xff]
  %v4161 = vld [vmem:[%s5 + $0x88] sm:$0xff]
  %v4162 = vld [vmem:[%s5 + $0x90] sm:$0xff]
  %v4163 = vld [vmem:[%s5 + $0x98] sm:$0xff]
  %v4164 = vld [vmem:[%s5 + $0xa0] sm:$0xff]
  %v4165 = vld [vmem:[%s5 + $0xa8] sm:$0xff]
  %v4166 = vld [vmem:[%s5 + $0xb0] sm:$0xff]
  %v4167 = vld [vmem:[%s5 + $0xb8] sm:$0xff]
  %v4168 = vld [vmem:[%s5 + $0xc0] sm:$0xff]
  %v4169 = vld [vmem:[%s5 + $0xc8] sm:$0xff]
  %v4170 = vld [vmem:[%s5 + $0xd0] sm:$0xff]
  %v4171 = vld [vmem:[%s5 + $0xd8] sm:$0xff]
  %v4172 = vld [vmem:[%s5 + $0xe0] sm:$0xff]
  %v4173 = vld [vmem:[%s5 + $0xe8] sm:$0xff]
  %v4174 = vld [vmem:[%s5 + $0xf0] sm:$0xff]
  %v4175 = vld [vmem:[%s5 + $0xf8] sm:$0xff]
  %v4176 = vld [vmem:[%s5 + $0x100] sm:$0xff]
  %v4177 = vld [vmem:[%s5 + $0x108] sm:$0xff]
  %v4178 = vld [vmem:[%s5 + $0x110] sm:$0xff]
  %v4179 = vld [vmem:[%s5 + $0x118] sm:$0xff]
  %v4180 = vld [vmem:[%s5 + $0x120] sm:$0xff]
  %v4181 = vld [vmem:[%s5 + $0x128] sm:$0xff]
  %v4182 = vld [vmem:[%s5 + $0x130] sm:$0xff]
  %v4183 = vld [vmem:[%s5 + $0x138] sm:$0xff]
  %v4184 = vld [vmem:[%s5 + $0x140] sm:$0xff]
  %v4185 = vld [vmem:[%s5 + $0x148] sm:$0xff]
  %v4186 = vld [vmem:[%s5 + $0x150] sm:$0xff]
  %v4187 = vld [vmem:[%s5 + $0x158] sm:$0xff]
  %v4188 = vld [vmem:[%s5 + $0x160] sm:$0xff]
  %v4189 = vld [vmem:[%s5 + $0x168] sm:$0xff]
  %v4190 = vld [vmem:[%s5 + $0x170] sm:$0xff]
  %v4191 = vld [vmem:[%s5 + $0x178] sm:$0xff]
  %v4192 = vld [vmem:[%s5 + $0x180] sm:$0xff]
  %v4193 = vld [vmem:[%s5 + $0x188] sm:$0xff]
  %v4194 = vld [vmem:[%s5 + $0x190] sm:$0xff]
  %v4195 = vld [vmem:[%s5 + $0x198] sm:$0xff]
  %v4196 = vld [vmem:[%s5 + $0x1a0] sm:$0xff]
  %v4197 = vld [vmem:[%s5 + $0x1a8] sm:$0xff]
  %v4198 = vld [vmem:[%s5 + $0x1b0] sm:$0xff]
  %v4199 = vld [vmem:[%s5 + $0x1b8] sm:$0xff]
  %v4200 = vld [vmem:[%s5 + $0x1c0] sm:$0xff]
  %v4201 = vld [vmem:[%s5 + $0x1c8] sm:$0xff]
  %v4202 = vld [vmem:[%s5 + $0x1d0] sm:$0xff]
  %v4203 = vld [vmem:[%s5 + $0x1d8] sm:$0xff]
  %v4204 = vld [vmem:[%s5 + $0x1e0] sm:$0xff]
  %v4205 = vld [vmem:[%s5 + $0x1e8] sm:$0xff]
  %v4206 = vld [vmem:[%s5 + $0x1f0] sm:$0xff]
  %v4207 = vld [vmem:[%s5 + $0x1f8] sm:$0xff]
  %4208 = vmatprep.subr.mxu0 %v4145
  %4209 = vmatpush1.msra.mxu0 %v4144
  %4210 = vmatprep.subr.mxu0 %v4149
  %4211 = vmatpush1.msra.mxu0 %v4148
  %4212 = vmatprep.subr.mxu0 %v4153
  %4213 = vmatpush1.msra.mxu0 %v4152
  %4214 = vmatprep.subr.mxu0 %v4157
  %4215 = vmatpush1.msra.mxu0 %v4156
  %4216 = vmatprep.subr.mxu0 %v4161
  %4217 = vmatpush1.msra.mxu0 %v4160
  %4218 = vmatprep.subr.mxu0 %v4165
  %4219 = vmatpush1.msra.mxu0 %v4164
  %4220 = vmatprep.subr.mxu0 %v4169
  %4221 = vmatpush1.msra.mxu0 %v4168
  %4222 = vmatprep.subr.mxu0 %v4173
  %4223 = vmatpush1.msra.mxu0 %v4172
  %4224 = vmatprep.subr.mxu0 %v4177
  %4225 = vmatpush1.msra.mxu0 %v4176
  %4226 = vmatprep.subr.mxu0 %v4181
  %4227 = vmatpush1.msra.mxu0 %v4180
  %4228 = vmatprep.subr.mxu0 %v4185
  %4229 = vmatpush1.msra.mxu0 %v4184
  %4230 = vmatprep.subr.mxu0 %v4189
  %4231 = vmatpush1.msra.mxu0 %v4188
  %4232 = vmatprep.subr.mxu0 %v4193
  %4233 = vmatpush1.msra.mxu0 %v4192
  %4234 = vmatprep.subr.mxu0 %v4197
  %4235 = vmatpush1.msra.mxu0 %v4196
  %4236 = vmatprep.subr.mxu0 %v4201
  %4237 = vmatpush1.msra.mxu0 %v4200
  %4238 = vmatprep.subr.mxu0 %v4205
  %4239 = vmatpush1.msra.mxu0 %v4204
  %4240 = vmatprep.subr.mxu0 0.0
  %4241 = vmatpush1.msra.mxu0 0.0
  %4242 = vmatprep.subr.mxu0 0.0
  %4243 = vmatpush1.msra.mxu0 0.0
  %4244 = vmatprep.subr.mxu0 0.0
  %4245 = vmatpush1.msra.mxu0 0.0
  %4246 = vmatprep.subr.mxu0 0.0
  %4247 = vmatpush1.msra.mxu0 0.0
  %4248 = vmatprep.subr.mxu0 0.0
  %4249 = vmatpush1.msra.mxu0 0.0
  %4250 = vmatprep.subr.mxu0 0.0
  %4251 = vmatpush1.msra.mxu0 0.0
  %4252 = vmatprep.subr.mxu0 0.0
  %4253 = vmatpush1.msra.mxu0 0.0
  %4254 = vmatprep.subr.mxu0 0.0
  %4255 = vmatpush1.msra.mxu0 0.0
  %4256 = vmatprep.subr.mxu0 0.0
  %4257 = vmatpush1.msra.mxu0 0.0
  %4258 = vmatprep.subr.mxu0 0.0
  %4259 = vmatpush1.msra.mxu0 0.0
  %4260 = vmatprep.subr.mxu0 0.0
  %4261 = vmatpush1.msra.mxu0 0.0
  %4262 = vmatprep.subr.mxu0 0.0
  %4263 = vmatpush1.msra.mxu0 0.0
  %4264 = vmatprep.subr.mxu0 0.0
  %4265 = vmatpush1.msra.mxu0 0.0
  %4266 = vmatprep.subr.mxu0 0.0
  %4267 = vmatpush1.msra.mxu0 0.0
  %4268 = vmatprep.subr.mxu0 0.0
  %4269 = vmatpush1.msra.mxu0 0.0
  %4270 = vmatprep.subr.mxu0 0.0
  %4271 = vmatpush1.msra.mxu0 0.0
  %4272 = vmatprep.mubr.f32.mxu0 0.0
  %4273 = vmatmul.mubr.f32.gmra.mrb[0].mxu0 %v4138
  %v4274 = vpop.f32.mrb[0].mxu0
  %v4275 = vadd.f32 0.0, %v4274
  %v4276 = vpop.f32.mrb[0].mxu0
  %v4277 = vadd.f32 0.0, %v4276
  %4278 = vdwg.mxu0
  %4279 = vmatprep.subr.mxu0 %v4147
  %4280 = vmatpush1.msra.mxu0 %v4146
  %4281 = vmatprep.subr.mxu0 %v4151
  %4282 = vmatpush1.msra.mxu0 %v4150
  %4283 = vmatprep.subr.mxu0 %v4155
  %4284 = vmatpush1.msra.mxu0 %v4154
  %4285 = vmatprep.subr.mxu0 %v4159
  %4286 = vmatpush1.msra.mxu0 %v4158
  %4287 = vmatprep.subr.mxu0 %v4163
  %4288 = vmatpush1.msra.mxu0 %v4162
  %4289 = vmatprep.subr.mxu0 %v4167
  %4290 = vmatpush1.msra.mxu0 %v4166
  %4291 = vmatprep.subr.mxu0 %v4171
  %4292 = vmatpush1.msra.mxu0 %v4170
  %4293 = vmatprep.subr.mxu0 %v4175
  %4294 = vmatpush1.msra.mxu0 %v4174
  %4295 = vmatprep.subr.mxu0 %v4179
  %4296 = vmatpush1.msra.mxu0 %v4178
  %4297 = vmatprep.subr.mxu0 %v4183
  %4298 = vmatpush1.msra.mxu0 %v4182
  %4299 = vmatprep.subr.mxu0 %v4187
  %4300 = vmatpush1.msra.mxu0 %v4186
  %4301 = vmatprep.subr.mxu0 %v4191
  %4302 = vmatpush1.msra.mxu0 %v4190
  %4303 = vmatprep.subr.mxu0 %v4195
  %4304 = vmatpush1.msra.mxu0 %v4194
  %4305 = vmatprep.subr.mxu0 %v4199
  %4306 = vmatpush1.msra.mxu0 %v4198
  %4307 = vmatprep.subr.mxu0 %v4203
  %4308 = vmatpush1.msra.mxu0 %v4202
  %4309 = vmatprep.subr.mxu0 %v4207
  %4310 = vmatpush1.msra.mxu0 %v4206
  %4311 = vmatprep.subr.mxu0 0.0
  %4312 = vmatpush1.msra.mxu0 0.0
  %4313 = vmatprep.subr.mxu0 0.0
  %4314 = vmatpush1.msra.mxu0 0.0
  %4315 = vmatprep.subr.mxu0 0.0
  %4316 = vmatpush1.msra.mxu0 0.0
  %4317 = vmatprep.subr.mxu0 0.0
  %4318 = vmatpush1.msra.mxu0 0.0
  %4319 = vmatprep.subr.mxu0 0.0
  %4320 = vmatpush1.msra.mxu0 0.0
  %4321 = vmatprep.subr.mxu0 0.0
  %4322 = vmatpush1.msra.mxu0 0.0
  %4323 = vmatprep.subr.mxu0 0.0
  %4324 = vmatpush1.msra.mxu0 0.0
  %4325 = vmatprep.subr.mxu0 0.0
  %4326 = vmatpush1.msra.mxu0 0.0
  %4327 = vmatprep.subr.mxu0 0.0
  %4328 = vmatpush1.msra.mxu0 0.0
  %4329 = vmatprep.subr.mxu0 0.0
  %4330 = vmatpush1.msra.mxu0 0.0
  %4331 = vmatprep.subr.mxu0 0.0
  %4332 = vmatpush1.msra.mxu0 0.0
  %4333 = vmatprep.subr.mxu0 0.0
  %4334 = vmatpush1.msra.mxu0 0.0
  %4335 = vmatprep.subr.mxu0 0.0
  %4336 = vmatpush1.msra.mxu0 0.0
  %4337 = vmatprep.subr.mxu0 0.0
  %4338 = vmatpush1.msra.mxu0 0.0
  %4339 = vmatprep.subr.mxu0 0.0
  %4340 = vmatpush1.msra.mxu0 0.0
  %4341 = vmatprep.subr.mxu0 0.0
  %4342 = vmatpush1.msra.mxu0 0.0
  %4343 = vmatprep.mubr.f32.mxu0 0.0
  %4344 = vmatmul.mubr.f32.gmra.mrb[0].mxu0 %v4138
  %v4345 = vpop.f32.mrb[0].mxu0
  %v4346 = vadd.f32 0.0, %v4345
  %v4347 = vpop.f32.mrb[0].mxu0
  %v4348 = vadd.f32 0.0, %v4347
  %4349 = vdwg.mxu0
  %v4350 = vadd.f32 %v4140, %v4275
  %v4351 = vadd.f32 %v4141, %v4277
  %v4352 = vadd.f32 %v4142, %v4346
  %v4353 = vadd.f32 %v4143, %v4348
  %v4354 = vxor.u32 %v4350, 2147483648
  %v4355 = vmul.f32 %v4354, 1.442695
  %v4356 = vpow.pop %v4355
  %v4357 = vadd.f32 %v4356, 1.0
  %v4358 = vrcp.pop %v4357
  %v4359 = vmul.f32 1.0, %v4358
  %v4360 = vxor.u32 %v4351, 2147483648
  %v4361 = vmul.f32 %v4360, 1.442695
  %v4362 = vpow.pop %v4361
  %v4363 = vadd.f32 %v4362, 1.0
  %v4364 = vrcp.pop %v4363
  %v4365 = vmul.f32 1.0, %v4364
  %v4366 = vtanh.pop %v4352
  %v4367 = vxor.u32 %v4353, 2147483648
  %v4368 = vmul.f32 %v4367, 1.442695
  %v4369 = vpow.pop %v4368
  %v4370 = vadd.f32 %v4369, 1.0
  %v4371 = vrcp.pop %v4370
  %v4372 = vmul.f32 1.0, %v4371
  %v4373 = vmul.f32 %v4365, %v4139
  %v4374 = vmul.f32 %v4359, %v4366
  %v4375 = vadd.f32 %v4373, %v4374
  %v4376 = vtanh.pop %v4375
  %v4377 = vmul.f32 %v4372, %v4376
  %4378 = vst [vmem:[#allocation2] sm:$0xff] %v4377
  %4379 = vst [vmem:[#allocation3] sm:$0xff] %v4375
  %v4380 = vld [vmem:[#allocation2] sm:$0xff]
  %v4381 = vld [vmem:[#allocation3] sm:$0xff]
  %v4382 = vld [vmem:[#allocation5 + $0xe0] sm:$0xff]
  %v4383 = vld [vmem:[#allocation5 + $0xe8] sm:$0xff]
  %v4384 = vld [vmem:[#allocation5 + $0xf0] sm:$0xff]
  %v4385 = vld [vmem:[#allocation5 + $0xf8] sm:$0xff]
  %v4386 = vld [vmem:[%s5] sm:$0xff]
  %v4387 = vld [vmem:[%s5 + $0x8] sm:$0xff]
  %v4388 = vld [vmem:[%s5 + $0x10] sm:$0xff]
  %v4389 = vld [vmem:[%s5 + $0x18] sm:$0xff]
  %v4390 = vld [vmem:[%s5 + $0x20] sm:$0xff]
  %v4391 = vld [vmem:[%s5 + $0x28] sm:$0xff]
  %v4392 = vld [vmem:[%s5 + $0x30] sm:$0xff]
  %v4393 = vld [vmem:[%s5 + $0x38] sm:$0xff]
  %v4394 = vld [vmem:[%s5 + $0x40] sm:$0xff]
  %v4395 = vld [vmem:[%s5 + $0x48] sm:$0xff]
  %v4396 = vld [vmem:[%s5 + $0x50] sm:$0xff]
  %v4397 = vld [vmem:[%s5 + $0x58] sm:$0xff]
  %v4398 = vld [vmem:[%s5 + $0x60] sm:$0xff]
  %v4399 = vld [vmem:[%s5 + $0x68] sm:$0xff]
  %v4400 = vld [vmem:[%s5 + $0x70] sm:$0xff]
  %v4401 = vld [vmem:[%s5 + $0x78] sm:$0xff]
  %v4402 = vld [vmem:[%s5 + $0x80] sm:$0xff]
  %v4403 = vld [vmem:[%s5 + $0x88] sm:$0xff]
  %v4404 = vld [vmem:[%s5 + $0x90] sm:$0xff]
  %v4405 = vld [vmem:[%s5 + $0x98] sm:$0xff]
  %v4406 = vld [vmem:[%s5 + $0xa0] sm:$0xff]
  %v4407 = vld [vmem:[%s5 + $0xa8] sm:$0xff]
  %v4408 = vld [vmem:[%s5 + $0xb0] sm:$0xff]
  %v4409 = vld [vmem:[%s5 + $0xb8] sm:$0xff]
  %v4410 = vld [vmem:[%s5 + $0xc0] sm:$0xff]
  %v4411 = vld [vmem:[%s5 + $0xc8] sm:$0xff]
  %v4412 = vld [vmem:[%s5 + $0xd0] sm:$0xff]
  %v4413 = vld [vmem:[%s5 + $0xd8] sm:$0xff]
  %v4414 = vld [vmem:[%s5 + $0xe0] sm:$0xff]
  %v4415 = vld [vmem:[%s5 + $0xe8] sm:$0xff]
  %v4416 = vld [vmem:[%s5 + $0xf0] sm:$0xff]
  %v4417 = vld [vmem:[%s5 + $0xf8] sm:$0xff]
  %v4418 = vld [vmem:[%s5 + $0x100] sm:$0xff]
  %v4419 = vld [vmem:[%s5 + $0x108] sm:$0xff]
  %v4420 = vld [vmem:[%s5 + $0x110] sm:$0xff]
  %v4421 = vld [vmem:[%s5 + $0x118] sm:$0xff]
  %v4422 = vld [vmem:[%s5 + $0x120] sm:$0xff]
  %v4423 = vld [vmem:[%s5 + $0x128] sm:$0xff]
  %v4424 = vld [vmem:[%s5 + $0x130] sm:$0xff]
  %v4425 = vld [vmem:[%s5 + $0x138] sm:$0xff]
  %v4426 = vld [vmem:[%s5 + $0x140] sm:$0xff]
  %v4427 = vld [vmem:[%s5 + $0x148] sm:$0xff]
  %v4428 = vld [vmem:[%s5 + $0x150] sm:$0xff]
  %v4429 = vld [vmem:[%s5 + $0x158] sm:$0xff]
  %v4430 = vld [vmem:[%s5 + $0x160] sm:$0xff]
  %v4431 = vld [vmem:[%s5 + $0x168] sm:$0xff]
  %v4432 = vld [vmem:[%s5 + $0x170] sm:$0xff]
  %v4433 = vld [vmem:[%s5 + $0x178] sm:$0xff]
  %v4434 = vld [vmem:[%s5 + $0x180] sm:$0xff]
  %v4435 = vld [vmem:[%s5 + $0x188] sm:$0xff]
  %v4436 = vld [vmem:[%s5 + $0x190] sm:$0xff]
  %v4437 = vld [vmem:[%s5 + $0x198] sm:$0xff]
  %v4438 = vld [vmem:[%s5 + $0x1a0] sm:$0xff]
  %v4439 = vld [vmem:[%s5 + $0x1a8] sm:$0xff]
  %v4440 = vld [vmem:[%s5 + $0x1b0] sm:$0xff]
  %v4441 = vld [vmem:[%s5 + $0x1b8] sm:$0xff]
  %v4442 = vld [vmem:[%s5 + $0x1c0] sm:$0xff]
  %v4443 = vld [vmem:[%s5 + $0x1c8] sm:$0xff]
  %v4444 = vld [vmem:[%s5 + $0x1d0] sm:$0xff]
  %v4445 = vld [vmem:[%s5 + $0x1d8] sm:$0xff]
  %v4446 = vld [vmem:[%s5 + $0x1e0] sm:$0xff]
  %v4447 = vld [vmem:[%s5 + $0x1e8] sm:$0xff]
  %v4448 = vld [vmem:[%s5 + $0x1f0] sm:$0xff]
  %v4449 = vld [vmem:[%s5 + $0x1f8] sm:$0xff]
  %4450 = vmatprep.subr.mxu0 %v4387
  %4451 = vmatpush1.msra.mxu0 %v4386
  %4452 = vmatprep.subr.mxu0 %v4391
  %4453 = vmatpush1.msra.mxu0 %v4390
  %4454 = vmatprep.subr.mxu0 %v4395
  %4455 = vmatpush1.msra.mxu0 %v4394
  %4456 = vmatprep.subr.mxu0 %v4399
  %4457 = vmatpush1.msra.mxu0 %v4398
  %4458 = vmatprep.subr.mxu0 %v4403
  %4459 = vmatpush1.msra.mxu0 %v4402
  %4460 = vmatprep.subr.mxu0 %v4407
  %4461 = vmatpush1.msra.mxu0 %v4406
  %4462 = vmatprep.subr.mxu0 %v4411
  %4463 = vmatpush1.msra.mxu0 %v4410
  %4464 = vmatprep.subr.mxu0 %v4415
  %4465 = vmatpush1.msra.mxu0 %v4414
  %4466 = vmatprep.subr.mxu0 %v4419
  %4467 = vmatpush1.msra.mxu0 %v4418
  %4468 = vmatprep.subr.mxu0 %v4423
  %4469 = vmatpush1.msra.mxu0 %v4422
  %4470 = vmatprep.subr.mxu0 %v4427
  %4471 = vmatpush1.msra.mxu0 %v4426
  %4472 = vmatprep.subr.mxu0 %v4431
  %4473 = vmatpush1.msra.mxu0 %v4430
  %4474 = vmatprep.subr.mxu0 %v4435
  %4475 = vmatpush1.msra.mxu0 %v4434
  %4476 = vmatprep.subr.mxu0 %v4439
  %4477 = vmatpush1.msra.mxu0 %v4438
  %4478 = vmatprep.subr.mxu0 %v4443
  %4479 = vmatpush1.msra.mxu0 %v4442
  %4480 = vmatprep.subr.mxu0 %v4447
  %4481 = vmatpush1.msra.mxu0 %v4446
  %4482 = vmatprep.subr.mxu0 0.0
  %4483 = vmatpush1.msra.mxu0 0.0
  %4484 = vmatprep.subr.mxu0 0.0
  %4485 = vmatpush1.msra.mxu0 0.0
  %4486 = vmatprep.subr.mxu0 0.0
  %4487 = vmatpush1.msra.mxu0 0.0
  %4488 = vmatprep.subr.mxu0 0.0
  %4489 = vmatpush1.msra.mxu0 0.0
  %4490 = vmatprep.subr.mxu0 0.0
  %4491 = vmatpush1.msra.mxu0 0.0
  %4492 = vmatprep.subr.mxu0 0.0
  %4493 = vmatpush1.msra.mxu0 0.0
  %4494 = vmatprep.subr.mxu0 0.0
  %4495 = vmatpush1.msra.mxu0 0.0
  %4496 = vmatprep.subr.mxu0 0.0
  %4497 = vmatpush1.msra.mxu0 0.0
  %4498 = vmatprep.subr.mxu0 0.0
  %4499 = vmatpush1.msra.mxu0 0.0
  %4500 = vmatprep.subr.mxu0 0.0
  %4501 = vmatpush1.msra.mxu0 0.0
  %4502 = vmatprep.subr.mxu0 0.0
  %4503 = vmatpush1.msra.mxu0 0.0
  %4504 = vmatprep.subr.mxu0 0.0
  %4505 = vmatpush1.msra.mxu0 0.0
  %4506 = vmatprep.subr.mxu0 0.0
  %4507 = vmatpush1.msra.mxu0 0.0
  %4508 = vmatprep.subr.mxu0 0.0
  %4509 = vmatpush1.msra.mxu0 0.0
  %4510 = vmatprep.subr.mxu0 0.0
  %4511 = vmatpush1.msra.mxu0 0.0
  %4512 = vmatprep.subr.mxu0 0.0
  %4513 = vmatpush1.msra.mxu0 0.0
  %4514 = vmatprep.mubr.f32.mxu0 0.0
  %4515 = vmatmul.mubr.f32.gmra.mrb[0].mxu0 %v4380
  %v4516 = vpop.f32.mrb[0].mxu0
  %v4517 = vadd.f32 0.0, %v4516
  %v4518 = vpop.f32.mrb[0].mxu0
  %v4519 = vadd.f32 0.0, %v4518
  %4520 = vdwg.mxu0
  %4521 = vmatprep.subr.mxu0 %v4389
  %4522 = vmatpush1.msra.mxu0 %v4388
  %4523 = vmatprep.subr.mxu0 %v4393
  %4524 = vmatpush1.msra.mxu0 %v4392
  %4525 = vmatprep.subr.mxu0 %v4397
  %4526 = vmatpush1.msra.mxu0 %v4396
  %4527 = vmatprep.subr.mxu0 %v4401
  %4528 = vmatpush1.msra.mxu0 %v4400
  %4529 = vmatprep.subr.mxu0 %v4405
  %4530 = vmatpush1.msra.mxu0 %v4404
  %4531 = vmatprep.subr.mxu0 %v4409
  %4532 = vmatpush1.msra.mxu0 %v4408
  %4533 = vmatprep.subr.mxu0 %v4413
  %4534 = vmatpush1.msra.mxu0 %v4412
  %4535 = vmatprep.subr.mxu0 %v4417
  %4536 = vmatpush1.msra.mxu0 %v4416
  %4537 = vmatprep.subr.mxu0 %v4421
  %4538 = vmatpush1.msra.mxu0 %v4420
  %4539 = vmatprep.subr.mxu0 %v4425
  %4540 = vmatpush1.msra.mxu0 %v4424
  %4541 = vmatprep.subr.mxu0 %v4429
  %4542 = vmatpush1.msra.mxu0 %v4428
  %4543 = vmatprep.subr.mxu0 %v4433
  %4544 = vmatpush1.msra.mxu0 %v4432
  %4545 = vmatprep.subr.mxu0 %v4437
  %4546 = vmatpush1.msra.mxu0 %v4436
  %4547 = vmatprep.subr.mxu0 %v4441
  %4548 = vmatpush1.msra.mxu0 %v4440
  %4549 = vmatprep.subr.mxu0 %v4445
  %4550 = vmatpush1.msra.mxu0 %v4444
  %4551 = vmatprep.subr.mxu0 %v4449
  %4552 = vmatpush1.msra.mxu0 %v4448
  %4553 = vmatprep.subr.mxu0 0.0
  %4554 = vmatpush1.msra.mxu0 0.0
  %4555 = vmatprep.subr.mxu0 0.0
  %4556 = vmatpush1.msra.mxu0 0.0
  %4557 = vmatprep.subr.mxu0 0.0
  %4558 = vmatpush1.msra.mxu0 0.0
  %4559 = vmatprep.subr.mxu0 0.0
  %4560 = vmatpush1.msra.mxu0 0.0
  %4561 = vmatprep.subr.mxu0 0.0
  %4562 = vmatpush1.msra.mxu0 0.0
  %4563 = vmatprep.subr.mxu0 0.0
  %4564 = vmatpush1.msra.mxu0 0.0
  %4565 = vmatprep.subr.mxu0 0.0
  %4566 = vmatpush1.msra.mxu0 0.0
  %4567 = vmatprep.subr.mxu0 0.0
  %4568 = vmatpush1.msra.mxu0 0.0
  %4569 = vmatprep.subr.mxu0 0.0
  %4570 = vmatpush1.msra.mxu0 0.0
  %4571 = vmatprep.subr.mxu0 0.0
  %4572 = vmatpush1.msra.mxu0 0.0
  %4573 = vmatprep.subr.mxu0 0.0
  %4574 = vmatpush1.msra.mxu0 0.0
  %4575 = vmatprep.subr.mxu0 0.0
  %4576 = vmatpush1.msra.mxu0 0.0
  %4577 = vmatprep.subr.mxu0 0.0
  %4578 = vmatpush1.msra.mxu0 0.0
  %4579 = vmatprep.subr.mxu0 0.0
  %4580 = vmatpush1.msra.mxu0 0.0
  %4581 = vmatprep.subr.mxu0 0.0
  %4582 = vmatpush1.msra.mxu0 0.0
  %4583 = vmatprep.subr.mxu0 0.0
  %4584 = vmatpush1.msra.mxu0 0.0
  %4585 = vmatprep.mubr.f32.mxu0 0.0
  %4586 = vmatmul.mubr.f32.gmra.mrb[0].mxu0 %v4380
  %v4587 = vpop.f32.mrb[0].mxu0
  %v4588 = vadd.f32 0.0, %v4587
  %v4589 = vpop.f32.mrb[0].mxu0
  %v4590 = vadd.f32 0.0, %v4589
  %4591 = vdwg.mxu0
  %v4592 = vadd.f32 %v4382, %v4517
  %v4593 = vadd.f32 %v4383, %v4519
  %v4594 = vadd.f32 %v4384, %v4588
  %v4595 = vadd.f32 %v4385, %v4590
  %v4596 = vxor.u32 %v4592, 2147483648
  %v4597 = vmul.f32 %v4596, 1.442695
  %v4598 = vpow.pop %v4597
  %v4599 = vadd.f32 %v4598, 1.0
  %v4600 = vrcp.pop %v4599
  %v4601 = vmul.f32 1.0, %v4600
  %v4602 = vxor.u32 %v4593, 2147483648
  %v4603 = vmul.f32 %v4602, 1.442695
  %v4604 = vpow.pop %v4603
  %v4605 = vadd.f32 %v4604, 1.0
  %v4606 = vrcp.pop %v4605
  %v4607 = vmul.f32 1.0, %v4606
  %v4608 = vtanh.pop %v4594
  %v4609 = vxor.u32 %v4595, 2147483648
  %v4610 = vmul.f32 %v4609, 1.442695
  %v4611 = vpow.pop %v4610
  %v4612 = vadd.f32 %v4611, 1.0
  %v4613 = vrcp.pop %v4612
  %v4614 = vmul.f32 1.0, %v4613
  %v4615 = vmul.f32 %v4607, %v4381
  %v4616 = vmul.f32 %v4601, %v4608
  %v4617 = vadd.f32 %v4615, %v4616
  %v4618 = vtanh.pop %v4617
  %v4619 = vmul.f32 %v4614, %v4618
  %4620 = vst [vmem:[#allocation2] sm:$0xff] %v4619
  %4621 = vst [vmem:[#allocation3] sm:$0xff] %v4617
  %v4622 = vld [vmem:[#allocation2] sm:$0xff]
  %v4623 = vld [vmem:[%s7] sm:$0x1]
  %v4625 = vlaneseq
  %v4626 = vshrl.u32 %v4625, 7
  %v4627 = vsub.s32 0, %v4626
  %v4628 = vrot.slane %v4623, %v4627
  %v4630 = vmul.f32 %v4622, %v4628
  %4631 = vadd.xlane.f32.xlu0 %v4630
  %v4632 = vpop.xlane.xlu0 %4631
  %v4633 = vld [vmem:[#allocation6] sm:$0x1]
  %v4635 = vlaneseq
  %v4636 = vshrl.u32 %v4635, 7
  %v4637 = vsub.s32 0, %v4636
  %v4638 = vrot.slane %v4633, %v4637
  %v4640 = vadd.f32 %v4632, %v4638
  %vm4641 = vcmask 7168
  %4642 = vst.msk [vmem:[%s9] sm:$0xff] %vm4641, %v4640
  // Predicated region
  $region38: #{lstm_model_forward.1} parent=0 // pred_check
    _
  $region39: #{lstm_model_forward.1} parent=0 // pred_check_branch
    %4644 = sbr.rel (0) target = $region41
  $region40: #{lstm_model_forward.1} parent=0 // pred_region
    _
  $region41: #{lstm_model_forward.1} parent=0 // pred_fallthru
    _
  // Predicated region
  $region42: #{lstm_model_forward.1} parent=0 // pred_check
    _
  $region43: #{lstm_model_forward.1} parent=0 // pred_check_branch
    %4646 = sbr.rel (0) target = $region45
  $region44: #{lstm_model_forward.1} parent=0 // pred_region
    _
  $region45: #{lstm_model_forward.1} parent=0 // pred_fallthru
    _

</llo_original>
